<compile_context>
chip_gen: v7x
topology: tpu7x:2x2x1
jax: 0.10.0
libtpu: 0.0.40
codegen_flags: <defaults>
</compile_context>

<pallas_src>
import jax
import jax.numpy as jnp
import numpy as np
from jax.experimental import pallas as pl
from jax.experimental.pallas import tpu as pltpu

EPS = 1e-5  # PyTorch InstanceNorm2d default eps


# ----------------------------- static helpers -------------------------------
def _cdiv(a, b):
    return (a + b - 1) // b


def _pad_lanes(n):
    return max(128, _cdiv(n, 128) * 128)


def _conv_out(n, k, s, p):
    return (n + 2 * p - k) // s + 1


def _layer_cfgs(in_channel, channels):
    # (cin, cout, kernel, stride, padding) of conv_1, conv_Extra, conv_mid, conv_2
    return [
        dict(cin=in_channel,   cout=channels,     k=(3, 3), s=(2, 2), p=(0, 0)),
        dict(cin=channels,     cout=2 * channels, k=(3, 1), s=(2, 1), p=(1, 0)),
        dict(cin=2 * channels, cout=2 * channels, k=(3, 3), s=(2, 2), p=(0, 1)),
        dict(cin=2 * channels, cout=channels,     k=(3, 3), s=(2, 2), p=(1, 1)),
    ]


def _gather_matrices(hin, win, hout, wout, s, p, k, pin_pad, pout_pad):
    """0/1 matrices G[t, pin, pout]: pout column selects the (stride,pad,tap)
    shifted input position on the flattened spatial axis (zero row if OOB)."""
    sh, sw = s
    ph, pw = p
    taps = [(kh, kw) for kh in range(k[0]) for kw in range(k[1])]
    g = np.zeros((len(taps), pin_pad, pout_pad), np.float32)
    for t, (kh, kw) in enumerate(taps):
        for ho in range(hout):
            hi = sh * ho + kh - ph
            if hi < 0 or hi >= hin:
                continue
            for wo in range(wout):
                wi = sw * wo + kw - pw
                if wi < 0 or wi >= win:
                    continue
                g[t, hi * win + wi, ho * wout + wo] = 1.0
    return g


def _final_reshape(y):
    # Matches the PyTorch tail: view(B,C,F,te,2).permute(0,1,3,2,4).view(B,C*te,F*2)
    B, C, F, T = y.shape
    te = T // 2
    y = y.reshape(B, C, F, te, 2)
    y = jnp.transpose(y, (0, 1, 3, 2, 4))
    return y.reshape(B, C * te, F * 2)


# ------------------------------ fused kernel --------------------------------
def _make_fused_kernel(couts, true_p, taps):
    c1, c2, c3, c4 = couts
    p1, p2, p3, p4 = true_p
    t2, t3, t4 = taps

    def in_prelu(y, prm_ref, layer, cout, count):
        # y: (cout, P_pad); padded lanes of y are exactly zero (no conv bias),
        # so sums are over the true spatial positions only.
        prm = prm_ref[layer]                       # (Cmax, 3)
        gamma = prm[:cout, 0:1]
        beta = prm[:cout, 1:2]
        alpha = prm[:cout, 2:3]
        inv = 1.0 / float(count)
        mean = jnp.sum(y, axis=1, keepdims=True) * inv
        msq = jnp.sum(y * y, axis=1, keepdims=True) * inv
        var = jnp.maximum(msq - mean * mean, 0.0)  # one-pass, biased variance
        yn = (y - mean) * jax.lax.rsqrt(var + EPS)
        yn = yn * gamma + beta
        return jnp.where(yn >= 0, yn, alpha * yn)

    def conv_taps(a_prev, w_ref, g_ref, ntaps):
        # a_prev: (cin, Pin_pad); for each tap: gather (MXU) then channel mix.
        acc = None
        for t in range(ntaps):
            gathered = jnp.dot(a_prev, g_ref[t],
                               preferred_element_type=jnp.float32)   # (cin, Pout_pad)
            part = jnp.dot(w_ref[t], gathered,
                           preferred_element_type=jnp.float32)       # (cout, Pout_pad)
            acc = part if acc is None else acc + part
        return acc

    def kernel(p1_ref, w1_ref, w2_ref, w3_ref, w4_ref,
               g2_ref, g3_ref, g4_ref, prm_ref, o_ref):
        # layer 1: (c1, K1) @ (K1, P1_pad) im2col matmul, P on lanes
        y = jnp.dot(w1_ref[...], p1_ref[0], preferred_element_type=jnp.float32)
        a = in_prelu(y, prm_ref, 0, c1, p1)
        # layers 2-4: strided conv via in-kernel gather matmuls, all VMEM resident
        a = in_prelu(conv_taps(a, w2_ref, g2_ref, t2), prm_ref, 1, c2, p2)
        a = in_prelu(conv_taps(a, w3_ref, g3_ref, t3), prm_ref, 2, c3, p3)
        a = in_prelu(conv_taps(a, w4_ref, g4_ref, t4), prm_ref, 3, c4, p4)
        o_ref[0] = a.astype(o_ref.dtype)           # (c4, 128): one full lane-dense tile

    return kernel


# ------------------------------ forward wrapper ------------------------------
def dense_encoder_forward(x, params, in_channel, channels):
    B, cin0, H0, W0 = x.shape
    cfgs = _layer_cfgs(in_channel, channels)

    hs, ws = [H0], [W0]
    for cfg in cfgs:
        hs.append(_conv_out(hs[-1], cfg['k'][0], cfg['s'][0], cfg['p'][0]))
        ws.append(_conv_out(ws[-1], cfg['k'][1], cfg['s'][1], cfg['p'][1]))
    true_p = [hs[i + 1] * ws[i + 1] for i in range(4)]
    pad_p = [_pad_lanes(p) for p in true_p]
    couts = [cfg['cout'] for cfg in cfgs]

    # ---- layer 1: im2col in the wrapper (raw HBM input, padding=0) ----------
    w1 = params[0][0]
    kH, kW = cfgs[0]['k']
    sH, sW = cfgs[0]['s']
    H1, W1 = hs[1], ws[1]
    cols = []
    for kh in range(kH):
        for kw in range(kW):
            cols.append(x[:, :, kh:kh + sH * (H1 - 1) + 1:sH,
                          kw:kw + sW * (W1 - 1) + 1:sW])        # (B, cin0, H1, W1)
    K1 = kH * kW * cin0
    patches = jnp.concatenate(cols, axis=1).reshape(B, K1, true_p[0])
    patches = jnp.pad(patches, ((0, 0), (0, 0), (0, pad_p[0] - true_p[0])))
    w1_flat = jnp.transpose(w1, (0, 2, 3, 1)).reshape(couts[0], K1)

    # ---- layers 2-4: per-tap weights + 0/1 gather matrices ------------------
    tap_ws, gathers, taps_n = [], [], []
    for li in range(1, 4):
        w = params[li][0]
        cfg = cfgs[li]
        ntap = cfg['k'][0] * cfg['k'][1]
        tap_ws.append(jnp.transpose(w, (2, 3, 0, 1)).reshape(ntap, cfg['cout'], cfg['cin']))
        gathers.append(jnp.asarray(_gather_matrices(
            hs[li], ws[li], hs[li + 1], ws[li + 1],
            cfg['s'], cfg['p'], cfg['k'], pad_p[li - 1], pad_p[li])))
        taps_n.append(ntap)

    # ---- packed per-channel params (gamma, beta, prelu slope) ---------------
    cmax = max(couts)
    prm = np.zeros((4, cmax, 3), np.float32)
    for li, (w, b, g, be, a) in enumerate(params):
        prm[li, :couts[li], 0] = np.asarray(g)
        prm[li, :couts[li], 1] = np.asarray(be)
        prm[li, :couts[li], 2] = np.asarray(a)
        # conv bias b is cancelled exactly by the InstanceNorm mean subtraction.
    prm = jnp.asarray(prm)

    kernel = _make_fused_kernel(tuple(couts), tuple(true_p), tuple(taps_n))
    const3 = lambda b: (0, 0, 0)
    const2 = lambda b: (0, 0)

    out = pl.pallas_call(
        kernel,
        out_shape=jax.ShapeDtypeStruct((B, couts[3], pad_p[3]), jnp.float32),
        grid_spec=pltpu.PrefetchScalarGridSpec(
            num_scalar_prefetch=0,
            grid=(B,),
            in_specs=[
                pl.BlockSpec((1, K1, pad_p[0]), lambda b: (b, 0, 0)),
                pl.BlockSpec((couts[0], K1), const2),
                pl.BlockSpec(tuple(tap_ws[0].shape), const3),
                pl.BlockSpec(tuple(tap_ws[1].shape), const3),
                pl.BlockSpec(tuple(tap_ws[2].shape), const3),
                pl.BlockSpec(tuple(gathers[0].shape), const3),
                pl.BlockSpec(tuple(gathers[1].shape), const3),
                pl.BlockSpec(tuple(gathers[2].shape), const3),
                pl.BlockSpec((4, cmax, 3), const3),
            ],
            out_specs=pl.BlockSpec((1, couts[3], pad_p[3]), lambda b: (b, 0, 0)),
        ),
        compiler_params=pltpu.CompilerParams(dimension_semantics=("parallel",)),
    )(patches, w1_flat, tap_ws[0], tap_ws[1], tap_ws[2],
      gathers[0], gathers[1], gathers[2], prm)

    # trim lane padding, restore NCHW, then the module's final view/permute/view
    y = out[:, :, :true_p[3]].reshape(B, couts[3], hs[4], ws[4])
    return _final_reshape(y)


# ---------------------- pure-JAX reference (for checking) --------------------
def dense_encoder_ref(x, params, in_channel, channels):
    cfgs = _layer_cfgs(in_channel, channels)
    y = x
    for (w, b, g, be, a), cfg in zip(params, cfgs):
        y = jax.lax.conv_general_dilated(
            y, w, window_strides=cfg['s'],
            padding=[(cfg['p'][0], cfg['p'][0]), (cfg['p'][1], cfg['p'][1])],
            dimension_numbers=("NCHW", "OIHW", "NCHW"),
            precision=jax.lax.Precision.HIGHEST)
        y = y + b[None, :, None, None]
        mean = y.mean(axis=(2, 3), keepdims=True)
        var = ((y - mean) ** 2).mean(axis=(2, 3), keepdims=True)
        y = (y - mean) / jnp.sqrt(var + EPS)
        y = y * g[None, :, None, None] + be[None, :, None, None]
        y = jnp.where(y >= 0, y, a[None, :, None, None] * y)
    return _final_reshape(y)


# ------------------------- deterministic parameter init ----------------------
def init_params(key, in_channel, channels):
    params = []
    for i, cfg in enumerate(_layer_cfgs(in_channel, channels)):
        k = jax.random.fold_in(key, i)
        kw_, kb, kg, kbe = jax.random.split(k, 4)
        cin, cout = cfg['cin'], cfg['cout']
        kh, kw = cfg['k']
        w = jax.random.normal(kw_, (cout, cin, kh, kw), jnp.float32) / np.sqrt(cin * kh * kw)
        b = 0.1 * jax.random.normal(kb, (cout,), jnp.float32)
        g = 1.0 + 0.1 * jax.random.normal(kg, (cout,), jnp.float32)    # IN gamma
        be = 0.1 * jax.random.normal(kbe, (cout,), jnp.float32)        # IN beta
        a = jnp.full((cout,), 0.25, jnp.float32)                       # PReLU init
        params.append((w, b, g, be, a))
    return params


if __name__ == "__main__":
    in_channel = 2
    channels = 8
    batch = 2
    freq, time = 64, 28   # chosen so the final subsampled time dim (4) is even

    key = jax.random.PRNGKey(0)
    kx, kp = jax.random.split(key)
    x = jax.random.normal(kx, (batch, in_channel, freq, time), jnp.float32)
    params = init_params(kp, in_channel, channels)

    out = dense_encoder_forward(x, params, in_channel, channels)
    out = jax.block_until_ready(out)

    ref = dense_encoder_ref(x, params, in_channel, channels)
    ref = jax.block_until_ready(ref)

    assert out.shape == ref.shape == (batch, 16, 8), (out.shape, ref.shape)
    np.testing.assert_allclose(np.asarray(out), np.asarray(ref), rtol=1e-2, atol=1e-2)
    print("KERNEL_OK")
</pallas_src>

<mosaic_0001>
module attributes {stable_mosaic.version = 11 : i64} {
  func.func @kernel(%arg0: i32, %arg1: memref<1x18x512xf32, #tpu.memory_space<vmem>>, %arg2: memref<8x18xf32, #tpu.memory_space<vmem>>, %arg3: memref<3x16x8xf32, #tpu.memory_space<vmem>>, %arg4: memref<9x16x16xf32, #tpu.memory_space<vmem>>, %arg5: memref<9x8x16xf32, #tpu.memory_space<vmem>>, %arg6: memref<3x512x256xf32, #tpu.memory_space<vmem>>, %arg7: memref<9x256x128xf32, #tpu.memory_space<vmem>>, %arg8: memref<9x128x128xf32, #tpu.memory_space<vmem>>, %arg9: memref<4x16x3xf32, #tpu.memory_space<vmem>>, %arg10: memref<1x8x128xf32, #tpu.memory_space<vmem>>) attributes {dimension_semantics = [#tpu.dimension_semantics<parallel>], iteration_bounds = array<i64: 2>, scalar_prefetch = 0 : i64, scratch_operands = 0 : i64, tpu.core_type = #tpu.core_type<tc>, window_params = [{transform_indices = @transform_0, window_bounds = array<i64: 1, 18, 512>}, {pipeline_mode = #tpu.pipeline_mode<synchronous>, transform_indices = @transform_1, window_bounds = array<i64: 8, 18>}, {pipeline_mode = #tpu.pipeline_mode<synchronous>, transform_indices = @transform_2, window_bounds = array<i64: 3, 16, 8>}, {pipeline_mode = #tpu.pipeline_mode<synchronous>, transform_indices = @transform_3, window_bounds = array<i64: 9, 16, 16>}, {pipeline_mode = #tpu.pipeline_mode<synchronous>, transform_indices = @transform_4, window_bounds = array<i64: 9, 8, 16>}, {pipeline_mode = #tpu.pipeline_mode<synchronous>, transform_indices = @transform_5, window_bounds = array<i64: 3, 512, 256>}, {pipeline_mode = #tpu.pipeline_mode<synchronous>, transform_indices = @transform_6, window_bounds = array<i64: 9, 256, 128>}, {pipeline_mode = #tpu.pipeline_mode<synchronous>, transform_indices = @transform_7, window_bounds = array<i64: 9, 128, 128>}, {pipeline_mode = #tpu.pipeline_mode<synchronous>, transform_indices = @transform_8, window_bounds = array<i64: 4, 16, 3>}, {transform_indices = @transform_9, window_bounds = array<i64: 1, 8, 128>}]} {
    %c0 = arith.constant 0 : index
    %c0_0 = arith.constant 0 : index
    %0 = vector.load %arg2[%c0, %c0_0] : memref<8x18xf32, #tpu.memory_space<vmem>>, vector<8x18xf32>
    %c0_1 = arith.constant 0 : index
    %c0_2 = arith.constant 0 : index
    %c0_3 = arith.constant 0 : index
    %1 = vector.load %arg1[%c0_1, %c0_2, %c0_3] : memref<1x18x512xf32, #tpu.memory_space<vmem>>, vector<1x18x512xf32>
    %2 = vector.shape_cast %1 : vector<1x18x512xf32> to vector<18x512xf32>
    %cst = arith.constant dense<0.000000e+00> : vector<8x512xf32>
    %3 = tpu.matmul %0, %2, %cst {dimension_numbers = #tpu.dot_dimension_numbers<[1], [0], [0], [1], [0, 0, 1, 1], [], []>} : vector<8x18xf32>, vector<18x512xf32>, vector<8x512xf32> -> vector<8x512xf32>
    %c0_4 = arith.constant 0 : index
    %c0_5 = arith.constant 0 : index
    %c0_6 = arith.constant 0 : index
    %4 = vector.load %arg9[%c0_4, %c0_5, %c0_6] : memref<4x16x3xf32, #tpu.memory_space<vmem>>, vector<1x16x3xf32>
    %5 = vector.shape_cast %4 : vector<1x16x3xf32> to vector<16x3xf32>
    %6 = vector.extract_strided_slice %5 {offsets = [0, 0], sizes = [8, 1], strides = [1, 1]} : vector<16x3xf32> to vector<8x1xf32>
    %7 = vector.extract_strided_slice %5 {offsets = [0, 1], sizes = [8, 1], strides = [1, 1]} : vector<16x3xf32> to vector<8x1xf32>
    %8 = vector.extract_strided_slice %5 {offsets = [0, 2], sizes = [8, 1], strides = [1, 1]} : vector<16x3xf32> to vector<8x1xf32>
    %cst_7 = arith.constant dense<0.000000e+00> : vector<8xf32>
    %9 = vector.multi_reduction <add>, %3, %cst_7 [1] : vector<8x512xf32> to vector<8xf32>
    %10 = vector.shape_cast %9 : vector<8xf32> to vector<8x1xf32>
    %cst_8 = arith.constant 0.00248138956 : f32
    %11 = vector.broadcast %cst_8 : f32 to vector<8x1xf32>
    %12 = arith.mulf %10, %11 : vector<8x1xf32>
    %13 = arith.mulf %3, %3 : vector<8x512xf32>
    %cst_9 = arith.constant dense<0.000000e+00> : vector<8xf32>
    %14 = vector.multi_reduction <add>, %13, %cst_9 [1] : vector<8x512xf32> to vector<8xf32>
    %15 = vector.shape_cast %14 : vector<8xf32> to vector<8x1xf32>
    %cst_10 = arith.constant 0.00248138956 : f32
    %16 = vector.broadcast %cst_10 : f32 to vector<8x1xf32>
    %17 = arith.mulf %15, %16 : vector<8x1xf32>
    %18 = arith.mulf %12, %12 : vector<8x1xf32>
    %19 = arith.subf %17, %18 : vector<8x1xf32>
    %cst_11 = arith.constant 0.000000e+00 : f32
    %20 = vector.broadcast %cst_11 : f32 to vector<8x1xf32>
    %21 = arith.maximumf %19, %20 : vector<8x1xf32>
    %22 = vector.broadcast %12 : vector<8x1xf32> to vector<8x512xf32>
    %23 = arith.subf %3, %22 : vector<8x512xf32>
    %cst_12 = arith.constant 9.99999974E-6 : f32
    %24 = vector.broadcast %cst_12 : f32 to vector<8x1xf32>
    %25 = arith.addf %21, %24 : vector<8x1xf32>
    %26 = math.rsqrt %25 : vector<8x1xf32>
    %27 = vector.broadcast %26 : vector<8x1xf32> to vector<8x512xf32>
    %28 = arith.mulf %23, %27 : vector<8x512xf32>
    %29 = vector.broadcast %6 : vector<8x1xf32> to vector<8x512xf32>
    %30 = arith.mulf %28, %29 : vector<8x512xf32>
    %31 = vector.broadcast %7 : vector<8x1xf32> to vector<8x512xf32>
    %32 = arith.addf %30, %31 : vector<8x512xf32>
    %cst_13 = arith.constant 0.000000e+00 : f32
    %33 = vector.broadcast %cst_13 : f32 to vector<8x512xf32>
    %34 = arith.cmpf oge, %32, %33 : vector<8x512xf32>
    %35 = vector.broadcast %8 : vector<8x1xf32> to vector<8x512xf32>
    %36 = arith.mulf %35, %32 : vector<8x512xf32>
    %37 = arith.select %34, %32, %36 : vector<8x512xi1>, vector<8x512xf32>
    %c0_14 = arith.constant 0 : index
    %c0_15 = arith.constant 0 : index
    %c0_16 = arith.constant 0 : index
    %38 = vector.load %arg6[%c0_14, %c0_15, %c0_16] : memref<3x512x256xf32, #tpu.memory_space<vmem>>, vector<1x512x256xf32>
    %39 = vector.shape_cast %38 : vector<1x512x256xf32> to vector<512x256xf32>
    %cst_17 = arith.constant dense<0.000000e+00> : vector<8x256xf32>
    %40 = tpu.matmul %37, %39, %cst_17 {dimension_numbers = #tpu.dot_dimension_numbers<[1], [0], [0], [1], [0, 0, 1, 1], [], []>} : vector<8x512xf32>, vector<512x256xf32>, vector<8x256xf32> -> vector<8x256xf32>
    %c0_18 = arith.constant 0 : index
    %c0_19 = arith.constant 0 : index
    %c0_20 = arith.constant 0 : index
    %41 = vector.load %arg3[%c0_18, %c0_19, %c0_20] : memref<3x16x8xf32, #tpu.memory_space<vmem>>, vector<1x16x8xf32>
    %42 = vector.shape_cast %41 : vector<1x16x8xf32> to vector<16x8xf32>
    %cst_21 = arith.constant dense<0.000000e+00> : vector<16x256xf32>
    %43 = tpu.matmul %42, %40, %cst_21 {dimension_numbers = #tpu.dot_dimension_numbers<[1], [0], [0], [1], [0, 0, 1, 1], [], []>} : vector<16x8xf32>, vector<8x256xf32>, vector<16x256xf32> -> vector<16x256xf32>
    %c1 = arith.constant 1 : index
    %c0_22 = arith.constant 0 : index
    %c0_23 = arith.constant 0 : index
    %44 = vector.load %arg6[%c1, %c0_22, %c0_23] : memref<3x512x256xf32, #tpu.memory_space<vmem>>, vector<1x512x256xf32>
    %45 = vector.shape_cast %44 : vector<1x512x256xf32> to vector<512x256xf32>
    %cst_24 = arith.constant dense<0.000000e+00> : vector<8x256xf32>
    %46 = tpu.matmul %37, %45, %cst_24 {dimension_numbers = #tpu.dot_dimension_numbers<[1], [0], [0], [1], [0, 0, 1, 1], [], []>} : vector<8x512xf32>, vector<512x256xf32>, vector<8x256xf32> -> vector<8x256xf32>
    %c1_25 = arith.constant 1 : index
    %c0_26 = arith.constant 0 : index
    %c0_27 = arith.constant 0 : index
    %47 = vector.load %arg3[%c1_25, %c0_26, %c0_27] : memref<3x16x8xf32, #tpu.memory_space<vmem>>, vector<1x16x8xf32>
    %48 = vector.shape_cast %47 : vector<1x16x8xf32> to vector<16x8xf32>
    %cst_28 = arith.constant dense<0.000000e+00> : vector<16x256xf32>
    %49 = tpu.matmul %48, %46, %cst_28 {dimension_numbers = #tpu.dot_dimension_numbers<[1], [0], [0], [1], [0, 0, 1, 1], [], []>} : vector<16x8xf32>, vector<8x256xf32>, vector<16x256xf32> -> vector<16x256xf32>
    %50 = arith.addf %43, %49 : vector<16x256xf32>
    %c2 = arith.constant 2 : index
    %c0_29 = arith.constant 0 : index
    %c0_30 = arith.constant 0 : index
    %51 = vector.load %arg6[%c2, %c0_29, %c0_30] : memref<3x512x256xf32, #tpu.memory_space<vmem>>, vector<1x512x256xf32>
    %52 = vector.shape_cast %51 : vector<1x512x256xf32> to vector<512x256xf32>
    %cst_31 = arith.constant dense<0.000000e+00> : vector<8x256xf32>
    %53 = tpu.matmul %37, %52, %cst_31 {dimension_numbers = #tpu.dot_dimension_numbers<[1], [0], [0], [1], [0, 0, 1, 1], [], []>} : vector<8x512xf32>, vector<512x256xf32>, vector<8x256xf32> -> vector<8x256xf32>
    %c2_32 = arith.constant 2 : index
    %c0_33 = arith.constant 0 : index
    %c0_34 = arith.constant 0 : index
    %54 = vector.load %arg3[%c2_32, %c0_33, %c0_34] : memref<3x16x8xf32, #tpu.memory_space<vmem>>, vector<1x16x8xf32>
    %55 = vector.shape_cast %54 : vector<1x16x8xf32> to vector<16x8xf32>
    %cst_35 = arith.constant dense<0.000000e+00> : vector<16x256xf32>
    %56 = tpu.matmul %55, %53, %cst_35 {dimension_numbers = #tpu.dot_dimension_numbers<[1], [0], [0], [1], [0, 0, 1, 1], [], []>} : vector<16x8xf32>, vector<8x256xf32>, vector<16x256xf32> -> vector<16x256xf32>
    %57 = arith.addf %50, %56 : vector<16x256xf32>
    %c1_36 = arith.constant 1 : index
    %c0_37 = arith.constant 0 : index
    %c0_38 = arith.constant 0 : index
    %58 = vector.load %arg9[%c1_36, %c0_37, %c0_38] : memref<4x16x3xf32, #tpu.memory_space<vmem>>, vector<1x16x3xf32>
    %59 = vector.shape_cast %58 : vector<1x16x3xf32> to vector<16x3xf32>
    %60 = vector.extract_strided_slice %59 {offsets = [0, 0], sizes = [16, 1], strides = [1, 1]} : vector<16x3xf32> to vector<16x1xf32>
    %61 = vector.extract_strided_slice %59 {offsets = [0, 1], sizes = [16, 1], strides = [1, 1]} : vector<16x3xf32> to vector<16x1xf32>
    %62 = vector.extract_strided_slice %59 {offsets = [0, 2], sizes = [16, 1], strides = [1, 1]} : vector<16x3xf32> to vector<16x1xf32>
    %cst_39 = arith.constant dense<0.000000e+00> : vector<16xf32>
    %63 = vector.multi_reduction <add>, %57, %cst_39 [1] : vector<16x256xf32> to vector<16xf32>
    %64 = vector.shape_cast %63 : vector<16xf32> to vector<16x1xf32>
    %cst_40 = arith.constant 0.00480769249 : f32
    %65 = vector.broadcast %cst_40 : f32 to vector<16x1xf32>
    %66 = arith.mulf %64, %65 : vector<16x1xf32>
    %67 = arith.mulf %57, %57 : vector<16x256xf32>
    %cst_41 = arith.constant dense<0.000000e+00> : vector<16xf32>
    %68 = vector.multi_reduction <add>, %67, %cst_41 [1] : vector<16x256xf32> to vector<16xf32>
    %69 = vector.shape_cast %68 : vector<16xf32> to vector<16x1xf32>
    %cst_42 = arith.constant 0.00480769249 : f32
    %70 = vector.broadcast %cst_42 : f32 to vector<16x1xf32>
    %71 = arith.mulf %69, %70 : vector<16x1xf32>
    %72 = arith.mulf %66, %66 : vector<16x1xf32>
    %73 = arith.subf %71, %72 : vector<16x1xf32>
    %cst_43 = arith.constant 0.000000e+00 : f32
    %74 = vector.broadcast %cst_43 : f32 to vector<16x1xf32>
    %75 = arith.maximumf %73, %74 : vector<16x1xf32>
    %76 = vector.broadcast %66 : vector<16x1xf32> to vector<16x256xf32>
    %77 = arith.subf %57, %76 : vector<16x256xf32>
    %cst_44 = arith.constant 9.99999974E-6 : f32
    %78 = vector.broadcast %cst_44 : f32 to vector<16x1xf32>
    %79 = arith.addf %75, %78 : vector<16x1xf32>
    %80 = math.rsqrt %79 : vector<16x1xf32>
    %81 = vector.broadcast %80 : vector<16x1xf32> to vector<16x256xf32>
    %82 = arith.mulf %77, %81 : vector<16x256xf32>
    %83 = vector.broadcast %60 : vector<16x1xf32> to vector<16x256xf32>
    %84 = arith.mulf %82, %83 : vector<16x256xf32>
    %85 = vector.broadcast %61 : vector<16x1xf32> to vector<16x256xf32>
    %86 = arith.addf %84, %85 : vector<16x256xf32>
    %cst_45 = arith.constant 0.000000e+00 : f32
    %87 = vector.broadcast %cst_45 : f32 to vector<16x256xf32>
    %88 = arith.cmpf oge, %86, %87 : vector<16x256xf32>
    %89 = vector.broadcast %62 : vector<16x1xf32> to vector<16x256xf32>
    %90 = arith.mulf %89, %86 : vector<16x256xf32>
    %91 = arith.select %88, %86, %90 : vector<16x256xi1>, vector<16x256xf32>
    %c0_46 = arith.constant 0 : index
    %c0_47 = arith.constant 0 : index
    %c0_48 = arith.constant 0 : index
    %92 = vector.load %arg7[%c0_46, %c0_47, %c0_48] : memref<9x256x128xf32, #tpu.memory_space<vmem>>, vector<1x256x128xf32>
    %93 = vector.shape_cast %92 : vector<1x256x128xf32> to vector<256x128xf32>
    %cst_49 = arith.constant dense<0.000000e+00> : vector<16x128xf32>
    %94 = tpu.matmul %91, %93, %cst_49 {dimension_numbers = #tpu.dot_dimension_numbers<[1], [0], [0], [1], [0, 0, 1, 1], [], []>} : vector<16x256xf32>, vector<256x128xf32>, vector<16x128xf32> -> vector<16x128xf32>
    %c0_50 = arith.constant 0 : index
    %c0_51 = arith.constant 0 : index
    %c0_52 = arith.constant 0 : index
    %95 = vector.load %arg4[%c0_50, %c0_51, %c0_52] : memref<9x16x16xf32, #tpu.memory_space<vmem>>, vector<1x16x16xf32>
    %96 = vector.shape_cast %95 : vector<1x16x16xf32> to vector<16x16xf32>
    %cst_53 = arith.constant dense<0.000000e+00> : vector<16x128xf32>
    %97 = tpu.matmul %96, %94, %cst_53 {dimension_numbers = #tpu.dot_dimension_numbers<[1], [0], [0], [1], [0, 0, 1, 1], [], []>} : vector<16x16xf32>, vector<16x128xf32>, vector<16x128xf32> -> vector<16x128xf32>
    %c1_54 = arith.constant 1 : index
    %c0_55 = arith.constant 0 : index
    %c0_56 = arith.constant 0 : index
    %98 = vector.load %arg7[%c1_54, %c0_55, %c0_56] : memref<9x256x128xf32, #tpu.memory_space<vmem>>, vector<1x256x128xf32>
    %99 = vector.shape_cast %98 : vector<1x256x128xf32> to vector<256x128xf32>
    %cst_57 = arith.constant dense<0.000000e+00> : vector<16x128xf32>
    %100 = tpu.matmul %91, %99, %cst_57 {dimension_numbers = #tpu.dot_dimension_numbers<[1], [0], [0], [1], [0, 0, 1, 1], [], []>} : vector<16x256xf32>, vector<256x128xf32>, vector<16x128xf32> -> vector<16x128xf32>
    %c1_58 = arith.constant 1 : index
    %c0_59 = arith.constant 0 : index
    %c0_60 = arith.constant 0 : index
    %101 = vector.load %arg4[%c1_58, %c0_59, %c0_60] : memref<9x16x16xf32, #tpu.memory_space<vmem>>, vector<1x16x16xf32>
    %102 = vector.shape_cast %101 : vector<1x16x16xf32> to vector<16x16xf32>
    %cst_61 = arith.constant dense<0.000000e+00> : vector<16x128xf32>
    %103 = tpu.matmul %102, %100, %cst_61 {dimension_numbers = #tpu.dot_dimension_numbers<[1], [0], [0], [1], [0, 0, 1, 1], [], []>} : vector<16x16xf32>, vector<16x128xf32>, vector<16x128xf32> -> vector<16x128xf32>
    %104 = arith.addf %97, %103 : vector<16x128xf32>
    %c2_62 = arith.constant 2 : index
    %c0_63 = arith.constant 0 : index
    %c0_64 = arith.constant 0 : index
    %105 = vector.load %arg7[%c2_62, %c0_63, %c0_64] : memref<9x256x128xf32, #tpu.memory_space<vmem>>, vector<1x256x128xf32>
    %106 = vector.shape_cast %105 : vector<1x256x128xf32> to vector<256x128xf32>
    %cst_65 = arith.constant dense<0.000000e+00> : vector<16x128xf32>
    %107 = tpu.matmul %91, %106, %cst_65 {dimension_numbers = #tpu.dot_dimension_numbers<[1], [0], [0], [1], [0, 0, 1, 1], [], []>} : vector<16x256xf32>, vector<256x128xf32>, vector<16x128xf32> -> vector<16x128xf32>
    %c2_66 = arith.constant 2 : index
    %c0_67 = arith.constant 0 : index
    %c0_68 = arith.constant 0 : index
    %108 = vector.load %arg4[%c2_66, %c0_67, %c0_68] : memref<9x16x16xf32, #tpu.memory_space<vmem>>, vector<1x16x16xf32>
    %109 = vector.shape_cast %108 : vector<1x16x16xf32> to vector<16x16xf32>
    %cst_69 = arith.constant dense<0.000000e+00> : vector<16x128xf32>
    %110 = tpu.matmul %109, %107, %cst_69 {dimension_numbers = #tpu.dot_dimension_numbers<[1], [0], [0], [1], [0, 0, 1, 1], [], []>} : vector<16x16xf32>, vector<16x128xf32>, vector<16x128xf32> -> vector<16x128xf32>
    %111 = arith.addf %104, %110 : vector<16x128xf32>
    %c3 = arith.constant 3 : index
    %c0_70 = arith.constant 0 : index
    %c0_71 = arith.constant 0 : index
    %112 = vector.load %arg7[%c3, %c0_70, %c0_71] : memref<9x256x128xf32, #tpu.memory_space<vmem>>, vector<1x256x128xf32>
    %113 = vector.shape_cast %112 : vector<1x256x128xf32> to vector<256x128xf32>
    %cst_72 = arith.constant dense<0.000000e+00> : vector<16x128xf32>
    %114 = tpu.matmul %91, %113, %cst_72 {dimension_numbers = #tpu.dot_dimension_numbers<[1], [0], [0], [1], [0, 0, 1, 1], [], []>} : vector<16x256xf32>, vector<256x128xf32>, vector<16x128xf32> -> vector<16x128xf32>
    %c3_73 = arith.constant 3 : index
    %c0_74 = arith.constant 0 : index
    %c0_75 = arith.constant 0 : index
    %115 = vector.load %arg4[%c3_73, %c0_74, %c0_75] : memref<9x16x16xf32, #tpu.memory_space<vmem>>, vector<1x16x16xf32>
    %116 = vector.shape_cast %115 : vector<1x16x16xf32> to vector<16x16xf32>
    %cst_76 = arith.constant dense<0.000000e+00> : vector<16x128xf32>
    %117 = tpu.matmul %116, %114, %cst_76 {dimension_numbers = #tpu.dot_dimension_numbers<[1], [0], [0], [1], [0, 0, 1, 1], [], []>} : vector<16x16xf32>, vector<16x128xf32>, vector<16x128xf32> -> vector<16x128xf32>
    %118 = arith.addf %111, %117 : vector<16x128xf32>
    %c4 = arith.constant 4 : index
    %c0_77 = arith.constant 0 : index
    %c0_78 = arith.constant 0 : index
    %119 = vector.load %arg7[%c4, %c0_77, %c0_78] : memref<9x256x128xf32, #tpu.memory_space<vmem>>, vector<1x256x128xf32>
    %120 = vector.shape_cast %119 : vector<1x256x128xf32> to vector<256x128xf32>
    %cst_79 = arith.constant dense<0.000000e+00> : vector<16x128xf32>
    %121 = tpu.matmul %91, %120, %cst_79 {dimension_numbers = #tpu.dot_dimension_numbers<[1], [0], [0], [1], [0, 0, 1, 1], [], []>} : vector<16x256xf32>, vector<256x128xf32>, vector<16x128xf32> -> vector<16x128xf32>
    %c4_80 = arith.constant 4 : index
    %c0_81 = arith.constant 0 : index
    %c0_82 = arith.constant 0 : index
    %122 = vector.load %arg4[%c4_80, %c0_81, %c0_82] : memref<9x16x16xf32, #tpu.memory_space<vmem>>, vector<1x16x16xf32>
    %123 = vector.shape_cast %122 : vector<1x16x16xf32> to vector<16x16xf32>
    %cst_83 = arith.constant dense<0.000000e+00> : vector<16x128xf32>
    %124 = tpu.matmul %123, %121, %cst_83 {dimension_numbers = #tpu.dot_dimension_numbers<[1], [0], [0], [1], [0, 0, 1, 1], [], []>} : vector<16x16xf32>, vector<16x128xf32>, vector<16x128xf32> -> vector<16x128xf32>
    %125 = arith.addf %118, %124 : vector<16x128xf32>
    %c5 = arith.constant 5 : index
    %c0_84 = arith.constant 0 : index
    %c0_85 = arith.constant 0 : index
    %126 = vector.load %arg7[%c5, %c0_84, %c0_85] : memref<9x256x128xf32, #tpu.memory_space<vmem>>, vector<1x256x128xf32>
    %127 = vector.shape_cast %126 : vector<1x256x128xf32> to vector<256x128xf32>
    %cst_86 = arith.constant dense<0.000000e+00> : vector<16x128xf32>
    %128 = tpu.matmul %91, %127, %cst_86 {dimension_numbers = #tpu.dot_dimension_numbers<[1], [0], [0], [1], [0, 0, 1, 1], [], []>} : vector<16x256xf32>, vector<256x128xf32>, vector<16x128xf32> -> vector<16x128xf32>
    %c5_87 = arith.constant 5 : index
    %c0_88 = arith.constant 0 : index
    %c0_89 = arith.constant 0 : index
    %129 = vector.load %arg4[%c5_87, %c0_88, %c0_89] : memref<9x16x16xf32, #tpu.memory_space<vmem>>, vector<1x16x16xf32>
    %130 = vector.shape_cast %129 : vector<1x16x16xf32> to vector<16x16xf32>
    %cst_90 = arith.constant dense<0.000000e+00> : vector<16x128xf32>
    %131 = tpu.matmul %130, %128, %cst_90 {dimension_numbers = #tpu.dot_dimension_numbers<[1], [0], [0], [1], [0, 0, 1, 1], [], []>} : vector<16x16xf32>, vector<16x128xf32>, vector<16x128xf32> -> vector<16x128xf32>
    %132 = arith.addf %125, %131 : vector<16x128xf32>
    %c6 = arith.constant 6 : index
    %c0_91 = arith.constant 0 : index
    %c0_92 = arith.constant 0 : index
    %133 = vector.load %arg7[%c6, %c0_91, %c0_92] : memref<9x256x128xf32, #tpu.memory_space<vmem>>, vector<1x256x128xf32>
    %134 = vector.shape_cast %133 : vector<1x256x128xf32> to vector<256x128xf32>
    %cst_93 = arith.constant dense<0.000000e+00> : vector<16x128xf32>
    %135 = tpu.matmul %91, %134, %cst_93 {dimension_numbers = #tpu.dot_dimension_numbers<[1], [0], [0], [1], [0, 0, 1, 1], [], []>} : vector<16x256xf32>, vector<256x128xf32>, vector<16x128xf32> -> vector<16x128xf32>
    %c6_94 = arith.constant 6 : index
    %c0_95 = arith.constant 0 : index
    %c0_96 = arith.constant 0 : index
    %136 = vector.load %arg4[%c6_94, %c0_95, %c0_96] : memref<9x16x16xf32, #tpu.memory_space<vmem>>, vector<1x16x16xf32>
    %137 = vector.shape_cast %136 : vector<1x16x16xf32> to vector<16x16xf32>
    %cst_97 = arith.constant dense<0.000000e+00> : vector<16x128xf32>
    %138 = tpu.matmul %137, %135, %cst_97 {dimension_numbers = #tpu.dot_dimension_numbers<[1], [0], [0], [1], [0, 0, 1, 1], [], []>} : vector<16x16xf32>, vector<16x128xf32>, vector<16x128xf32> -> vector<16x128xf32>
    %139 = arith.addf %132, %138 : vector<16x128xf32>
    %c7 = arith.constant 7 : index
    %c0_98 = arith.constant 0 : index
    %c0_99 = arith.constant 0 : index
    %140 = vector.load %arg7[%c7, %c0_98, %c0_99] : memref<9x256x128xf32, #tpu.memory_space<vmem>>, vector<1x256x128xf32>
    %141 = vector.shape_cast %140 : vector<1x256x128xf32> to vector<256x128xf32>
    %cst_100 = arith.constant dense<0.000000e+00> : vector<16x128xf32>
    %142 = tpu.matmul %91, %141, %cst_100 {dimension_numbers = #tpu.dot_dimension_numbers<[1], [0], [0], [1], [0, 0, 1, 1], [], []>} : vector<16x256xf32>, vector<256x128xf32>, vector<16x128xf32> -> vector<16x128xf32>
    %c7_101 = arith.constant 7 : index
    %c0_102 = arith.constant 0 : index
    %c0_103 = arith.constant 0 : index
    %143 = vector.load %arg4[%c7_101, %c0_102, %c0_103] : memref<9x16x16xf32, #tpu.memory_space<vmem>>, vector<1x16x16xf32>
    %144 = vector.shape_cast %143 : vector<1x16x16xf32> to vector<16x16xf32>
    %cst_104 = arith.constant dense<0.000000e+00> : vector<16x128xf32>
    %145 = tpu.matmul %144, %142, %cst_104 {dimension_numbers = #tpu.dot_dimension_numbers<[1], [0], [0], [1], [0, 0, 1, 1], [], []>} : vector<16x16xf32>, vector<16x128xf32>, vector<16x128xf32> -> vector<16x128xf32>
    %146 = arith.addf %139, %145 : vector<16x128xf32>
    %c8 = arith.constant 8 : index
    %c0_105 = arith.constant 0 : index
    %c0_106 = arith.constant 0 : index
    %147 = vector.load %arg7[%c8, %c0_105, %c0_106] : memref<9x256x128xf32, #tpu.memory_space<vmem>>, vector<1x256x128xf32>
    %148 = vector.shape_cast %147 : vector<1x256x128xf32> to vector<256x128xf32>
    %cst_107 = arith.constant dense<0.000000e+00> : vector<16x128xf32>
    %149 = tpu.matmul %91, %148, %cst_107 {dimension_numbers = #tpu.dot_dimension_numbers<[1], [0], [0], [1], [0, 0, 1, 1], [], []>} : vector<16x256xf32>, vector<256x128xf32>, vector<16x128xf32> -> vector<16x128xf32>
    %c8_108 = arith.constant 8 : index
    %c0_109 = arith.constant 0 : index
    %c0_110 = arith.constant 0 : index
    %150 = vector.load %arg4[%c8_108, %c0_109, %c0_110] : memref<9x16x16xf32, #tpu.memory_space<vmem>>, vector<1x16x16xf32>
    %151 = vector.shape_cast %150 : vector<1x16x16xf32> to vector<16x16xf32>
    %cst_111 = arith.constant dense<0.000000e+00> : vector<16x128xf32>
    %152 = tpu.matmul %151, %149, %cst_111 {dimension_numbers = #tpu.dot_dimension_numbers<[1], [0], [0], [1], [0, 0, 1, 1], [], []>} : vector<16x16xf32>, vector<16x128xf32>, vector<16x128xf32> -> vector<16x128xf32>
    %153 = arith.addf %146, %152 : vector<16x128xf32>
    %c2_112 = arith.constant 2 : index
    %c0_113 = arith.constant 0 : index
    %c0_114 = arith.constant 0 : index
    %154 = vector.load %arg9[%c2_112, %c0_113, %c0_114] : memref<4x16x3xf32, #tpu.memory_space<vmem>>, vector<1x16x3xf32>
    %155 = vector.shape_cast %154 : vector<1x16x3xf32> to vector<16x3xf32>
    %156 = vector.extract_strided_slice %155 {offsets = [0, 0], sizes = [16, 1], strides = [1, 1]} : vector<16x3xf32> to vector<16x1xf32>
    %157 = vector.extract_strided_slice %155 {offsets = [0, 1], sizes = [16, 1], strides = [1, 1]} : vector<16x3xf32> to vector<16x1xf32>
    %158 = vector.extract_strided_slice %155 {offsets = [0, 2], sizes = [16, 1], strides = [1, 1]} : vector<16x3xf32> to vector<16x1xf32>
    %cst_115 = arith.constant dense<0.000000e+00> : vector<16xf32>
    %159 = vector.multi_reduction <add>, %153, %cst_115 [1] : vector<16x128xf32> to vector<16xf32>
    %160 = vector.shape_cast %159 : vector<16xf32> to vector<16x1xf32>
    %cst_116 = arith.constant 0.0204081628 : f32
    %161 = vector.broadcast %cst_116 : f32 to vector<16x1xf32>
    %162 = arith.mulf %160, %161 : vector<16x1xf32>
    %163 = arith.mulf %153, %153 : vector<16x128xf32>
    %cst_117 = arith.constant dense<0.000000e+00> : vector<16xf32>
    %164 = vector.multi_reduction <add>, %163, %cst_117 [1] : vector<16x128xf32> to vector<16xf32>
    %165 = vector.shape_cast %164 : vector<16xf32> to vector<16x1xf32>
    %cst_118 = arith.constant 0.0204081628 : f32
    %166 = vector.broadcast %cst_118 : f32 to vector<16x1xf32>
    %167 = arith.mulf %165, %166 : vector<16x1xf32>
    %168 = arith.mulf %162, %162 : vector<16x1xf32>
    %169 = arith.subf %167, %168 : vector<16x1xf32>
    %cst_119 = arith.constant 0.000000e+00 : f32
    %170 = vector.broadcast %cst_119 : f32 to vector<16x1xf32>
    %171 = arith.maximumf %169, %170 : vector<16x1xf32>
    %172 = vector.broadcast %162 : vector<16x1xf32> to vector<16x128xf32>
    %173 = arith.subf %153, %172 : vector<16x128xf32>
    %cst_120 = arith.constant 9.99999974E-6 : f32
    %174 = vector.broadcast %cst_120 : f32 to vector<16x1xf32>
    %175 = arith.addf %171, %174 : vector<16x1xf32>
    %176 = math.rsqrt %175 : vector<16x1xf32>
    %177 = vector.broadcast %176 : vector<16x1xf32> to vector<16x128xf32>
    %178 = arith.mulf %173, %177 : vector<16x128xf32>
    %179 = vector.broadcast %156 : vector<16x1xf32> to vector<16x128xf32>
    %180 = arith.mulf %178, %179 : vector<16x128xf32>
    %181 = vector.broadcast %157 : vector<16x1xf32> to vector<16x128xf32>
    %182 = arith.addf %180, %181 : vector<16x128xf32>
    %cst_121 = arith.constant 0.000000e+00 : f32
    %183 = vector.broadcast %cst_121 : f32 to vector<16x128xf32>
    %184 = arith.cmpf oge, %182, %183 : vector<16x128xf32>
    %185 = vector.broadcast %158 : vector<16x1xf32> to vector<16x128xf32>
    %186 = arith.mulf %185, %182 : vector<16x128xf32>
    %187 = arith.select %184, %182, %186 : vector<16x128xi1>, vector<16x128xf32>
    %c0_122 = arith.constant 0 : index
    %c0_123 = arith.constant 0 : index
    %c0_124 = arith.constant 0 : index
    %188 = vector.load %arg8[%c0_122, %c0_123, %c0_124] : memref<9x128x128xf32, #tpu.memory_space<vmem>>, vector<1x128x128xf32>
    %189 = vector.shape_cast %188 : vector<1x128x128xf32> to vector<128x128xf32>
    %cst_125 = arith.constant dense<0.000000e+00> : vector<16x128xf32>
    %190 = tpu.matmul %187, %189, %cst_125 {dimension_numbers = #tpu.dot_dimension_numbers<[1], [0], [0], [1], [0, 0, 1, 1], [], []>} : vector<16x128xf32>, vector<128x128xf32>, vector<16x128xf32> -> vector<16x128xf32>
    %c0_126 = arith.constant 0 : index
    %c0_127 = arith.constant 0 : index
    %c0_128 = arith.constant 0 : index
    %191 = vector.load %arg5[%c0_126, %c0_127, %c0_128] : memref<9x8x16xf32, #tpu.memory_space<vmem>>, vector<1x8x16xf32>
    %192 = vector.shape_cast %191 : vector<1x8x16xf32> to vector<8x16xf32>
    %cst_129 = arith.constant dense<0.000000e+00> : vector<8x128xf32>
    %193 = tpu.matmul %192, %190, %cst_129 {dimension_numbers = #tpu.dot_dimension_numbers<[1], [0], [0], [1], [0, 0, 1, 1], [], []>} : vector<8x16xf32>, vector<16x128xf32>, vector<8x128xf32> -> vector<8x128xf32>
    %c1_130 = arith.constant 1 : index
    %c0_131 = arith.constant 0 : index
    %c0_132 = arith.constant 0 : index
    %194 = vector.load %arg8[%c1_130, %c0_131, %c0_132] : memref<9x128x128xf32, #tpu.memory_space<vmem>>, vector<1x128x128xf32>
    %195 = vector.shape_cast %194 : vector<1x128x128xf32> to vector<128x128xf32>
    %cst_133 = arith.constant dense<0.000000e+00> : vector<16x128xf32>
    %196 = tpu.matmul %187, %195, %cst_133 {dimension_numbers = #tpu.dot_dimension_numbers<[1], [0], [0], [1], [0, 0, 1, 1], [], []>} : vector<16x128xf32>, vector<128x128xf32>, vector<16x128xf32> -> vector<16x128xf32>
    %c1_134 = arith.constant 1 : index
    %c0_135 = arith.constant 0 : index
    %c0_136 = arith.constant 0 : index
    %197 = vector.load %arg5[%c1_134, %c0_135, %c0_136] : memref<9x8x16xf32, #tpu.memory_space<vmem>>, vector<1x8x16xf32>
    %198 = vector.shape_cast %197 : vector<1x8x16xf32> to vector<8x16xf32>
    %cst_137 = arith.constant dense<0.000000e+00> : vector<8x128xf32>
    %199 = tpu.matmul %198, %196, %cst_137 {dimension_numbers = #tpu.dot_dimension_numbers<[1], [0], [0], [1], [0, 0, 1, 1], [], []>} : vector<8x16xf32>, vector<16x128xf32>, vector<8x128xf32> -> vector<8x128xf32>
    %200 = arith.addf %193, %199 : vector<8x128xf32>
    %c2_138 = arith.constant 2 : index
    %c0_139 = arith.constant 0 : index
    %c0_140 = arith.constant 0 : index
    %201 = vector.load %arg8[%c2_138, %c0_139, %c0_140] : memref<9x128x128xf32, #tpu.memory_space<vmem>>, vector<1x128x128xf32>
    %202 = vector.shape_cast %201 : vector<1x128x128xf32> to vector<128x128xf32>
    %cst_141 = arith.constant dense<0.000000e+00> : vector<16x128xf32>
    %203 = tpu.matmul %187, %202, %cst_141 {dimension_numbers = #tpu.dot_dimension_numbers<[1], [0], [0], [1], [0, 0, 1, 1], [], []>} : vector<16x128xf32>, vector<128x128xf32>, vector<16x128xf32> -> vector<16x128xf32>
    %c2_142 = arith.constant 2 : index
    %c0_143 = arith.constant 0 : index
    %c0_144 = arith.constant 0 : index
    %204 = vector.load %arg5[%c2_142, %c0_143, %c0_144] : memref<9x8x16xf32, #tpu.memory_space<vmem>>, vector<1x8x16xf32>
    %205 = vector.shape_cast %204 : vector<1x8x16xf32> to vector<8x16xf32>
    %cst_145 = arith.constant dense<0.000000e+00> : vector<8x128xf32>
    %206 = tpu.matmul %205, %203, %cst_145 {dimension_numbers = #tpu.dot_dimension_numbers<[1], [0], [0], [1], [0, 0, 1, 1], [], []>} : vector<8x16xf32>, vector<16x128xf32>, vector<8x128xf32> -> vector<8x128xf32>
    %207 = arith.addf %200, %206 : vector<8x128xf32>
    %c3_146 = arith.constant 3 : index
    %c0_147 = arith.constant 0 : index
    %c0_148 = arith.constant 0 : index
    %208 = vector.load %arg8[%c3_146, %c0_147, %c0_148] : memref<9x128x128xf32, #tpu.memory_space<vmem>>, vector<1x128x128xf32>
    %209 = vector.shape_cast %208 : vector<1x128x128xf32> to vector<128x128xf32>
    %cst_149 = arith.constant dense<0.000000e+00> : vector<16x128xf32>
    %210 = tpu.matmul %187, %209, %cst_149 {dimension_numbers = #tpu.dot_dimension_numbers<[1], [0], [0], [1], [0, 0, 1, 1], [], []>} : vector<16x128xf32>, vector<128x128xf32>, vector<16x128xf32> -> vector<16x128xf32>
    %c3_150 = arith.constant 3 : index
    %c0_151 = arith.constant 0 : index
    %c0_152 = arith.constant 0 : index
    %211 = vector.load %arg5[%c3_150, %c0_151, %c0_152] : memref<9x8x16xf32, #tpu.memory_space<vmem>>, vector<1x8x16xf32>
    %212 = vector.shape_cast %211 : vector<1x8x16xf32> to vector<8x16xf32>
    %cst_153 = arith.constant dense<0.000000e+00> : vector<8x128xf32>
    %213 = tpu.matmul %212, %210, %cst_153 {dimension_numbers = #tpu.dot_dimension_numbers<[1], [0], [0], [1], [0, 0, 1, 1], [], []>} : vector<8x16xf32>, vector<16x128xf32>, vector<8x128xf32> -> vector<8x128xf32>
    %214 = arith.addf %207, %213 : vector<8x128xf32>
    %c4_154 = arith.constant 4 : index
    %c0_155 = arith.constant 0 : index
    %c0_156 = arith.constant 0 : index
    %215 = vector.load %arg8[%c4_154, %c0_155, %c0_156] : memref<9x128x128xf32, #tpu.memory_space<vmem>>, vector<1x128x128xf32>
    %216 = vector.shape_cast %215 : vector<1x128x128xf32> to vector<128x128xf32>
    %cst_157 = arith.constant dense<0.000000e+00> : vector<16x128xf32>
    %217 = tpu.matmul %187, %216, %cst_157 {dimension_numbers = #tpu.dot_dimension_numbers<[1], [0], [0], [1], [0, 0, 1, 1], [], []>} : vector<16x128xf32>, vector<128x128xf32>, vector<16x128xf32> -> vector<16x128xf32>
    %c4_158 = arith.constant 4 : index
    %c0_159 = arith.constant 0 : index
    %c0_160 = arith.constant 0 : index
    %218 = vector.load %arg5[%c4_158, %c0_159, %c0_160] : memref<9x8x16xf32, #tpu.memory_space<vmem>>, vector<1x8x16xf32>
    %219 = vector.shape_cast %218 : vector<1x8x16xf32> to vector<8x16xf32>
    %cst_161 = arith.constant dense<0.000000e+00> : vector<8x128xf32>
    %220 = tpu.matmul %219, %217, %cst_161 {dimension_numbers = #tpu.dot_dimension_numbers<[1], [0], [0], [1], [0, 0, 1, 1], [], []>} : vector<8x16xf32>, vector<16x128xf32>, vector<8x128xf32> -> vector<8x128xf32>
    %221 = arith.addf %214, %220 : vector<8x128xf32>
    %c5_162 = arith.constant 5 : index
    %c0_163 = arith.constant 0 : index
    %c0_164 = arith.constant 0 : index
    %222 = vector.load %arg8[%c5_162, %c0_163, %c0_164] : memref<9x128x128xf32, #tpu.memory_space<vmem>>, vector<1x128x128xf32>
    %223 = vector.shape_cast %222 : vector<1x128x128xf32> to vector<128x128xf32>
    %cst_165 = arith.constant dense<0.000000e+00> : vector<16x128xf32>
    %224 = tpu.matmul %187, %223, %cst_165 {dimension_numbers = #tpu.dot_dimension_numbers<[1], [0], [0], [1], [0, 0, 1, 1], [], []>} : vector<16x128xf32>, vector<128x128xf32>, vector<16x128xf32> -> vector<16x128xf32>
    %c5_166 = arith.constant 5 : index
    %c0_167 = arith.constant 0 : index
    %c0_168 = arith.constant 0 : index
    %225 = vector.load %arg5[%c5_166, %c0_167, %c0_168] : memref<9x8x16xf32, #tpu.memory_space<vmem>>, vector<1x8x16xf32>
    %226 = vector.shape_cast %225 : vector<1x8x16xf32> to vector<8x16xf32>
    %cst_169 = arith.constant dense<0.000000e+00> : vector<8x128xf32>
    %227 = tpu.matmul %226, %224, %cst_169 {dimension_numbers = #tpu.dot_dimension_numbers<[1], [0], [0], [1], [0, 0, 1, 1], [], []>} : vector<8x16xf32>, vector<16x128xf32>, vector<8x128xf32> -> vector<8x128xf32>
    %228 = arith.addf %221, %227 : vector<8x128xf32>
    %c6_170 = arith.constant 6 : index
    %c0_171 = arith.constant 0 : index
    %c0_172 = arith.constant 0 : index
    %229 = vector.load %arg8[%c6_170, %c0_171, %c0_172] : memref<9x128x128xf32, #tpu.memory_space<vmem>>, vector<1x128x128xf32>
    %230 = vector.shape_cast %229 : vector<1x128x128xf32> to vector<128x128xf32>
    %cst_173 = arith.constant dense<0.000000e+00> : vector<16x128xf32>
    %231 = tpu.matmul %187, %230, %cst_173 {dimension_numbers = #tpu.dot_dimension_numbers<[1], [0], [0], [1], [0, 0, 1, 1], [], []>} : vector<16x128xf32>, vector<128x128xf32>, vector<16x128xf32> -> vector<16x128xf32>
    %c6_174 = arith.constant 6 : index
    %c0_175 = arith.constant 0 : index
    %c0_176 = arith.constant 0 : index
    %232 = vector.load %arg5[%c6_174, %c0_175, %c0_176] : memref<9x8x16xf32, #tpu.memory_space<vmem>>, vector<1x8x16xf32>
    %233 = vector.shape_cast %232 : vector<1x8x16xf32> to vector<8x16xf32>
    %cst_177 = arith.constant dense<0.000000e+00> : vector<8x128xf32>
    %234 = tpu.matmul %233, %231, %cst_177 {dimension_numbers = #tpu.dot_dimension_numbers<[1], [0], [0], [1], [0, 0, 1, 1], [], []>} : vector<8x16xf32>, vector<16x128xf32>, vector<8x128xf32> -> vector<8x128xf32>
    %235 = arith.addf %228, %234 : vector<8x128xf32>
    %c7_178 = arith.constant 7 : index
    %c0_179 = arith.constant 0 : index
    %c0_180 = arith.constant 0 : index
    %236 = vector.load %arg8[%c7_178, %c0_179, %c0_180] : memref<9x128x128xf32, #tpu.memory_space<vmem>>, vector<1x128x128xf32>
    %237 = vector.shape_cast %236 : vector<1x128x128xf32> to vector<128x128xf32>
    %cst_181 = arith.constant dense<0.000000e+00> : vector<16x128xf32>
    %238 = tpu.matmul %187, %237, %cst_181 {dimension_numbers = #tpu.dot_dimension_numbers<[1], [0], [0], [1], [0, 0, 1, 1], [], []>} : vector<16x128xf32>, vector<128x128xf32>, vector<16x128xf32> -> vector<16x128xf32>
    %c7_182 = arith.constant 7 : index
    %c0_183 = arith.constant 0 : index
    %c0_184 = arith.constant 0 : index
    %239 = vector.load %arg5[%c7_182, %c0_183, %c0_184] : memref<9x8x16xf32, #tpu.memory_space<vmem>>, vector<1x8x16xf32>
    %240 = vector.shape_cast %239 : vector<1x8x16xf32> to vector<8x16xf32>
    %cst_185 = arith.constant dense<0.000000e+00> : vector<8x128xf32>
    %241 = tpu.matmul %240, %238, %cst_185 {dimension_numbers = #tpu.dot_dimension_numbers<[1], [0], [0], [1], [0, 0, 1, 1], [], []>} : vector<8x16xf32>, vector<16x128xf32>, vector<8x128xf32> -> vector<8x128xf32>
    %242 = arith.addf %235, %241 : vector<8x128xf32>
    %c8_186 = arith.constant 8 : index
    %c0_187 = arith.constant 0 : index
    %c0_188 = arith.constant 0 : index
    %243 = vector.load %arg8[%c8_186, %c0_187, %c0_188] : memref<9x128x128xf32, #tpu.memory_space<vmem>>, vector<1x128x128xf32>
    %244 = vector.shape_cast %243 : vector<1x128x128xf32> to vector<128x128xf32>
    %cst_189 = arith.constant dense<0.000000e+00> : vector<16x128xf32>
    %245 = tpu.matmul %187, %244, %cst_189 {dimension_numbers = #tpu.dot_dimension_numbers<[1], [0], [0], [1], [0, 0, 1, 1], [], []>} : vector<16x128xf32>, vector<128x128xf32>, vector<16x128xf32> -> vector<16x128xf32>
    %c8_190 = arith.constant 8 : index
    %c0_191 = arith.constant 0 : index
    %c0_192 = arith.constant 0 : index
    %246 = vector.load %arg5[%c8_190, %c0_191, %c0_192] : memref<9x8x16xf32, #tpu.memory_space<vmem>>, vector<1x8x16xf32>
    %247 = vector.shape_cast %246 : vector<1x8x16xf32> to vector<8x16xf32>
    %cst_193 = arith.constant dense<0.000000e+00> : vector<8x128xf32>
    %248 = tpu.matmul %247, %245, %cst_193 {dimension_numbers = #tpu.dot_dimension_numbers<[1], [0], [0], [1], [0, 0, 1, 1], [], []>} : vector<8x16xf32>, vector<16x128xf32>, vector<8x128xf32> -> vector<8x128xf32>
    %249 = arith.addf %242, %248 : vector<8x128xf32>
    %c3_194 = arith.constant 3 : index
    %c0_195 = arith.constant 0 : index
    %c0_196 = arith.constant 0 : index
    %250 = vector.load %arg9[%c3_194, %c0_195, %c0_196] : memref<4x16x3xf32, #tpu.memory_space<vmem>>, vector<1x16x3xf32>
    %251 = vector.shape_cast %250 : vector<1x16x3xf32> to vector<16x3xf32>
    %252 = vector.extract_strided_slice %251 {offsets = [0, 0], sizes = [8, 1], strides = [1, 1]} : vector<16x3xf32> to vector<8x1xf32>
    %253 = vector.extract_strided_slice %251 {offsets = [0, 1], sizes = [8, 1], strides = [1, 1]} : vector<16x3xf32> to vector<8x1xf32>
    %254 = vector.extract_strided_slice %251 {offsets = [0, 2], sizes = [8, 1], strides = [1, 1]} : vector<16x3xf32> to vector<8x1xf32>
    %cst_197 = arith.constant dense<0.000000e+00> : vector<8xf32>
    %255 = vector.multi_reduction <add>, %249, %cst_197 [1] : vector<8x128xf32> to vector<8xf32>
    %256 = vector.shape_cast %255 : vector<8xf32> to vector<8x1xf32>
    %cst_198 = arith.constant 6.250000e-02 : f32
    %257 = vector.broadcast %cst_198 : f32 to vector<8x1xf32>
    %258 = arith.mulf %256, %257 : vector<8x1xf32>
    %259 = arith.mulf %249, %249 : vector<8x128xf32>
    %cst_199 = arith.constant dense<0.000000e+00> : vector<8xf32>
    %260 = vector.multi_reduction <add>, %259, %cst_199 [1] : vector<8x128xf32> to vector<8xf32>
    %261 = vector.shape_cast %260 : vector<8xf32> to vector<8x1xf32>
    %cst_200 = arith.constant 6.250000e-02 : f32
    %262 = vector.broadcast %cst_200 : f32 to vector<8x1xf32>
    %263 = arith.mulf %261, %262 : vector<8x1xf32>
    %264 = arith.mulf %258, %258 : vector<8x1xf32>
    %265 = arith.subf %263, %264 : vector<8x1xf32>
    %cst_201 = arith.constant 0.000000e+00 : f32
    %266 = vector.broadcast %cst_201 : f32 to vector<8x1xf32>
    %267 = arith.maximumf %265, %266 : vector<8x1xf32>
    %268 = vector.broadcast %258 : vector<8x1xf32> to vector<8x128xf32>
    %269 = arith.subf %249, %268 : vector<8x128xf32>
    %cst_202 = arith.constant 9.99999974E-6 : f32
    %270 = vector.broadcast %cst_202 : f32 to vector<8x1xf32>
    %271 = arith.addf %267, %270 : vector<8x1xf32>
    %272 = math.rsqrt %271 : vector<8x1xf32>
    %273 = vector.broadcast %272 : vector<8x1xf32> to vector<8x128xf32>
    %274 = arith.mulf %269, %273 : vector<8x128xf32>
    %275 = vector.broadcast %252 : vector<8x1xf32> to vector<8x128xf32>
    %276 = arith.mulf %274, %275 : vector<8x128xf32>
    %277 = vector.broadcast %253 : vector<8x1xf32> to vector<8x128xf32>
    %278 = arith.addf %276, %277 : vector<8x128xf32>
    %cst_203 = arith.constant 0.000000e+00 : f32
    %279 = vector.broadcast %cst_203 : f32 to vector<8x128xf32>
    %280 = arith.cmpf oge, %278, %279 : vector<8x128xf32>
    %281 = vector.broadcast %254 : vector<8x1xf32> to vector<8x128xf32>
    %282 = arith.mulf %281, %278 : vector<8x128xf32>
    %283 = arith.select %280, %278, %282 : vector<8x128xi1>, vector<8x128xf32>
    %c0_204 = arith.constant 0 : index
    %c0_205 = arith.constant 0 : index
    %c0_206 = arith.constant 0 : index
    %284 = vector.load %arg10[%c0_204, %c0_205, %c0_206] : memref<1x8x128xf32, #tpu.memory_space<vmem>>, vector<1x8x128xf32>
    %285 = vector.shape_cast %284 : vector<1x8x128xf32> to vector<8x128xf32>
    %286 = vector.shape_cast %283 : vector<8x128xf32> to vector<1x8x128xf32>
    tpu.vector_store %arg10[%c0_204, %c0_205, %c0_206], %286 {strides = array<i32>} : memref<1x8x128xf32, #tpu.memory_space<vmem>>, vector<1x8x128xf32>,
    return
  }
  func.func @transform_0(%arg0: i32) -> (i32, i32, i32) {
    %c0_i32 = arith.constant 0 : i32
    %c0_i32_0 = arith.constant 0 : i32
    %c0_i32_1 = arith.constant 0 : i32
    return %arg0, %c0_i32, %c0_i32_0 : i32, i32, i32
  }
  func.func @transform_1(%arg0: i32) -> (i32, i32) {
    %c0_i32 = arith.constant 0 : i32
    %c0_i32_0 = arith.constant 0 : i32
    %c0_i32_1 = arith.constant 0 : i32
    return %c0_i32, %c0_i32_0 : i32, i32
  }
  func.func @transform_2(%arg0: i32) -> (i32, i32, i32) {
    %c0_i32 = arith.constant 0 : i32
    %c0_i32_0 = arith.constant 0 : i32
    %c0_i32_1 = arith.constant 0 : i32
    %c0_i32_2 = arith.constant 0 : i32
    return %c0_i32, %c0_i32_0, %c0_i32_1 : i32, i32, i32
  }
  func.func @transform_3(%arg0: i32) -> (i32, i32, i32) {
    %c0_i32 = arith.constant 0 : i32
    %c0_i32_0 = arith.constant 0 : i32
    %c0_i32_1 = arith.constant 0 : i32
    %c0_i32_2 = arith.constant 0 : i32
    return %c0_i32, %c0_i32_0, %c0_i32_1 : i32, i32, i32
  }
  func.func @transform_4(%arg0: i32) -> (i32, i32, i32) {
    %c0_i32 = arith.constant 0 : i32
    %c0_i32_0 = arith.constant 0 : i32
    %c0_i32_1 = arith.constant 0 : i32
    %c0_i32_2 = arith.constant 0 : i32
    return %c0_i32, %c0_i32_0, %c0_i32_1 : i32, i32, i32
  }
  func.func @transform_5(%arg0: i32) -> (i32, i32, i32) {
    %c0_i32 = arith.constant 0 : i32
    %c0_i32_0 = arith.constant 0 : i32
    %c0_i32_1 = arith.constant 0 : i32
    %c0_i32_2 = arith.constant 0 : i32
    return %c0_i32, %c0_i32_0, %c0_i32_1 : i32, i32, i32
  }
  func.func @transform_6(%arg0: i32) -> (i32, i32, i32) {
    %c0_i32 = arith.constant 0 : i32
    %c0_i32_0 = arith.constant 0 : i32
    %c0_i32_1 = arith.constant 0 : i32
    %c0_i32_2 = arith.constant 0 : i32
    return %c0_i32, %c0_i32_0, %c0_i32_1 : i32, i32, i32
  }
  func.func @transform_7(%arg0: i32) -> (i32, i32, i32) {
    %c0_i32 = arith.constant 0 : i32
    %c0_i32_0 = arith.constant 0 : i32
    %c0_i32_1 = arith.constant 0 : i32
    %c0_i32_2 = arith.constant 0 : i32
    return %c0_i32, %c0_i32_0, %c0_i32_1 : i32, i32, i32
  }
  func.func @transform_8(%arg0: i32) -> (i32, i32, i32) {
    %c0_i32 = arith.constant 0 : i32
    %c0_i32_0 = arith.constant 0 : i32
    %c0_i32_1 = arith.constant 0 : i32
    %c0_i32_2 = arith.constant 0 : i32
    return %c0_i32, %c0_i32_0, %c0_i32_1 : i32, i32, i32
  }
  func.func @transform_9(%arg0: i32) -> (i32, i32, i32) {
    %c0_i32 = arith.constant 0 : i32
    %c0_i32_0 = arith.constant 0 : i32
    %c0_i32_1 = arith.constant 0 : i32
    return %arg0, %c0_i32, %c0_i32_0 : i32, i32, i32
  }
}

</mosaic_0001>

<llo_original>
// kernel: tpu_custom_call.1
$region0: #{tpu_custom_call.1}
  #allocation0 [shape = 'u32[]', space=smem, size = 0x4, offset = 0x4, fixed_abs, tag = 'smem constant byte address 0x4 - core index']
  #allocation1 [shape = 'u32[144,128]{1,0:T(1,128)}', space=vmem, size = 0x12000, scoped, tag = 'internal scratch']
  %s0 = inlined_call_operand.vmem [shape: f32[2,18,512], index: 0, kind: input, shape index: {}]
  %s1 = inlined_call_operand.hbm [shape: f32[8,18], index: 1, kind: input, shape index: {}]
  %s2 = inlined_call_operand.vmem [shape: f32[3,16,8], index: 2, kind: input, shape index: {}]
  %s3 = inlined_call_operand.hbm [shape: f32[9,16,16], index: 3, kind: input, shape index: {}]
  %s4 = inlined_call_operand.hbm [shape: f32[9,8,16], index: 4, kind: input, shape index: {}]
  %s5 = inlined_call_operand.hbm [shape: f32[3,512,256], index: 5, kind: input, shape index: {}]
  %s6 = inlined_call_operand.hbm [shape: f32[9,256,128], index: 6, kind: input, shape index: {}]
  %s7 = inlined_call_operand.hbm [shape: f32[9,128,128], index: 7, kind: input, shape index: {}]
  %s8 = inlined_call_operand.vmem [shape: f32[4,16,3], index: 8, kind: input, shape index: {}]
  %s9 = inlined_call_operand.hbm [shape: f32[2,8,128], index: 9, kind: output, shape index: {}]
  %s10 = sld [smem:[#allocation0]]
  $region93: #{tpu_custom_call.1} parent=0
    _
  %s12 = ssub.s32 1, %s10
  %s13 = scalar_select 0, %s12, %s10
  $region1: #{tpu_custom_call.1} parent=0
    #allocation2 [shape = 'u8[4096]{0}', space=vmem, size = 0x1000, scoped, tag = 'input window, operand 1, single buffered']
    #allocation3 [shape = 's32[2]{0}', space=sflag, size = 0x8, scoped, tag = 'scoped memory for tpu_custom_call.1']
    #allocation4 [shape = 's32[2]{0}', space=sflag, size = 0x8, scoped, tag = 'scoped memory for tpu_custom_call.1']
    #allocation5 [shape = 'u8[73728]{0}', space=vmem, size = 0x12000, scoped, tag = 'input window, operand 3, single buffered']
    #allocation6 [shape = 's32[1]{0}', space=sflag, size = 0x4, scoped, tag = 'scoped memory for tpu_custom_call.1']
    #allocation7 [shape = 'u8[36864]{0}', space=vmem, size = 0x9000, scoped, tag = 'input window, operand 4, single buffered']
    #allocation8 [shape = 'u8[1572864]{0}', space=vmem, size = 0x180000, scoped, tag = 'input window, operand 5, single buffered']
    #allocation9 [shape = 's32[1]{0}', space=sflag, size = 0x4, scoped, tag = 'scoped memory for tpu_custom_call.1']
    #allocation10 [shape = 'u8[1179648]{0}', space=vmem, size = 0x120000, scoped, tag = 'input window, operand 6, single buffered']
    #allocation11 [shape = 'u8[589824]{0}', space=vmem, size = 0x90000, scoped, tag = 'input window, operand 7, single buffered']
    #allocation12 [shape = 's32[1]{0}', space=sflag, size = 0x4, scoped, tag = 'scoped memory for tpu_custom_call.1']
    #allocation13 [shape = 'u8[8192]{0}', space=vmem, size = 0x2000, scoped, tag = 'output window, operand 0']
    %14 = vsyncpa [#allocation3], 0
    %15 = vsyncpa [#allocation6], 0
    %16 = vsyncpa [#allocation9], 0
    %17 = vsyncpa [#allocation12], 0
    %18 = vsyncpa [#allocation4], 0
    %s19 = scalar_lea.sflag [#allocation4], 1
    %20 = vsyncpa %s19, 0
    loop: start=0, step=1, limit=4
    $region2: #{tpu_custom_call.1} parent=1 // loop_pre_header
      _
    $region3: #{tpu_custom_call.1} parent=1 // loop_header
      %s22 = sphi 0, %s26
      %p23 = scmp.ge.s32.totalorder %s22, 4
      %s32 = sphi 0, %s34
      %s35 = sphi 0, %s32
      %s36 = sphi 0, %s35
      %s52 = sphi 0, %s36
      %s56 = sphi 0, %s56
      %s58 = sphi 0, %s56
      %s59 = sphi 0, %s58
      %s73 = sphi 0, %s59
      %s77 = sphi 0, %s77
      %s79 = sphi 0, %s77
      %s80 = sphi 0, %s79
      %s94 = sphi 0, %s80
      %s98 = sphi 0, %s98
      %s100 = sphi 0, %s98
      %s101 = sphi 0, %s100
      %s115 = sphi 0, %s101
      %s119 = sphi 0, %s119
      %s121 = sphi 0, %s119
      %s122 = sphi 0, %s121
      %s136 = sphi 0, %s122
      %s140 = sphi 0, %s140
      %s142 = sphi 0, %s140
      %s143 = sphi 0, %s142
      %s157 = sphi 0, %s143
      %s161 = sphi 0, %s161
      %s163 = sphi 0, %s161
      %s164 = sphi 0, %s163
      %s178 = sphi 0, %s164
      %s182 = sphi 0, %s182
      %s184 = sphi 0, %s182
      %s185 = sphi 0, %s184
      %s199 = sphi 0, %s185
      %s203 = sphi 0, %s203
      %s205 = sphi 0, %s203
      %s206 = sphi 0, %s205
      %s220 = sphi 0, %s206
      %s226 = sphi 0, %s228
      %s229 = sphi 0, %s226
      %s230 = sphi 0, %s229
      %s246 = sphi 0, %s230
    $region4: #{tpu_custom_call.1} parent=1 // loop_header_branch
      %25 = sbr.rel (%p23) target = $region8
    $region5: #{tpu_custom_call.1} parent=1 // loop_body
      %s27 = ssub.s32 %s22, 1
      %s28 = ssub.s32 %s22, 2
      %s29 = sadd.s32 %s22, 1
      %s30 = ssub.s32 %s22, %s29
      %p31 = scmp.eq.s32.totalorder %s30, 0
      %s33 = sadd.s32 %s32, 1
      %s34 = scalar_select %p31, %s32, %s33
      %p37 = pneg %p31
      %p38 = scmp.eq.s32.totalorder %s22, 1
      %p39 = por %p37, %p38
      %p40 = scmp.ne.s32.totalorder %s32, %s35
      %p41 = scmp.eq.s32.totalorder %s22, 0
      %p42 = por %p40, %p41
      %p43 = scmp.ne.s32.totalorder %s32, %s35
      %p44 = scmp.eq.s32.totalorder %s27, 1
      %p45 = por %p43, %p44
      %p46 = scmp.ne.s32.totalorder %s35, %s36
      %p47 = scmp.eq.s32.totalorder %s27, 0
      %p48 = por %p46, %p47
      %p49 = scmp.ne.s32.totalorder %s35, %s36
      %p50 = scmp.eq.s32.totalorder %s28, 1
      %p51 = por %p49, %p50
      %p53 = scmp.ne.s32.totalorder %s36, %s52
      %p54 = scmp.eq.s32.totalorder %s28, 0
      %p55 = por %p53, %p54
      %s57 = sadd.s32 %s56, 1
      %p60 = scmp.eq.s32.totalorder %s22, 1
      %p61 = scmp.ne.s32.totalorder %s56, %s58
      %p62 = scmp.eq.s32.totalorder %s22, 0
      %p63 = por %p61, %p62
      %p64 = scmp.ne.s32.totalorder %s56, %s58
      %p65 = scmp.eq.s32.totalorder %s27, 1
      %p66 = por %p64, %p65
      %p67 = scmp.ne.s32.totalorder %s58, %s59
      %p68 = scmp.eq.s32.totalorder %s27, 0
      %p69 = por %p67, %p68
      %p70 = scmp.ne.s32.totalorder %s58, %s59
      %p71 = scmp.eq.s32.totalorder %s28, 1
      %p72 = por %p70, %p71
      %p74 = scmp.ne.s32.totalorder %s59, %s73
      %p75 = scmp.eq.s32.totalorder %s28, 0
      %p76 = por %p74, %p75
      %s78 = sadd.s32 %s77, 1
      %p81 = scmp.eq.s32.totalorder %s22, 1
      %p82 = scmp.ne.s32.totalorder %s77, %s79
      %p83 = scmp.eq.s32.totalorder %s22, 0
      %p84 = por %p82, %p83
      %p85 = scmp.ne.s32.totalorder %s77, %s79
      %p86 = scmp.eq.s32.totalorder %s27, 1
      %p87 = por %p85, %p86
      %p88 = scmp.ne.s32.totalorder %s79, %s80
      %p89 = scmp.eq.s32.totalorder %s27, 0
      %p90 = por %p88, %p89
      %p91 = scmp.ne.s32.totalorder %s79, %s80
      %p92 = scmp.eq.s32.totalorder %s28, 1
      %p93 = por %p91, %p92
      %p95 = scmp.ne.s32.totalorder %s80, %s94
      %p96 = scmp.eq.s32.totalorder %s28, 0
      %p97 = por %p95, %p96
      %s99 = sadd.s32 %s98, 1
      %p102 = scmp.eq.s32.totalorder %s22, 1
      %p103 = scmp.ne.s32.totalorder %s98, %s100
      %p104 = scmp.eq.s32.totalorder %s22, 0
      %p105 = por %p103, %p104
      %p106 = scmp.ne.s32.totalorder %s98, %s100
      %p107 = scmp.eq.s32.totalorder %s27, 1
      %p108 = por %p106, %p107
      %p109 = scmp.ne.s32.totalorder %s100, %s101
      %p110 = scmp.eq.s32.totalorder %s27, 0
      %p111 = por %p109, %p110
      %p112 = scmp.ne.s32.totalorder %s100, %s101
      %p113 = scmp.eq.s32.totalorder %s28, 1
      %p114 = por %p112, %p113
      %p116 = scmp.ne.s32.totalorder %s101, %s115
      %p117 = scmp.eq.s32.totalorder %s28, 0
      %p118 = por %p116, %p117
      %s120 = sadd.s32 %s119, 1
      %p123 = scmp.eq.s32.totalorder %s22, 1
      %p124 = scmp.ne.s32.totalorder %s119, %s121
      %p125 = scmp.eq.s32.totalorder %s22, 0
      %p126 = por %p124, %p125
      %p127 = scmp.ne.s32.totalorder %s119, %s121
      %p128 = scmp.eq.s32.totalorder %s27, 1
      %p129 = por %p127, %p128
      %p130 = scmp.ne.s32.totalorder %s121, %s122
      %p131 = scmp.eq.s32.totalorder %s27, 0
      %p132 = por %p130, %p131
      %p133 = scmp.ne.s32.totalorder %s121, %s122
      %p134 = scmp.eq.s32.totalorder %s28, 1
      %p135 = por %p133, %p134
      %p137 = scmp.ne.s32.totalorder %s122, %s136
      %p138 = scmp.eq.s32.totalorder %s28, 0
      %p139 = por %p137, %p138
      %s141 = sadd.s32 %s140, 1
      %p144 = scmp.eq.s32.totalorder %s22, 1
      %p145 = scmp.ne.s32.totalorder %s140, %s142
      %p146 = scmp.eq.s32.totalorder %s22, 0
      %p147 = por %p145, %p146
      %p148 = scmp.ne.s32.totalorder %s140, %s142
      %p149 = scmp.eq.s32.totalorder %s27, 1
      %p150 = por %p148, %p149
      %p151 = scmp.ne.s32.totalorder %s142, %s143
      %p152 = scmp.eq.s32.totalorder %s27, 0
      %p153 = por %p151, %p152
      %p154 = scmp.ne.s32.totalorder %s142, %s143
      %p155 = scmp.eq.s32.totalorder %s28, 1
      %p156 = por %p154, %p155
      %p158 = scmp.ne.s32.totalorder %s143, %s157
      %p159 = scmp.eq.s32.totalorder %s28, 0
      %p160 = por %p158, %p159
      %s162 = sadd.s32 %s161, 1
      %p165 = scmp.eq.s32.totalorder %s22, 1
      %p166 = scmp.ne.s32.totalorder %s161, %s163
      %p167 = scmp.eq.s32.totalorder %s22, 0
      %p168 = por %p166, %p167
      %p169 = scmp.ne.s32.totalorder %s161, %s163
      %p170 = scmp.eq.s32.totalorder %s27, 1
      %p171 = por %p169, %p170
      %p172 = scmp.ne.s32.totalorder %s163, %s164
      %p173 = scmp.eq.s32.totalorder %s27, 0
      %p174 = por %p172, %p173
      %p175 = scmp.ne.s32.totalorder %s163, %s164
      %p176 = scmp.eq.s32.totalorder %s28, 1
      %p177 = por %p175, %p176
      %p179 = scmp.ne.s32.totalorder %s164, %s178
      %p180 = scmp.eq.s32.totalorder %s28, 0
      %p181 = por %p179, %p180
      %s183 = sadd.s32 %s182, 1
      %p186 = scmp.eq.s32.totalorder %s22, 1
      %p187 = scmp.ne.s32.totalorder %s182, %s184
      %p188 = scmp.eq.s32.totalorder %s22, 0
      %p189 = por %p187, %p188
      %p190 = scmp.ne.s32.totalorder %s182, %s184
      %p191 = scmp.eq.s32.totalorder %s27, 1
      %p192 = por %p190, %p191
      %p193 = scmp.ne.s32.totalorder %s184, %s185
      %p194 = scmp.eq.s32.totalorder %s27, 0
      %p195 = por %p193, %p194
      %p196 = scmp.ne.s32.totalorder %s184, %s185
      %p197 = scmp.eq.s32.totalorder %s28, 1
      %p198 = por %p196, %p197
      %p200 = scmp.ne.s32.totalorder %s185, %s199
      %p201 = scmp.eq.s32.totalorder %s28, 0
      %p202 = por %p200, %p201
      %s204 = sadd.s32 %s203, 1
      %p207 = scmp.eq.s32.totalorder %s22, 1
      %p208 = scmp.ne.s32.totalorder %s203, %s205
      %p209 = scmp.eq.s32.totalorder %s22, 0
      %p210 = por %p208, %p209
      %p211 = scmp.ne.s32.totalorder %s203, %s205
      %p212 = scmp.eq.s32.totalorder %s27, 1
      %p213 = por %p211, %p212
      %p214 = scmp.ne.s32.totalorder %s205, %s206
      %p215 = scmp.eq.s32.totalorder %s27, 0
      %p216 = por %p214, %p215
      %p217 = scmp.ne.s32.totalorder %s205, %s206
      %p218 = scmp.eq.s32.totalorder %s28, 1
      %p219 = por %p217, %p218
      %p221 = scmp.ne.s32.totalorder %s206, %s220
      %p222 = scmp.eq.s32.totalorder %s28, 0
      %p223 = por %p221, %p222
      %s224 = ssub.s32 %s22, %s29
      %p225 = scmp.eq.s32.totalorder %s224, 0
      %s227 = sadd.s32 %s226, 1
      %s228 = scalar_select %p225, %s226, %s227
      %p231 = pneg %p225
      %p232 = scmp.eq.s32.totalorder %s22, 1
      %p233 = por %p231, %p232
      %p234 = scmp.ne.s32.totalorder %s226, %s229
      %p235 = scmp.eq.s32.totalorder %s22, 0
      %p236 = por %p234, %p235
      %p237 = scmp.ne.s32.totalorder %s226, %s229
      %p238 = scmp.eq.s32.totalorder %s27, 1
      %p239 = por %p237, %p238
      %p240 = scmp.ne.s32.totalorder %s229, %s230
      %p241 = scmp.eq.s32.totalorder %s27, 0
      %p242 = por %p240, %p241
      %p243 = scmp.ne.s32.totalorder %s229, %s230
      %p244 = scmp.eq.s32.totalorder %s28, 1
      %p245 = por %p243, %p244
      %p247 = scmp.ne.s32.totalorder %s230, %s246
      %p248 = scmp.eq.s32.totalorder %s28, 0
      %p249 = por %p247, %p248
      %p250 = scmp.le.s32.totalorder 1, %s22
      %p251 = scmp.lt.s32.totalorder %s22, 3
      %p252 = pnand %p250, %p251
      %p253 = pneg %p252
      // Predicated region
      $region9: #{tpu_custom_call.1} parent=5 // pred_check
        _
      $region10: #{tpu_custom_call.1} parent=5 // pred_check_branch
        %255 = sbr.rel (%p252) target = $region12
      $region11: #{tpu_custom_call.1} parent=5 // pred_region
        %s256 = ssub.s32 %s22, 1
        // Predicated region
        $region13: #{tpu_custom_call.1} parent=11 // pred_check
          %p257 = pneg %p69
        $region14: #{tpu_custom_call.1} parent=11 // pred_check_branch
          %259 = sbr.rel (%p257) target = $region16
        $region15: #{tpu_custom_call.1} parent=11 // pred_region
          %s261 = ssub.s32 128, 128
          %262 = vsyncadd [#allocation3], %s261
          %s264 = sshll.u32 [#allocation2], 4
          %s265 = int_to_ptr.vmem [resolvable:$true] %s264
          %267 = dma.hbm_to_vmem [thread:$0]  %s1, 128, %s265, [#allocation3]
        $region16: #{tpu_custom_call.1} parent=11 // pred_fallthru
          _
        // Predicated region
        $region17: #{tpu_custom_call.1} parent=11 // pred_check
          %p268 = pneg %p90
        $region18: #{tpu_custom_call.1} parent=11 // pred_check_branch
          %270 = sbr.rel (%p268) target = $region20
        $region19: #{tpu_custom_call.1} parent=11 // pred_region
          _
        $region20: #{tpu_custom_call.1} parent=11 // pred_fallthru
          _
        // Predicated region
        $region21: #{tpu_custom_call.1} parent=11 // pred_check
          %p271 = pneg %p111
        $region22: #{tpu_custom_call.1} parent=11 // pred_check_branch
          %273 = sbr.rel (%p271) target = $region24
        $region23: #{tpu_custom_call.1} parent=11 // pred_region
          %s275 = ssub.s32 2304, 2304
          %276 = vsyncadd [#allocation6], %s275
          %s277 = sshll.u32 [#allocation5], 4
          %s278 = int_to_ptr.vmem [resolvable:$true] %s277
          %283 = dma.hbm_to_vmem [thread:$0]  %s3, 2304, %s278, [#allocation6], 128, 128, 8
        $region24: #{tpu_custom_call.1} parent=11 // pred_fallthru
          _
        // Predicated region
        $region25: #{tpu_custom_call.1} parent=11 // pred_check
          %p284 = pneg %p132
        $region26: #{tpu_custom_call.1} parent=11 // pred_check_branch
          %286 = sbr.rel (%p284) target = $region28
        $region27: #{tpu_custom_call.1} parent=11 // pred_region
          %s288 = ssub.s32 1152, 1152
          %289 = vsyncadd [#allocation6], %s288
          %s290 = sshll.u32 [#allocation7], 4
          %s291 = int_to_ptr.vmem [resolvable:$true] %s290
          %296 = dma.hbm_to_vmem [thread:$0]  %s4, 1152, %s291, [#allocation6], 128, 128, 8
        $region28: #{tpu_custom_call.1} parent=11 // pred_fallthru
          _
        // Predicated region
        $region29: #{tpu_custom_call.1} parent=11 // pred_check
          %p297 = pneg %p153
        $region30: #{tpu_custom_call.1} parent=11 // pred_check_branch
          %299 = sbr.rel (%p297) target = $region32
        $region31: #{tpu_custom_call.1} parent=11 // pred_region
          %s301 = ssub.s32 49152, 49152
          %302 = vsyncadd [#allocation9], %s301
          %s303 = sshll.u32 [#allocation8], 4
          %s304 = int_to_ptr.vmem [resolvable:$true] %s303
          %309 = dma.hbm_to_vmem [thread:$0]  %s5, 49152, %s304, [#allocation9], 256, 256, 16
        $region32: #{tpu_custom_call.1} parent=11 // pred_fallthru
          _
        // Predicated region
        $region33: #{tpu_custom_call.1} parent=11 // pred_check
          %p310 = pneg %p174
        $region34: #{tpu_custom_call.1} parent=11 // pred_check_branch
          %312 = sbr.rel (%p310) target = $region36
        $region35: #{tpu_custom_call.1} parent=11 // pred_region
          %s314 = ssub.s32 36864, 36864
          %315 = vsyncadd [#allocation9], %s314
          %s316 = sshll.u32 [#allocation10], 4
          %s317 = int_to_ptr.vmem [resolvable:$true] %s316
          %322 = dma.hbm_to_vmem [thread:$0]  %s6, 36864, %s317, [#allocation9], 128, 128, 8
        $region36: #{tpu_custom_call.1} parent=11 // pred_fallthru
          _
        // Predicated region
        $region37: #{tpu_custom_call.1} parent=11 // pred_check
          %p323 = pneg %p195
        $region38: #{tpu_custom_call.1} parent=11 // pred_check_branch
          %325 = sbr.rel (%p323) target = $region40
        $region39: #{tpu_custom_call.1} parent=11 // pred_region
          %s327 = ssub.s32 18432, 18432
          %328 = vsyncadd [#allocation12], %s327
          %s329 = sshll.u32 [#allocation11], 4
          %s330 = int_to_ptr.vmem [resolvable:$true] %s329
          %335 = dma.hbm_to_vmem [thread:$0]  %s7, 18432, %s330, [#allocation12], 128, 128, 8
        $region40: #{tpu_custom_call.1} parent=11 // pred_fallthru
          _
        // Predicated region
        $region41: #{tpu_custom_call.1} parent=11 // pred_check
          %p336 = pneg %p216
        $region42: #{tpu_custom_call.1} parent=11 // pred_check_branch
          %338 = sbr.rel (%p336) target = $region44
        $region43: #{tpu_custom_call.1} parent=11 // pred_region
          _
        $region44: #{tpu_custom_call.1} parent=11 // pred_fallthru
          _
      $region12: #{tpu_custom_call.1} parent=5 // pred_fallthru
        _
      %p339 = scmp.lt.s32.totalorder %s22, 2
      // Predicated region
      $region45: #{tpu_custom_call.1} parent=5 // pred_check
        %p340 = pneg %p339
      $region46: #{tpu_custom_call.1} parent=5 // pred_check_branch
        %342 = sbr.rel (%p340) target = $region48
      $region47: #{tpu_custom_call.1} parent=5 // pred_region
        // Predicated region
        $region49: #{tpu_custom_call.1} parent=47 // pred_check
          %p343 = pneg %p42
        $region50: #{tpu_custom_call.1} parent=47 // pred_check_branch
          %345 = sbr.rel (%p343) target = $region52
        $region51: #{tpu_custom_call.1} parent=47 // pred_region
          %p346 = scmp.lt.s32.totalorder %s22, 1
          %s347 = scalar_select %p346, %s22, 1
          %s348 = smul.addr %s347, 12
          %s349 = smul.addr %s348, 8
          %s350 = scalar_lea.vmem %s0, %s349
        $region52: #{tpu_custom_call.1} parent=47 // pred_fallthru
          _
      $region48: #{tpu_custom_call.1} parent=5 // pred_fallthru
        _
      %p351 = scmp.le.s32.totalorder 1, %s22
      %p352 = scmp.lt.s32.totalorder %s22, 3
      %p353 = pnand %p351, %p352
      %p354 = pneg %p353
      // Predicated region
      $region53: #{tpu_custom_call.1} parent=5 // pred_check
        _
      $region54: #{tpu_custom_call.1} parent=5 // pred_check_branch
        %356 = sbr.rel (%p353) target = $region56
      $region55: #{tpu_custom_call.1} parent=5 // pred_region
        %s357 = ssub.s32 %s22, 1
        // Predicated region
        $region57: #{tpu_custom_call.1} parent=55 // pred_check
          %p358 = pneg %p69
        $region58: #{tpu_custom_call.1} parent=55 // pred_check_branch
          %360 = sbr.rel (%p358) target = $region60
        $region59: #{tpu_custom_call.1} parent=55 // pred_region
          %361 = dma.done [#allocation3], 128
        $region60: #{tpu_custom_call.1} parent=55 // pred_fallthru
          _
        // Predicated region
        $region61: #{tpu_custom_call.1} parent=55 // pred_check
          %p362 = pneg %p111
        $region62: #{tpu_custom_call.1} parent=55 // pred_check_branch
          %364 = sbr.rel (%p362) target = $region64
        $region63: #{tpu_custom_call.1} parent=55 // pred_region
          %365 = dma.done [#allocation6], 2304
        $region64: #{tpu_custom_call.1} parent=55 // pred_fallthru
          _
        // Predicated region
        $region65: #{tpu_custom_call.1} parent=55 // pred_check
          %p366 = pneg %p132
        $region66: #{tpu_custom_call.1} parent=55 // pred_check_branch
          %368 = sbr.rel (%p366) target = $region68
        $region67: #{tpu_custom_call.1} parent=55 // pred_region
          %369 = dma.done [#allocation6], 1152
        $region68: #{tpu_custom_call.1} parent=55 // pred_fallthru
          _
        // Predicated region
        $region69: #{tpu_custom_call.1} parent=55 // pred_check
          %p370 = pneg %p153
        $region70: #{tpu_custom_call.1} parent=55 // pred_check_branch
          %372 = sbr.rel (%p370) target = $region72
        $region71: #{tpu_custom_call.1} parent=55 // pred_region
          %373 = dma.done [#allocation9], 49152
        $region72: #{tpu_custom_call.1} parent=55 // pred_fallthru
          _
        // Predicated region
        $region73: #{tpu_custom_call.1} parent=55 // pred_check
          %p374 = pneg %p174
        $region74: #{tpu_custom_call.1} parent=55 // pred_check_branch
          %376 = sbr.rel (%p374) target = $region76
        $region75: #{tpu_custom_call.1} parent=55 // pred_region
          %377 = dma.done [#allocation9], 36864
        $region76: #{tpu_custom_call.1} parent=55 // pred_fallthru
          _
        // Predicated region
        $region77: #{tpu_custom_call.1} parent=55 // pred_check
          %p378 = pneg %p195
        $region78: #{tpu_custom_call.1} parent=55 // pred_check_branch
          %380 = sbr.rel (%p378) target = $region80
        $region79: #{tpu_custom_call.1} parent=55 // pred_region
          %381 = dma.done [#allocation12], 18432
        $region80: #{tpu_custom_call.1} parent=55 // pred_fallthru
          _
        %p382 = scmp.lt.s32.totalorder %s27, 1
        %s383 = scalar_select %p382, %s27, 1
        %s384 = smul.addr %s383, 12
        %s385 = smul.addr %s384, 8
        %s386 = scalar_lea.vmem %s0, %s385
        %p387 = pneg %p48
        %p388 = pneg %p45
        %p389 = pneg %p69
        %p390 = pneg %p66
        %p391 = pneg %p90
        %p392 = pneg %p87
        %p393 = pneg %p111
        %p394 = pneg %p108
        %p395 = pneg %p132
        %p396 = pneg %p129
        %p397 = pneg %p153
        %p398 = pneg %p150
        %p399 = pneg %p174
        %p400 = pneg %p171
        %p401 = pneg %p195
        %p402 = pneg %p192
        %p403 = pneg %p216
        %p404 = pneg %p213
        %p405 = pneg %p242
        %p406 = pneg %p239
        %s407 = sand.u32 %s229, 1
        %s408 = scalar_lea.sflag [#allocation4], %s407
        %s409 = sand.u32 %s229, 1
        %s410 = smul.addr %s409, 8
        %s411 = scalar_lea.vmem [#allocation13], %s410
        %p412 = scmp.lt.s32.totalorder %s27, 1
        %s413 = scalar_select %p412, %s27, 1
        %s414 = smul.addr %s413, 12
        %s415 = smul.addr %s414, 8
        %s416 = scalar_lea.vmem %s0, %s415
        %v417 = vld [vmem:[#allocation2] sm:$0xff]
        %v418 = vld [vmem:[%s416] sm:$0xff]
        %v419 = vld [vmem:[%s416 + $0x8] sm:$0xff]
        %v420 = vld [vmem:[%s416 + $0x10] sm:$0xff]
        %v421 = vld [vmem:[%s416 + $0x18] sm:$0xff]
        %v422 = vld [vmem:[%s416 + $0x20] sm:$0xff]
        %v423 = vld [vmem:[%s416 + $0x28] sm:$0xff]
        %v424 = vld [vmem:[%s416 + $0x30] sm:$0xff]
        %v425 = vld [vmem:[%s416 + $0x38] sm:$0xff]
        %v426 = vld [vmem:[%s416 + $0x40] sm:$0x3]
        %v427 = vld [vmem:[%s416 + $0x48] sm:$0x3]
        %v428 = vld [vmem:[%s416 + $0x50] sm:$0x3]
        %v429 = vld [vmem:[%s416 + $0x58] sm:$0x3]
        %vm430 = vcmask 146432
        %v432 = vsel %vm430, %v417, 0
        %vm434 = vcmask 1041408
        %v436 = vsel %vm434, %v426, 0
        %v439 = vsel %vm434, %v427, 0
        %v442 = vsel %vm434, %v428, 0
        %v445 = vsel %vm434, %v429, 0
        %447 = vmatprep.subr.mxu0 %v419
        %448 = vmatpush1.msra.mxu0 %v418
        %449 = vmatprep.subr.mxu0 %v423
        %450 = vmatpush1.msra.mxu0 %v422
        %451 = vmatprep.subr.mxu0 %v439
        %452 = vmatpush1.msra.mxu0 %v436
        %453 = vmatprep.subr.mxu0 0.0
        %454 = vmatpush1.msra.mxu0 0.0
        %455 = vmatprep.subr.mxu0 0.0
        %456 = vmatpush1.msra.mxu0 0.0
        %457 = vmatprep.subr.mxu0 0.0
        %458 = vmatpush1.msra.mxu0 0.0
        %459 = vmatprep.subr.mxu0 0.0
        %460 = vmatpush1.msra.mxu0 0.0
        %461 = vmatprep.subr.mxu0 0.0
        %462 = vmatpush1.msra.mxu0 0.0
        %463 = vmatprep.subr.mxu0 0.0
        %464 = vmatpush1.msra.mxu0 0.0
        %465 = vmatprep.subr.mxu0 0.0
        %466 = vmatpush1.msra.mxu0 0.0
        %467 = vmatprep.subr.mxu0 0.0
        %468 = vmatpush1.msra.mxu0 0.0
        %469 = vmatprep.subr.mxu0 0.0
        %470 = vmatpush1.msra.mxu0 0.0
        %471 = vmatprep.subr.mxu0 0.0
        %472 = vmatpush1.msra.mxu0 0.0
        %473 = vmatprep.subr.mxu0 0.0
        %474 = vmatpush1.msra.mxu0 0.0
        %475 = vmatprep.subr.mxu0 0.0
        %476 = vmatpush1.msra.mxu0 0.0
        %477 = vmatprep.subr.mxu0 0.0
        %478 = vmatpush1.msra.mxu0 0.0
        %479 = vmatprep.subr.mxu0 0.0
        %480 = vmatpush1.msra.mxu0 0.0
        %481 = vmatprep.subr.mxu0 0.0
        %482 = vmatpush1.msra.mxu0 0.0
        %483 = vmatprep.subr.mxu0 0.0
        %484 = vmatpush1.msra.mxu0 0.0
        %485 = vmatprep.subr.mxu0 0.0
        %486 = vmatpush1.msra.mxu0 0.0
        %487 = vmatprep.subr.mxu0 0.0
        %488 = vmatpush1.msra.mxu0 0.0
        %489 = vmatprep.subr.mxu0 0.0
        %490 = vmatpush1.msra.mxu0 0.0
        %491 = vmatprep.subr.mxu0 0.0
        %492 = vmatpush1.msra.mxu0 0.0
        %493 = vmatprep.subr.mxu0 0.0
        %494 = vmatpush1.msra.mxu0 0.0
        %495 = vmatprep.subr.mxu0 0.0
        %496 = vmatpush1.msra.mxu0 0.0
        %497 = vmatprep.subr.mxu0 0.0
        %498 = vmatpush1.msra.mxu0 0.0
        %499 = vmatprep.subr.mxu0 0.0
        %500 = vmatpush1.msra.mxu0 0.0
        %501 = vmatprep.subr.mxu0 0.0
        %502 = vmatpush1.msra.mxu0 0.0
        %503 = vmatprep.subr.mxu0 0.0
        %504 = vmatpush1.msra.mxu0 0.0
        %505 = vmatprep.subr.mxu0 0.0
        %506 = vmatpush1.msra.mxu0 0.0
        %507 = vmatprep.subr.mxu0 0.0
        %508 = vmatpush1.msra.mxu0 0.0
        %509 = vmatprep.subr.mxu0 0.0
        %510 = vmatpush1.msra.mxu0 0.0
        %511 = vmatprep.mubr.f32.mxu0 0.0
        %512 = vmatmul.mubr.f32.gmra.mrb[0].mxu0 %v432
        %v513 = vpop.f32.mrb[0].mxu0
        %v514 = vadd.f32 0.0, %v513
        %v515 = vpop.f32.mrb[0].mxu0
        %v516 = vadd.f32 0.0, %v515
        %517 = vdwg.mxu0
        %518 = vmatprep.subr.mxu0 %v421
        %519 = vmatpush1.msra.mxu0 %v420
        %520 = vmatprep.subr.mxu0 %v425
        %521 = vmatpush1.msra.mxu0 %v424
        %522 = vmatprep.subr.mxu0 %v445
        %523 = vmatpush1.msra.mxu0 %v442
        %524 = vmatprep.subr.mxu0 0.0
        %525 = vmatpush1.msra.mxu0 0.0
        %526 = vmatprep.subr.mxu0 0.0
        %527 = vmatpush1.msra.mxu0 0.0
        %528 = vmatprep.subr.mxu0 0.0
        %529 = vmatpush1.msra.mxu0 0.0
        %530 = vmatprep.subr.mxu0 0.0
        %531 = vmatpush1.msra.mxu0 0.0
        %532 = vmatprep.subr.mxu0 0.0
        %533 = vmatpush1.msra.mxu0 0.0
        %534 = vmatprep.subr.mxu0 0.0
        %535 = vmatpush1.msra.mxu0 0.0
        %536 = vmatprep.subr.mxu0 0.0
        %537 = vmatpush1.msra.mxu0 0.0
        %538 = vmatprep.subr.mxu0 0.0
        %539 = vmatpush1.msra.mxu0 0.0
        %540 = vmatprep.subr.mxu0 0.0
        %541 = vmatpush1.msra.mxu0 0.0
        %542 = vmatprep.subr.mxu0 0.0
        %543 = vmatpush1.msra.mxu0 0.0
        %544 = vmatprep.subr.mxu0 0.0
        %545 = vmatpush1.msra.mxu0 0.0
        %546 = vmatprep.subr.mxu0 0.0
        %547 = vmatpush1.msra.mxu0 0.0
        %548 = vmatprep.subr.mxu0 0.0
        %549 = vmatpush1.msra.mxu0 0.0
        %550 = vmatprep.subr.mxu0 0.0
        %551 = vmatpush1.msra.mxu0 0.0
        %552 = vmatprep.subr.mxu0 0.0
        %553 = vmatpush1.msra.mxu0 0.0
        %554 = vmatprep.subr.mxu0 0.0
        %555 = vmatpush1.msra.mxu0 0.0
        %556 = vmatprep.subr.mxu0 0.0
        %557 = vmatpush1.msra.mxu0 0.0
        %558 = vmatprep.subr.mxu0 0.0
        %559 = vmatpush1.msra.mxu0 0.0
        %560 = vmatprep.subr.mxu0 0.0
        %561 = vmatpush1.msra.mxu0 0.0
        %562 = vmatprep.subr.mxu0 0.0
        %563 = vmatpush1.msra.mxu0 0.0
        %564 = vmatprep.subr.mxu0 0.0
        %565 = vmatpush1.msra.mxu0 0.0
        %566 = vmatprep.subr.mxu0 0.0
        %567 = vmatpush1.msra.mxu0 0.0
        %568 = vmatprep.subr.mxu0 0.0
        %569 = vmatpush1.msra.mxu0 0.0
        %570 = vmatprep.subr.mxu0 0.0
        %571 = vmatpush1.msra.mxu0 0.0
        %572 = vmatprep.subr.mxu0 0.0
        %573 = vmatpush1.msra.mxu0 0.0
        %574 = vmatprep.subr.mxu0 0.0
        %575 = vmatpush1.msra.mxu0 0.0
        %576 = vmatprep.subr.mxu0 0.0
        %577 = vmatpush1.msra.mxu0 0.0
        %578 = vmatprep.subr.mxu0 0.0
        %579 = vmatpush1.msra.mxu0 0.0
        %580 = vmatprep.subr.mxu0 0.0
        %581 = vmatpush1.msra.mxu0 0.0
        %582 = vmatprep.mubr.f32.mxu0 0.0
        %583 = vmatmul.mubr.f32.gmra.mrb[0].mxu0 %v432
        %v584 = vpop.f32.mrb[0].mxu0
        %v585 = vadd.f32 0.0, %v584
        %v586 = vpop.f32.mrb[0].mxu0
        %v587 = vadd.f32 0.0, %v586
        %588 = vdwg.mxu0
        %v589 = vld [vmem:[%s8] sm:$0xff]
        %v590 = vadd.f32 %v514, %v516
        %v591 = vadd.f32 %v590, %v585
        %v592 = vadd.f32 %v591, %v587
        %593 = vadd.xlane.f32.xlu0 %v592
        %v594 = vpop.xlane.xlu0 %593
        %v595 = vmul.f32 %v594, 0.0024813896
        %v596 = vmul.f32 %v514, %v514
        %v597 = vmul.f32 %v516, %v516
        %v598 = vmul.f32 %v585, %v585
        %v599 = vmul.f32 %v587, %v587
        %v600 = vadd.f32 %v596, %v597
        %v601 = vadd.f32 %v600, %v598
        %v602 = vadd.f32 %v601, %v599
        %603 = vadd.xlane.f32.xlu0 %v602
        %v604 = vpop.xlane.xlu0 %603
        %v605 = vmul.f32 %v604, 0.0024813896
        %v606 = vmul.f32 %v595, %v595
        %v607 = vsub.f32 %v605, %v606
        %v608 = vmax.f32 %v607, 0.0
        %v609 = vsub.f32 %v514, %v595
        %v610 = vsub.f32 %v516, %v595
        %v611 = vsub.f32 %v585, %v595
        %v612 = vsub.f32 %v587, %v595
        %v613 = vadd.f32 %v608, 1e-05
        %v614 = vrsqrt.pop %v613
        %v615 = vmul.f32 %v609, %v614
        %v616 = vmul.f32 %v610, %v614
        %v617 = vmul.f32 %v611, %v614
        %v618 = vmul.f32 %v612, %v614
        %620 = vset.pattern.permute.xlu0 0
        %621 = vperm.xlu0 %620, %v589
        %v622 = vpop.permute.xlu0 %621
        %v624 = vmul.f32 %v615, %v622
        %v625 = vmul.f32 %v616, %v622
        %v626 = vmul.f32 %v617, %v622
        %v627 = vmul.f32 %v618, %v622
        %628 = vset.pattern.permute.xlu0 1
        %629 = vperm.xlu0 %628, %v589
        %v630 = vpop.permute.xlu0 %629
        %v632 = vadd.f32 %v624, %v630
        %v633 = vadd.f32 %v625, %v630
        %v634 = vadd.f32 %v626, %v630
        %v635 = vadd.f32 %v627, %v630
        %vm636 = vcmp.ge.f32.partialorder %v632, 0.0
        %vm637 = vcmp.ge.f32.partialorder %v633, 0.0
        %vm638 = vcmp.ge.f32.partialorder %v634, 0.0
        %vm639 = vcmp.ge.f32.partialorder %v635, 0.0
        %640 = vset.pattern.permute.xlu0 2
        %641 = vperm.xlu0 %640, %v589
        %v642 = vpop.permute.xlu0 %641
        %v644 = vmul.f32 %v642, %v632
        %v645 = vmul.f32 %v642, %v633
        %v646 = vmul.f32 %v642, %v634
        %v647 = vmul.f32 %v642, %v635
        %v648 = vsel %vm636, %v632, %v644
        %v649 = vsel %vm637, %v633, %v645
        %v650 = vsel %vm638, %v634, %v646
        %v651 = vsel %vm639, %v635, %v647
        %v652 = vld [vmem:[#allocation8] sm:$0xff]
        %v653 = vld [vmem:[#allocation8 + $0x8] sm:$0xff]
        %v654 = vld [vmem:[#allocation8 + $0x10] sm:$0xff]
        %v655 = vld [vmem:[#allocation8 + $0x18] sm:$0xff]
        %v656 = vld [vmem:[#allocation8 + $0x20] sm:$0xff]
        %v657 = vld [vmem:[#allocation8 + $0x28] sm:$0xff]
        %v658 = vld [vmem:[#allocation8 + $0x30] sm:$0xff]
        %v659 = vld [vmem:[#allocation8 + $0x38] sm:$0xff]
        %v660 = vld [vmem:[#allocation8 + $0x40] sm:$0xff]
        %v661 = vld [vmem:[#allocation8 + $0x48] sm:$0xff]
        %v662 = vld [vmem:[#allocation8 + $0x50] sm:$0xff]
        %v663 = vld [vmem:[#allocation8 + $0x58] sm:$0xff]
        %v664 = vld [vmem:[#allocation8 + $0x60] sm:$0xff]
        %v665 = vld [vmem:[#allocation8 + $0x68] sm:$0xff]
        %v666 = vld [vmem:[#allocation8 + $0x70] sm:$0xff]
        %v667 = vld [vmem:[#allocation8 + $0x78] sm:$0xff]
        %v668 = vld [vmem:[#allocation8 + $0x80] sm:$0xff]
        %v669 = vld [vmem:[#allocation8 + $0x88] sm:$0xff]
        %v670 = vld [vmem:[#allocation8 + $0x90] sm:$0xff]
        %v671 = vld [vmem:[#allocation8 + $0x98] sm:$0xff]
        %v672 = vld [vmem:[#allocation8 + $0xa0] sm:$0xff]
        %v673 = vld [vmem:[#allocation8 + $0xa8] sm:$0xff]
        %v674 = vld [vmem:[#allocation8 + $0xb0] sm:$0xff]
        %v675 = vld [vmem:[#allocation8 + $0xb8] sm:$0xff]
        %v676 = vld [vmem:[#allocation8 + $0xc0] sm:$0xff]
        %v677 = vld [vmem:[#allocation8 + $0xc8] sm:$0xff]
        %v678 = vld [vmem:[#allocation8 + $0xd0] sm:$0xff]
        %v679 = vld [vmem:[#allocation8 + $0xd8] sm:$0xff]
        %v680 = vld [vmem:[#allocation8 + $0xe0] sm:$0xff]
        %v681 = vld [vmem:[#allocation8 + $0xe8] sm:$0xff]
        %v682 = vld [vmem:[#allocation8 + $0xf0] sm:$0xff]
        %v683 = vld [vmem:[#allocation8 + $0xf8] sm:$0xff]
        %v684 = vld [vmem:[#allocation8 + $0x100] sm:$0xff]
        %v685 = vld [vmem:[#allocation8 + $0x108] sm:$0xff]
        %v686 = vld [vmem:[#allocation8 + $0x110] sm:$0xff]
        %v687 = vld [vmem:[#allocation8 + $0x118] sm:$0xff]
        %v688 = vld [vmem:[#allocation8 + $0x120] sm:$0xff]
        %v689 = vld [vmem:[#allocation8 + $0x128] sm:$0xff]
        %v690 = vld [vmem:[#allocation8 + $0x130] sm:$0xff]
        %v691 = vld [vmem:[#allocation8 + $0x138] sm:$0xff]
        %v692 = vld [vmem:[#allocation8 + $0x140] sm:$0xff]
        %v693 = vld [vmem:[#allocation8 + $0x148] sm:$0xff]
        %v694 = vld [vmem:[#allocation8 + $0x150] sm:$0xff]
        %v695 = vld [vmem:[#allocation8 + $0x158] sm:$0xff]
        %v696 = vld [vmem:[#allocation8 + $0x160] sm:$0xff]
        %v697 = vld [vmem:[#allocation8 + $0x168] sm:$0xff]
        %v698 = vld [vmem:[#allocation8 + $0x170] sm:$0xff]
        %v699 = vld [vmem:[#allocation8 + $0x178] sm:$0xff]
        %v700 = vld [vmem:[#allocation8 + $0x180] sm:$0xff]
        %v701 = vld [vmem:[#allocation8 + $0x188] sm:$0xff]
        %v702 = vld [vmem:[#allocation8 + $0x190] sm:$0xff]
        %v703 = vld [vmem:[#allocation8 + $0x198] sm:$0xff]
        %v704 = vld [vmem:[#allocation8 + $0x1a0] sm:$0xff]
        %v705 = vld [vmem:[#allocation8 + $0x1a8] sm:$0xff]
        %v706 = vld [vmem:[#allocation8 + $0x1b0] sm:$0xff]
        %v707 = vld [vmem:[#allocation8 + $0x1b8] sm:$0xff]
        %v708 = vld [vmem:[#allocation8 + $0x1c0] sm:$0xff]
        %v709 = vld [vmem:[#allocation8 + $0x1c8] sm:$0xff]
        %v710 = vld [vmem:[#allocation8 + $0x1d0] sm:$0xff]
        %v711 = vld [vmem:[#allocation8 + $0x1d8] sm:$0xff]
        %v712 = vld [vmem:[#allocation8 + $0x1e0] sm:$0xff]
        %v713 = vld [vmem:[#allocation8 + $0x1e8] sm:$0xff]
        %v714 = vld [vmem:[#allocation8 + $0x1f0] sm:$0xff]
        %v715 = vld [vmem:[#allocation8 + $0x1f8] sm:$0xff]
        %v716 = vld [vmem:[#allocation8 + $0x200] sm:$0xff]
        %v717 = vld [vmem:[#allocation8 + $0x208] sm:$0xff]
        %v718 = vld [vmem:[#allocation8 + $0x210] sm:$0xff]
        %v719 = vld [vmem:[#allocation8 + $0x218] sm:$0xff]
        %v720 = vld [vmem:[#allocation8 + $0x220] sm:$0xff]
        %v721 = vld [vmem:[#allocation8 + $0x228] sm:$0xff]
        %v722 = vld [vmem:[#allocation8 + $0x230] sm:$0xff]
        %v723 = vld [vmem:[#allocation8 + $0x238] sm:$0xff]
        %v724 = vld [vmem:[#allocation8 + $0x240] sm:$0xff]
        %v725 = vld [vmem:[#allocation8 + $0x248] sm:$0xff]
        %v726 = vld [vmem:[#allocation8 + $0x250] sm:$0xff]
        %v727 = vld [vmem:[#allocation8 + $0x258] sm:$0xff]
        %v728 = vld [vmem:[#allocation8 + $0x260] sm:$0xff]
        %v729 = vld [vmem:[#allocation8 + $0x268] sm:$0xff]
        %v730 = vld [vmem:[#allocation8 + $0x270] sm:$0xff]
        %v731 = vld [vmem:[#allocation8 + $0x278] sm:$0xff]
        %v732 = vld [vmem:[#allocation8 + $0x280] sm:$0xff]
        %v733 = vld [vmem:[#allocation8 + $0x288] sm:$0xff]
        %v734 = vld [vmem:[#allocation8 + $0x290] sm:$0xff]
        %v735 = vld [vmem:[#allocation8 + $0x298] sm:$0xff]
        %v736 = vld [vmem:[#allocation8 + $0x2a0] sm:$0xff]
        %v737 = vld [vmem:[#allocation8 + $0x2a8] sm:$0xff]
        %v738 = vld [vmem:[#allocation8 + $0x2b0] sm:$0xff]
        %v739 = vld [vmem:[#allocation8 + $0x2b8] sm:$0xff]
        %v740 = vld [vmem:[#allocation8 + $0x2c0] sm:$0xff]
        %v741 = vld [vmem:[#allocation8 + $0x2c8] sm:$0xff]
        %v742 = vld [vmem:[#allocation8 + $0x2d0] sm:$0xff]
        %v743 = vld [vmem:[#allocation8 + $0x2d8] sm:$0xff]
        %v744 = vld [vmem:[#allocation8 + $0x2e0] sm:$0xff]
        %v745 = vld [vmem:[#allocation8 + $0x2e8] sm:$0xff]
        %v746 = vld [vmem:[#allocation8 + $0x2f0] sm:$0xff]
        %v747 = vld [vmem:[#allocation8 + $0x2f8] sm:$0xff]
        %v748 = vld [vmem:[#allocation8 + $0x300] sm:$0xff]
        %v749 = vld [vmem:[#allocation8 + $0x308] sm:$0xff]
        %v750 = vld [vmem:[#allocation8 + $0x310] sm:$0xff]
        %v751 = vld [vmem:[#allocation8 + $0x318] sm:$0xff]
        %v752 = vld [vmem:[#allocation8 + $0x320] sm:$0xff]
        %v753 = vld [vmem:[#allocation8 + $0x328] sm:$0xff]
        %v754 = vld [vmem:[#allocation8 + $0x330] sm:$0xff]
        %v755 = vld [vmem:[#allocation8 + $0x338] sm:$0xff]
        %v756 = vld [vmem:[#allocation8 + $0x340] sm:$0xff]
        %v757 = vld [vmem:[#allocation8 + $0x348] sm:$0xff]
        %v758 = vld [vmem:[#allocation8 + $0x350] sm:$0xff]
        %v759 = vld [vmem:[#allocation8 + $0x358] sm:$0xff]
        %v760 = vld [vmem:[#allocation8 + $0x360] sm:$0xff]
        %v761 = vld [vmem:[#allocation8 + $0x368] sm:$0xff]
        %v762 = vld [vmem:[#allocation8 + $0x370] sm:$0xff]
        %v763 = vld [vmem:[#allocation8 + $0x378] sm:$0xff]
        %v764 = vld [vmem:[#allocation8 + $0x380] sm:$0xff]
        %v765 = vld [vmem:[#allocation8 + $0x388] sm:$0xff]
        %v766 = vld [vmem:[#allocation8 + $0x390] sm:$0xff]
        %v767 = vld [vmem:[#allocation8 + $0x398] sm:$0xff]
        %v768 = vld [vmem:[#allocation8 + $0x3a0] sm:$0xff]
        %v769 = vld [vmem:[#allocation8 + $0x3a8] sm:$0xff]
        %v770 = vld [vmem:[#allocation8 + $0x3b0] sm:$0xff]
        %v771 = vld [vmem:[#allocation8 + $0x3b8] sm:$0xff]
        %v772 = vld [vmem:[#allocation8 + $0x3c0] sm:$0xff]
        %v773 = vld [vmem:[#allocation8 + $0x3c8] sm:$0xff]
        %v774 = vld [vmem:[#allocation8 + $0x3d0] sm:$0xff]
        %v775 = vld [vmem:[#allocation8 + $0x3d8] sm:$0xff]
        %v776 = vld [vmem:[#allocation8 + $0x3e0] sm:$0xff]
        %v777 = vld [vmem:[#allocation8 + $0x3e8] sm:$0xff]
        %v778 = vld [vmem:[#allocation8 + $0x3f0] sm:$0xff]
        %v779 = vld [vmem:[#allocation8 + $0x3f8] sm:$0xff]
        %780 = vmatprep.subr.mxu0 %v653
        %781 = vmatpush1.msra.mxu0 %v652
        %782 = vmatprep.subr.mxu0 %v655
        %783 = vmatpush1.msra.mxu0 %v654
        %784 = vmatprep.subr.mxu0 %v657
        %785 = vmatpush1.msra.mxu0 %v656
        %786 = vmatprep.subr.mxu0 %v659
        %787 = vmatpush1.msra.mxu0 %v658
        %788 = vmatprep.subr.mxu0 %v661
        %789 = vmatpush1.msra.mxu0 %v660
        %790 = vmatprep.subr.mxu0 %v663
        %791 = vmatpush1.msra.mxu0 %v662
        %792 = vmatprep.subr.mxu0 %v665
        %793 = vmatpush1.msra.mxu0 %v664
        %794 = vmatprep.subr.mxu0 %v667
        %795 = vmatpush1.msra.mxu0 %v666
        %796 = vmatprep.subr.mxu0 %v669
        %797 = vmatpush1.msra.mxu0 %v668
        %798 = vmatprep.subr.mxu0 %v671
        %799 = vmatpush1.msra.mxu0 %v670
        %800 = vmatprep.subr.mxu0 %v673
        %801 = vmatpush1.msra.mxu0 %v672
        %802 = vmatprep.subr.mxu0 %v675
        %803 = vmatpush1.msra.mxu0 %v674
        %804 = vmatprep.subr.mxu0 %v677
        %805 = vmatpush1.msra.mxu0 %v676
        %806 = vmatprep.subr.mxu0 %v679
        %807 = vmatpush1.msra.mxu0 %v678
        %808 = vmatprep.subr.mxu0 %v681
        %809 = vmatpush1.msra.mxu0 %v680
        %810 = vmatprep.subr.mxu0 %v683
        %811 = vmatpush1.msra.mxu0 %v682
        %812 = vmatprep.subr.mxu0 %v685
        %813 = vmatpush1.msra.mxu0 %v684
        %814 = vmatprep.subr.mxu0 %v687
        %815 = vmatpush1.msra.mxu0 %v686
        %816 = vmatprep.subr.mxu0 %v689
        %817 = vmatpush1.msra.mxu0 %v688
        %818 = vmatprep.subr.mxu0 %v691
        %819 = vmatpush1.msra.mxu0 %v690
        %820 = vmatprep.subr.mxu0 %v693
        %821 = vmatpush1.msra.mxu0 %v692
        %822 = vmatprep.subr.mxu0 %v695
        %823 = vmatpush1.msra.mxu0 %v694
        %824 = vmatprep.subr.mxu0 %v697
        %825 = vmatpush1.msra.mxu0 %v696
        %826 = vmatprep.subr.mxu0 %v699
        %827 = vmatpush1.msra.mxu0 %v698
        %828 = vmatprep.subr.mxu0 %v701
        %829 = vmatpush1.msra.mxu0 %v700
        %830 = vmatprep.subr.mxu0 %v703
        %831 = vmatpush1.msra.mxu0 %v702
        %832 = vmatprep.subr.mxu0 %v705
        %833 = vmatpush1.msra.mxu0 %v704
        %834 = vmatprep.subr.mxu0 %v707
        %835 = vmatpush1.msra.mxu0 %v706
        %836 = vmatprep.subr.mxu0 %v709
        %837 = vmatpush1.msra.mxu0 %v708
        %838 = vmatprep.subr.mxu0 %v711
        %839 = vmatpush1.msra.mxu0 %v710
        %840 = vmatprep.subr.mxu0 %v713
        %841 = vmatpush1.msra.mxu0 %v712
        %842 = vmatprep.subr.mxu0 %v715
        %843 = vmatpush1.msra.mxu0 %v714
        %844 = vmatprep.mubr.f32.mxu0 %v649
        %845 = vmatmul.mubr.f32.gmra.mrb[0].mxu0 %v648
        %v846 = vpop.f32.mrb[0].mxu0
        %v847 = vadd.f32 0.0, %v846
        %v848 = vpop.f32.mrb[0].mxu0
        %v849 = vadd.f32 0.0, %v848
        %850 = vdwg.mxu0
        %851 = vmatprep.subr.mxu0 %v717
        %852 = vmatpush1.msra.mxu0 %v716
        %853 = vmatprep.subr.mxu0 %v719
        %854 = vmatpush1.msra.mxu0 %v718
        %855 = vmatprep.subr.mxu0 %v721
        %856 = vmatpush1.msra.mxu0 %v720
        %857 = vmatprep.subr.mxu0 %v723
        %858 = vmatpush1.msra.mxu0 %v722
        %859 = vmatprep.subr.mxu0 %v725
        %860 = vmatpush1.msra.mxu0 %v724
        %861 = vmatprep.subr.mxu0 %v727
        %862 = vmatpush1.msra.mxu0 %v726
        %863 = vmatprep.subr.mxu0 %v729
        %864 = vmatpush1.msra.mxu0 %v728
        %865 = vmatprep.subr.mxu0 %v731
        %866 = vmatpush1.msra.mxu0 %v730
        %867 = vmatprep.subr.mxu0 %v733
        %868 = vmatpush1.msra.mxu0 %v732
        %869 = vmatprep.subr.mxu0 %v735
        %870 = vmatpush1.msra.mxu0 %v734
        %871 = vmatprep.subr.mxu0 %v737
        %872 = vmatpush1.msra.mxu0 %v736
        %873 = vmatprep.subr.mxu0 %v739
        %874 = vmatpush1.msra.mxu0 %v738
        %875 = vmatprep.subr.mxu0 %v741
        %876 = vmatpush1.msra.mxu0 %v740
        %877 = vmatprep.subr.mxu0 %v743
        %878 = vmatpush1.msra.mxu0 %v742
        %879 = vmatprep.subr.mxu0 %v745
        %880 = vmatpush1.msra.mxu0 %v744
        %881 = vmatprep.subr.mxu0 %v747
        %882 = vmatpush1.msra.mxu0 %v746
        %883 = vmatprep.subr.mxu0 %v749
        %884 = vmatpush1.msra.mxu0 %v748
        %885 = vmatprep.subr.mxu0 %v751
        %886 = vmatpush1.msra.mxu0 %v750
        %887 = vmatprep.subr.mxu0 %v753
        %888 = vmatpush1.msra.mxu0 %v752
        %889 = vmatprep.subr.mxu0 %v755
        %890 = vmatpush1.msra.mxu0 %v754
        %891 = vmatprep.subr.mxu0 %v757
        %892 = vmatpush1.msra.mxu0 %v756
        %893 = vmatprep.subr.mxu0 %v759
        %894 = vmatpush1.msra.mxu0 %v758
        %895 = vmatprep.subr.mxu0 %v761
        %896 = vmatpush1.msra.mxu0 %v760
        %897 = vmatprep.subr.mxu0 %v763
        %898 = vmatpush1.msra.mxu0 %v762
        %899 = vmatprep.subr.mxu0 %v765
        %900 = vmatpush1.msra.mxu0 %v764
        %901 = vmatprep.subr.mxu0 %v767
        %902 = vmatpush1.msra.mxu0 %v766
        %903 = vmatprep.subr.mxu0 %v769
        %904 = vmatpush1.msra.mxu0 %v768
        %905 = vmatprep.subr.mxu0 %v771
        %906 = vmatpush1.msra.mxu0 %v770
        %907 = vmatprep.subr.mxu0 %v773
        %908 = vmatpush1.msra.mxu0 %v772
        %909 = vmatprep.subr.mxu0 %v775
        %910 = vmatpush1.msra.mxu0 %v774
        %911 = vmatprep.subr.mxu0 %v777
        %912 = vmatpush1.msra.mxu0 %v776
        %913 = vmatprep.subr.mxu0 %v779
        %914 = vmatpush1.msra.mxu0 %v778
        %915 = vmatprep.mubr.f32.mxu0 %v651
        %916 = vmatmul.mubr.f32.gmra.mrb[0].mxu0 %v650
        %v917 = vpop.f32.mrb[0].mxu0
        %v918 = vadd.f32 %v847, %v917
        %v919 = vpop.f32.mrb[0].mxu0
        %v920 = vadd.f32 %v849, %v919
        %921 = vdwg.mxu0
        %v922 = vld [vmem:[%s2] sm:$0xff]
        %v923 = vld [vmem:[%s2 + $0x8] sm:$0xff]
        %s924 = scalar_lea.vmem [#allocation8], 1024
        %v925 = vld [vmem:[%s924] sm:$0xff]
        %v926 = vld [vmem:[%s924 + $0x8] sm:$0xff]
        %v927 = vld [vmem:[%s924 + $0x10] sm:$0xff]
        %v928 = vld [vmem:[%s924 + $0x18] sm:$0xff]
        %v929 = vld [vmem:[%s924 + $0x20] sm:$0xff]
        %v930 = vld [vmem:[%s924 + $0x28] sm:$0xff]
        %v931 = vld [vmem:[%s924 + $0x30] sm:$0xff]
        %v932 = vld [vmem:[%s924 + $0x38] sm:$0xff]
        %v933 = vld [vmem:[%s924 + $0x40] sm:$0xff]
        %v934 = vld [vmem:[%s924 + $0x48] sm:$0xff]
        %v935 = vld [vmem:[%s924 + $0x50] sm:$0xff]
        %v936 = vld [vmem:[%s924 + $0x58] sm:$0xff]
        %v937 = vld [vmem:[%s924 + $0x60] sm:$0xff]
        %v938 = vld [vmem:[%s924 + $0x68] sm:$0xff]
        %v939 = vld [vmem:[%s924 + $0x70] sm:$0xff]
        %v940 = vld [vmem:[%s924 + $0x78] sm:$0xff]
        %v941 = vld [vmem:[%s924 + $0x80] sm:$0xff]
        %v942 = vld [vmem:[%s924 + $0x88] sm:$0xff]
        %v943 = vld [vmem:[%s924 + $0x90] sm:$0xff]
        %v944 = vld [vmem:[%s924 + $0x98] sm:$0xff]
        %v945 = vld [vmem:[%s924 + $0xa0] sm:$0xff]
        %v946 = vld [vmem:[%s924 + $0xa8] sm:$0xff]
        %v947 = vld [vmem:[%s924 + $0xb0] sm:$0xff]
        %v948 = vld [vmem:[%s924 + $0xb8] sm:$0xff]
        %v949 = vld [vmem:[%s924 + $0xc0] sm:$0xff]
        %v950 = vld [vmem:[%s924 + $0xc8] sm:$0xff]
        %v951 = vld [vmem:[%s924 + $0xd0] sm:$0xff]
        %v952 = vld [vmem:[%s924 + $0xd8] sm:$0xff]
        %v953 = vld [vmem:[%s924 + $0xe0] sm:$0xff]
        %v954 = vld [vmem:[%s924 + $0xe8] sm:$0xff]
        %v955 = vld [vmem:[%s924 + $0xf0] sm:$0xff]
        %v956 = vld [vmem:[%s924 + $0xf8] sm:$0xff]
        %v957 = vld [vmem:[%s924 + $0x100] sm:$0xff]
        %v958 = vld [vmem:[%s924 + $0x108] sm:$0xff]
        %v959 = vld [vmem:[%s924 + $0x110] sm:$0xff]
        %v960 = vld [vmem:[%s924 + $0x118] sm:$0xff]
        %v961 = vld [vmem:[%s924 + $0x120] sm:$0xff]
        %v962 = vld [vmem:[%s924 + $0x128] sm:$0xff]
        %v963 = vld [vmem:[%s924 + $0x130] sm:$0xff]
        %v964 = vld [vmem:[%s924 + $0x138] sm:$0xff]
        %v965 = vld [vmem:[%s924 + $0x140] sm:$0xff]
        %v966 = vld [vmem:[%s924 + $0x148] sm:$0xff]
        %v967 = vld [vmem:[%s924 + $0x150] sm:$0xff]
        %v968 = vld [vmem:[%s924 + $0x158] sm:$0xff]
        %v969 = vld [vmem:[%s924 + $0x160] sm:$0xff]
        %v970 = vld [vmem:[%s924 + $0x168] sm:$0xff]
        %v971 = vld [vmem:[%s924 + $0x170] sm:$0xff]
        %v972 = vld [vmem:[%s924 + $0x178] sm:$0xff]
        %v973 = vld [vmem:[%s924 + $0x180] sm:$0xff]
        %v974 = vld [vmem:[%s924 + $0x188] sm:$0xff]
        %v975 = vld [vmem:[%s924 + $0x190] sm:$0xff]
        %v976 = vld [vmem:[%s924 + $0x198] sm:$0xff]
        %v977 = vld [vmem:[%s924 + $0x1a0] sm:$0xff]
        %v978 = vld [vmem:[%s924 + $0x1a8] sm:$0xff]
        %v979 = vld [vmem:[%s924 + $0x1b0] sm:$0xff]
        %v980 = vld [vmem:[%s924 + $0x1b8] sm:$0xff]
        %v981 = vld [vmem:[%s924 + $0x1c0] sm:$0xff]
        %v982 = vld [vmem:[%s924 + $0x1c8] sm:$0xff]
        %v983 = vld [vmem:[%s924 + $0x1d0] sm:$0xff]
        %v984 = vld [vmem:[%s924 + $0x1d8] sm:$0xff]
        %v985 = vld [vmem:[%s924 + $0x1e0] sm:$0xff]
        %v986 = vld [vmem:[%s924 + $0x1e8] sm:$0xff]
        %v987 = vld [vmem:[%s924 + $0x1f0] sm:$0xff]
        %v988 = vld [vmem:[%s924 + $0x1f8] sm:$0xff]
        %v989 = vld [vmem:[%s924 + $0x200] sm:$0xff]
        %v990 = vld [vmem:[%s924 + $0x208] sm:$0xff]
        %v991 = vld [vmem:[%s924 + $0x210] sm:$0xff]
        %v992 = vld [vmem:[%s924 + $0x218] sm:$0xff]
        %v993 = vld [vmem:[%s924 + $0x220] sm:$0xff]
        %v994 = vld [vmem:[%s924 + $0x228] sm:$0xff]
        %v995 = vld [vmem:[%s924 + $0x230] sm:$0xff]
        %v996 = vld [vmem:[%s924 + $0x238] sm:$0xff]
        %v997 = vld [vmem:[%s924 + $0x240] sm:$0xff]
        %v998 = vld [vmem:[%s924 + $0x248] sm:$0xff]
        %v999 = vld [vmem:[%s924 + $0x250] sm:$0xff]
        %v1000 = vld [vmem:[%s924 + $0x258] sm:$0xff]
        %v1001 = vld [vmem:[%s924 + $0x260] sm:$0xff]
        %v1002 = vld [vmem:[%s924 + $0x268] sm:$0xff]
        %v1003 = vld [vmem:[%s924 + $0x270] sm:$0xff]
        %v1004 = vld [vmem:[%s924 + $0x278] sm:$0xff]
        %v1005 = vld [vmem:[%s924 + $0x280] sm:$0xff]
        %v1006 = vld [vmem:[%s924 + $0x288] sm:$0xff]
        %v1007 = vld [vmem:[%s924 + $0x290] sm:$0xff]
        %v1008 = vld [vmem:[%s924 + $0x298] sm:$0xff]
        %v1009 = vld [vmem:[%s924 + $0x2a0] sm:$0xff]
        %v1010 = vld [vmem:[%s924 + $0x2a8] sm:$0xff]
        %v1011 = vld [vmem:[%s924 + $0x2b0] sm:$0xff]
        %v1012 = vld [vmem:[%s924 + $0x2b8] sm:$0xff]
        %v1013 = vld [vmem:[%s924 + $0x2c0] sm:$0xff]
        %v1014 = vld [vmem:[%s924 + $0x2c8] sm:$0xff]
        %v1015 = vld [vmem:[%s924 + $0x2d0] sm:$0xff]
        %v1016 = vld [vmem:[%s924 + $0x2d8] sm:$0xff]
        %v1017 = vld [vmem:[%s924 + $0x2e0] sm:$0xff]
        %v1018 = vld [vmem:[%s924 + $0x2e8] sm:$0xff]
        %v1019 = vld [vmem:[%s924 + $0x2f0] sm:$0xff]
        %v1020 = vld [vmem:[%s924 + $0x2f8] sm:$0xff]
        %v1021 = vld [vmem:[%s924 + $0x300] sm:$0xff]
        %v1022 = vld [vmem:[%s924 + $0x308] sm:$0xff]
        %v1023 = vld [vmem:[%s924 + $0x310] sm:$0xff]
        %v1024 = vld [vmem:[%s924 + $0x318] sm:$0xff]
        %v1025 = vld [vmem:[%s924 + $0x320] sm:$0xff]
        %v1026 = vld [vmem:[%s924 + $0x328] sm:$0xff]
        %v1027 = vld [vmem:[%s924 + $0x330] sm:$0xff]
        %v1028 = vld [vmem:[%s924 + $0x338] sm:$0xff]
        %v1029 = vld [vmem:[%s924 + $0x340] sm:$0xff]
        %v1030 = vld [vmem:[%s924 + $0x348] sm:$0xff]
        %v1031 = vld [vmem:[%s924 + $0x350] sm:$0xff]
        %v1032 = vld [vmem:[%s924 + $0x358] sm:$0xff]
        %v1033 = vld [vmem:[%s924 + $0x360] sm:$0xff]
        %v1034 = vld [vmem:[%s924 + $0x368] sm:$0xff]
        %v1035 = vld [vmem:[%s924 + $0x370] sm:$0xff]
        %v1036 = vld [vmem:[%s924 + $0x378] sm:$0xff]
        %v1037 = vld [vmem:[%s924 + $0x380] sm:$0xff]
        %v1038 = vld [vmem:[%s924 + $0x388] sm:$0xff]
        %v1039 = vld [vmem:[%s924 + $0x390] sm:$0xff]
        %v1040 = vld [vmem:[%s924 + $0x398] sm:$0xff]
        %v1041 = vld [vmem:[%s924 + $0x3a0] sm:$0xff]
        %v1042 = vld [vmem:[%s924 + $0x3a8] sm:$0xff]
        %v1043 = vld [vmem:[%s924 + $0x3b0] sm:$0xff]
        %v1044 = vld [vmem:[%s924 + $0x3b8] sm:$0xff]
        %v1045 = vld [vmem:[%s924 + $0x3c0] sm:$0xff]
        %v1046 = vld [vmem:[%s924 + $0x3c8] sm:$0xff]
        %v1047 = vld [vmem:[%s924 + $0x3d0] sm:$0xff]
        %v1048 = vld [vmem:[%s924 + $0x3d8] sm:$0xff]
        %v1049 = vld [vmem:[%s924 + $0x3e0] sm:$0xff]
        %v1050 = vld [vmem:[%s924 + $0x3e8] sm:$0xff]
        %v1051 = vld [vmem:[%s924 + $0x3f0] sm:$0xff]
        %v1052 = vld [vmem:[%s924 + $0x3f8] sm:$0xff]
        %1053 = vmatprep.subr.mxu0 %v926
        %1054 = vmatpush1.msra.mxu0 %v925
        %1055 = vmatprep.subr.mxu0 %v928
        %1056 = vmatpush1.msra.mxu0 %v927
        %1057 = vmatprep.subr.mxu0 %v930
        %1058 = vmatpush1.msra.mxu0 %v929
        %1059 = vmatprep.subr.mxu0 %v932
        %1060 = vmatpush1.msra.mxu0 %v931
        %1061 = vmatprep.subr.mxu0 %v934
        %1062 = vmatpush1.msra.mxu0 %v933
        %1063 = vmatprep.subr.mxu0 %v936
        %1064 = vmatpush1.msra.mxu0 %v935
        %1065 = vmatprep.subr.mxu0 %v938
        %1066 = vmatpush1.msra.mxu0 %v937
        %1067 = vmatprep.subr.mxu0 %v940
        %1068 = vmatpush1.msra.mxu0 %v939
        %1069 = vmatprep.subr.mxu0 %v942
        %1070 = vmatpush1.msra.mxu0 %v941
        %1071 = vmatprep.subr.mxu0 %v944
        %1072 = vmatpush1.msra.mxu0 %v943
        %1073 = vmatprep.subr.mxu0 %v946
        %1074 = vmatpush1.msra.mxu0 %v945
        %1075 = vmatprep.subr.mxu0 %v948
        %1076 = vmatpush1.msra.mxu0 %v947
        %1077 = vmatprep.subr.mxu0 %v950
        %1078 = vmatpush1.msra.mxu0 %v949
        %1079 = vmatprep.subr.mxu0 %v952
        %1080 = vmatpush1.msra.mxu0 %v951
        %1081 = vmatprep.subr.mxu0 %v954
        %1082 = vmatpush1.msra.mxu0 %v953
        %1083 = vmatprep.subr.mxu0 %v956
        %1084 = vmatpush1.msra.mxu0 %v955
        %1085 = vmatprep.subr.mxu0 %v958
        %1086 = vmatpush1.msra.mxu0 %v957
        %1087 = vmatprep.subr.mxu0 %v960
        %1088 = vmatpush1.msra.mxu0 %v959
        %1089 = vmatprep.subr.mxu0 %v962
        %1090 = vmatpush1.msra.mxu0 %v961
        %1091 = vmatprep.subr.mxu0 %v964
        %1092 = vmatpush1.msra.mxu0 %v963
        %1093 = vmatprep.subr.mxu0 %v966
        %1094 = vmatpush1.msra.mxu0 %v965
        %1095 = vmatprep.subr.mxu0 %v968
        %1096 = vmatpush1.msra.mxu0 %v967
        %1097 = vmatprep.subr.mxu0 %v970
        %1098 = vmatpush1.msra.mxu0 %v969
        %1099 = vmatprep.subr.mxu0 %v972
        %1100 = vmatpush1.msra.mxu0 %v971
        %1101 = vmatprep.subr.mxu0 %v974
        %1102 = vmatpush1.msra.mxu0 %v973
        %1103 = vmatprep.subr.mxu0 %v976
        %1104 = vmatpush1.msra.mxu0 %v975
        %1105 = vmatprep.subr.mxu0 %v978
        %1106 = vmatpush1.msra.mxu0 %v977
        %1107 = vmatprep.subr.mxu0 %v980
        %1108 = vmatpush1.msra.mxu0 %v979
        %1109 = vmatprep.subr.mxu0 %v982
        %1110 = vmatpush1.msra.mxu0 %v981
        %1111 = vmatprep.subr.mxu0 %v984
        %1112 = vmatpush1.msra.mxu0 %v983
        %1113 = vmatprep.subr.mxu0 %v986
        %1114 = vmatpush1.msra.mxu0 %v985
        %1115 = vmatprep.subr.mxu0 %v988
        %1116 = vmatpush1.msra.mxu0 %v987
        %1117 = vmatprep.mubr.f32.mxu0 %v649
        %1118 = vmatmul.mubr.f32.gmra.mrb[0].mxu0 %v648
        %v1119 = vpop.f32.mrb[0].mxu0
        %v1120 = vadd.f32 0.0, %v1119
        %v1121 = vpop.f32.mrb[0].mxu0
        %v1122 = vadd.f32 0.0, %v1121
        %1123 = vdwg.mxu0
        %1124 = vmatprep.subr.mxu0 %v990
        %1125 = vmatpush1.msra.mxu0 %v989
        %1126 = vmatprep.subr.mxu0 %v992
        %1127 = vmatpush1.msra.mxu0 %v991
        %1128 = vmatprep.subr.mxu0 %v994
        %1129 = vmatpush1.msra.mxu0 %v993
        %1130 = vmatprep.subr.mxu0 %v996
        %1131 = vmatpush1.msra.mxu0 %v995
        %1132 = vmatprep.subr.mxu0 %v998
        %1133 = vmatpush1.msra.mxu0 %v997
        %1134 = vmatprep.subr.mxu0 %v1000
        %1135 = vmatpush1.msra.mxu0 %v999
        %1136 = vmatprep.subr.mxu0 %v1002
        %1137 = vmatpush1.msra.mxu0 %v1001
        %1138 = vmatprep.subr.mxu0 %v1004
        %1139 = vmatpush1.msra.mxu0 %v1003
        %1140 = vmatprep.subr.mxu0 %v1006
        %1141 = vmatpush1.msra.mxu0 %v1005
        %1142 = vmatprep.subr.mxu0 %v1008
        %1143 = vmatpush1.msra.mxu0 %v1007
        %1144 = vmatprep.subr.mxu0 %v1010
        %1145 = vmatpush1.msra.mxu0 %v1009
        %1146 = vmatprep.subr.mxu0 %v1012
        %1147 = vmatpush1.msra.mxu0 %v1011
        %1148 = vmatprep.subr.mxu0 %v1014
        %1149 = vmatpush1.msra.mxu0 %v1013
        %1150 = vmatprep.subr.mxu0 %v1016
        %1151 = vmatpush1.msra.mxu0 %v1015
        %1152 = vmatprep.subr.mxu0 %v1018
        %1153 = vmatpush1.msra.mxu0 %v1017
        %1154 = vmatprep.subr.mxu0 %v1020
        %1155 = vmatpush1.msra.mxu0 %v1019
        %1156 = vmatprep.subr.mxu0 %v1022
        %1157 = vmatpush1.msra.mxu0 %v1021
        %1158 = vmatprep.subr.mxu0 %v1024
        %1159 = vmatpush1.msra.mxu0 %v1023
        %1160 = vmatprep.subr.mxu0 %v1026
        %1161 = vmatpush1.msra.mxu0 %v1025
        %1162 = vmatprep.subr.mxu0 %v1028
        %1163 = vmatpush1.msra.mxu0 %v1027
        %1164 = vmatprep.subr.mxu0 %v1030
        %1165 = vmatpush1.msra.mxu0 %v1029
        %1166 = vmatprep.subr.mxu0 %v1032
        %1167 = vmatpush1.msra.mxu0 %v1031
        %1168 = vmatprep.subr.mxu0 %v1034
        %1169 = vmatpush1.msra.mxu0 %v1033
        %1170 = vmatprep.subr.mxu0 %v1036
        %1171 = vmatpush1.msra.mxu0 %v1035
        %1172 = vmatprep.subr.mxu0 %v1038
        %1173 = vmatpush1.msra.mxu0 %v1037
        %1174 = vmatprep.subr.mxu0 %v1040
        %1175 = vmatpush1.msra.mxu0 %v1039
        %1176 = vmatprep.subr.mxu0 %v1042
        %1177 = vmatpush1.msra.mxu0 %v1041
        %1178 = vmatprep.subr.mxu0 %v1044
        %1179 = vmatpush1.msra.mxu0 %v1043
        %1180 = vmatprep.subr.mxu0 %v1046
        %1181 = vmatpush1.msra.mxu0 %v1045
        %1182 = vmatprep.subr.mxu0 %v1048
        %1183 = vmatpush1.msra.mxu0 %v1047
        %1184 = vmatprep.subr.mxu0 %v1050
        %1185 = vmatpush1.msra.mxu0 %v1049
        %1186 = vmatprep.subr.mxu0 %v1052
        %1187 = vmatpush1.msra.mxu0 %v1051
        %1188 = vmatprep.mubr.f32.mxu0 %v651
        %1189 = vmatmul.mubr.f32.gmra.mrb[0].mxu0 %v650
        %v1190 = vpop.f32.mrb[0].mxu0
        %v1191 = vadd.f32 %v1120, %v1190
        %v1192 = vpop.f32.mrb[0].mxu0
        %v1193 = vadd.f32 %v1122, %v1192
        %1194 = vdwg.mxu0
        %s1195 = scalar_lea.vmem %s2, 16
        %v1196 = vld [vmem:[%s1195] sm:$0xff]
        %v1197 = vld [vmem:[%s1195 + $0x8] sm:$0xff]
        %vm1198 = vcmask 64512
        %v1200 = vsel %vm1198, %v1196, 0
        %v1203 = vsel %vm1198, %v1197, 0
        %1205 = vmatprep.subr.mxu0 %v1193
        %1206 = vmatpush1.msra.mxu0 %v1191
        %1207 = vmatprep.subr.mxu0 0.0
        %1208 = vmatpush1.msra.mxu0 0.0
        %1209 = vmatprep.subr.mxu0 0.0
        %1210 = vmatpush1.msra.mxu0 0.0
        %1211 = vmatprep.subr.mxu0 0.0
        %1212 = vmatpush1.msra.mxu0 0.0
        %1213 = vmatprep.subr.mxu0 0.0
        %1214 = vmatpush1.msra.mxu0 0.0
        %1215 = vmatprep.subr.mxu0 0.0
        %1216 = vmatpush1.msra.mxu0 0.0
        %1217 = vmatprep.subr.mxu0 0.0
        %1218 = vmatpush1.msra.mxu0 0.0
        %1219 = vmatprep.subr.mxu0 0.0
        %1220 = vmatpush1.msra.mxu0 0.0
        %1221 = vmatprep.subr.mxu0 0.0
        %1222 = vmatpush1.msra.mxu0 0.0
        %1223 = vmatprep.subr.mxu0 0.0
        %1224 = vmatpush1.msra.mxu0 0.0
        %1225 = vmatprep.subr.mxu0 0.0
        %1226 = vmatpush1.msra.mxu0 0.0
        %1227 = vmatprep.subr.mxu0 0.0
        %1228 = vmatpush1.msra.mxu0 0.0
        %1229 = vmatprep.subr.mxu0 0.0
        %1230 = vmatpush1.msra.mxu0 0.0
        %1231 = vmatprep.subr.mxu0 0.0
        %1232 = vmatpush1.msra.mxu0 0.0
        %1233 = vmatprep.subr.mxu0 0.0
        %1234 = vmatpush1.msra.mxu0 0.0
        %1235 = vmatprep.subr.mxu0 0.0
        %1236 = vmatpush1.msra.mxu0 0.0
        %1237 = vmatprep.subr.mxu0 0.0
        %1238 = vmatpush1.msra.mxu0 0.0
        %1239 = vmatprep.subr.mxu0 0.0
        %1240 = vmatpush1.msra.mxu0 0.0
        %1241 = vmatprep.subr.mxu0 0.0
        %1242 = vmatpush1.msra.mxu0 0.0
        %1243 = vmatprep.subr.mxu0 0.0
        %1244 = vmatpush1.msra.mxu0 0.0
        %1245 = vmatprep.subr.mxu0 0.0
        %1246 = vmatpush1.msra.mxu0 0.0
        %1247 = vmatprep.subr.mxu0 0.0
        %1248 = vmatpush1.msra.mxu0 0.0
        %1249 = vmatprep.subr.mxu0 0.0
        %1250 = vmatpush1.msra.mxu0 0.0
        %1251 = vmatprep.subr.mxu0 0.0
        %1252 = vmatpush1.msra.mxu0 0.0
        %1253 = vmatprep.subr.mxu0 0.0
        %1254 = vmatpush1.msra.mxu0 0.0
        %1255 = vmatprep.subr.mxu0 0.0
        %1256 = vmatpush1.msra.mxu0 0.0
        %1257 = vmatprep.subr.mxu0 0.0
        %1258 = vmatpush1.msra.mxu0 0.0
        %1259 = vmatprep.subr.mxu0 0.0
        %1260 = vmatpush1.msra.mxu0 0.0
        %1261 = vmatprep.subr.mxu0 0.0
        %1262 = vmatpush1.msra.mxu0 0.0
        %1263 = vmatprep.subr.mxu0 0.0
        %1264 = vmatpush1.msra.mxu0 0.0
        %1265 = vmatprep.subr.mxu0 0.0
        %1266 = vmatpush1.msra.mxu0 0.0
        %1267 = vmatprep.subr.mxu0 0.0
        %1268 = vmatpush1.msra.mxu0 0.0
        %1269 = vmatprep.mubr.f32.mxu0 0.0
        %1270 = vmatmul.mubr.f32.gmra.mrb[0].mxu0 %v1200
        %v1271 = vpop.f32.mrb[0].mxu0
        %v1272 = vadd.f32 0.0, %v1271
        %v1273 = vpop.f32.mrb[0].mxu0
        %v1274 = vadd.f32 0.0, %v1273
        %1275 = vmatprep.mubr.f32.mxu0 0.0
        %1276 = vmatmul.mubr.f32.gmra.mrb[0].mxu0 %v1203
        %v1277 = vpop.f32.mrb[0].mxu0
        %v1278 = vadd.f32 0.0, %v1277
        %v1279 = vpop.f32.mrb[0].mxu0
        %v1280 = vadd.f32 0.0, %v1279
        %1281 = vdwg.mxu0
        %v1283 = vsel %vm1198, %v922, 0
        %v1286 = vsel %vm1198, %v923, 0
        %1288 = vmatprep.subr.mxu0 %v920
        %1289 = vmatpush1.msra.mxu0 %v918
        %1290 = vmatprep.subr.mxu0 0.0
        %1291 = vmatpush1.msra.mxu0 0.0
        %1292 = vmatprep.subr.mxu0 0.0
        %1293 = vmatpush1.msra.mxu0 0.0
        %1294 = vmatprep.subr.mxu0 0.0
        %1295 = vmatpush1.msra.mxu0 0.0
        %1296 = vmatprep.subr.mxu0 0.0
        %1297 = vmatpush1.msra.mxu0 0.0
        %1298 = vmatprep.subr.mxu0 0.0
        %1299 = vmatpush1.msra.mxu0 0.0
        %1300 = vmatprep.subr.mxu0 0.0
        %1301 = vmatpush1.msra.mxu0 0.0
        %1302 = vmatprep.subr.mxu0 0.0
        %1303 = vmatpush1.msra.mxu0 0.0
        %1304 = vmatprep.subr.mxu0 0.0
        %1305 = vmatpush1.msra.mxu0 0.0
        %1306 = vmatprep.subr.mxu0 0.0
        %1307 = vmatpush1.msra.mxu0 0.0
        %1308 = vmatprep.subr.mxu0 0.0
        %1309 = vmatpush1.msra.mxu0 0.0
        %1310 = vmatprep.subr.mxu0 0.0
        %1311 = vmatpush1.msra.mxu0 0.0
        %1312 = vmatprep.subr.mxu0 0.0
        %1313 = vmatpush1.msra.mxu0 0.0
        %1314 = vmatprep.subr.mxu0 0.0
        %1315 = vmatpush1.msra.mxu0 0.0
        %1316 = vmatprep.subr.mxu0 0.0
        %1317 = vmatpush1.msra.mxu0 0.0
        %1318 = vmatprep.subr.mxu0 0.0
        %1319 = vmatpush1.msra.mxu0 0.0
        %1320 = vmatprep.subr.mxu0 0.0
        %1321 = vmatpush1.msra.mxu0 0.0
        %1322 = vmatprep.subr.mxu0 0.0
        %1323 = vmatpush1.msra.mxu0 0.0
        %1324 = vmatprep.subr.mxu0 0.0
        %1325 = vmatpush1.msra.mxu0 0.0
        %1326 = vmatprep.subr.mxu0 0.0
        %1327 = vmatpush1.msra.mxu0 0.0
        %1328 = vmatprep.subr.mxu0 0.0
        %1329 = vmatpush1.msra.mxu0 0.0
        %1330 = vmatprep.subr.mxu0 0.0
        %1331 = vmatpush1.msra.mxu0 0.0
        %1332 = vmatprep.subr.mxu0 0.0
        %1333 = vmatpush1.msra.mxu0 0.0
        %1334 = vmatprep.subr.mxu0 0.0
        %1335 = vmatpush1.msra.mxu0 0.0
        %1336 = vmatprep.subr.mxu0 0.0
        %1337 = vmatpush1.msra.mxu0 0.0
        %1338 = vmatprep.subr.mxu0 0.0
        %1339 = vmatpush1.msra.mxu0 0.0
        %1340 = vmatprep.subr.mxu0 0.0
        %1341 = vmatpush1.msra.mxu0 0.0
        %1342 = vmatprep.subr.mxu0 0.0
        %1343 = vmatpush1.msra.mxu0 0.0
        %1344 = vmatprep.subr.mxu0 0.0
        %1345 = vmatpush1.msra.mxu0 0.0
        %1346 = vmatprep.subr.mxu0 0.0
        %1347 = vmatpush1.msra.mxu0 0.0
        %1348 = vmatprep.subr.mxu0 0.0
        %1349 = vmatpush1.msra.mxu0 0.0
        %1350 = vmatprep.subr.mxu0 0.0
        %1351 = vmatpush1.msra.mxu0 0.0
        %1352 = vmatprep.mubr.f32.mxu0 0.0
        %1353 = vmatmul.mubr.f32.gmra.mrb[0].mxu0 %v1283
        %v1354 = vpop.f32.mrb[0].mxu0
        %v1355 = vadd.f32 %v1272, %v1354
        %v1356 = vpop.f32.mrb[0].mxu0
        %v1357 = vadd.f32 %v1274, %v1356
        %1358 = vmatprep.mubr.f32.mxu0 0.0
        %1359 = vmatmul.mubr.f32.gmra.mrb[0].mxu0 %v1286
        %v1360 = vpop.f32.mrb[0].mxu0
        %v1361 = vadd.f32 %v1278, %v1360
        %v1362 = vpop.f32.mrb[0].mxu0
        %v1363 = vadd.f32 %v1280, %v1362
        %1364 = vdwg.mxu0
        %s1365 = scalar_lea.vmem [#allocation8], 2048
        %v1366 = vld [vmem:[%s1365] sm:$0xff]
        %v1367 = vld [vmem:[%s1365 + $0x8] sm:$0xff]
        %v1368 = vld [vmem:[%s1365 + $0x10] sm:$0xff]
        %v1369 = vld [vmem:[%s1365 + $0x18] sm:$0xff]
        %v1370 = vld [vmem:[%s1365 + $0x20] sm:$0xff]
        %v1371 = vld [vmem:[%s1365 + $0x28] sm:$0xff]
        %v1372 = vld [vmem:[%s1365 + $0x30] sm:$0xff]
        %v1373 = vld [vmem:[%s1365 + $0x38] sm:$0xff]
        %v1374 = vld [vmem:[%s1365 + $0x40] sm:$0xff]
        %v1375 = vld [vmem:[%s1365 + $0x48] sm:$0xff]
        %v1376 = vld [vmem:[%s1365 + $0x50] sm:$0xff]
        %v1377 = vld [vmem:[%s1365 + $0x58] sm:$0xff]
        %v1378 = vld [vmem:[%s1365 + $0x60] sm:$0xff]
        %v1379 = vld [vmem:[%s1365 + $0x68] sm:$0xff]
        %v1380 = vld [vmem:[%s1365 + $0x70] sm:$0xff]
        %v1381 = vld [vmem:[%s1365 + $0x78] sm:$0xff]
        %v1382 = vld [vmem:[%s1365 + $0x80] sm:$0xff]
        %v1383 = vld [vmem:[%s1365 + $0x88] sm:$0xff]
        %v1384 = vld [vmem:[%s1365 + $0x90] sm:$0xff]
        %v1385 = vld [vmem:[%s1365 + $0x98] sm:$0xff]
        %v1386 = vld [vmem:[%s1365 + $0xa0] sm:$0xff]
        %v1387 = vld [vmem:[%s1365 + $0xa8] sm:$0xff]
        %v1388 = vld [vmem:[%s1365 + $0xb0] sm:$0xff]
        %v1389 = vld [vmem:[%s1365 + $0xb8] sm:$0xff]
        %v1390 = vld [vmem:[%s1365 + $0xc0] sm:$0xff]
        %v1391 = vld [vmem:[%s1365 + $0xc8] sm:$0xff]
        %v1392 = vld [vmem:[%s1365 + $0xd0] sm:$0xff]
        %v1393 = vld [vmem:[%s1365 + $0xd8] sm:$0xff]
        %v1394 = vld [vmem:[%s1365 + $0xe0] sm:$0xff]
        %v1395 = vld [vmem:[%s1365 + $0xe8] sm:$0xff]
        %v1396 = vld [vmem:[%s1365 + $0xf0] sm:$0xff]
        %v1397 = vld [vmem:[%s1365 + $0xf8] sm:$0xff]
        %v1398 = vld [vmem:[%s1365 + $0x100] sm:$0xff]
        %v1399 = vld [vmem:[%s1365 + $0x108] sm:$0xff]
        %v1400 = vld [vmem:[%s1365 + $0x110] sm:$0xff]
        %v1401 = vld [vmem:[%s1365 + $0x118] sm:$0xff]
        %v1402 = vld [vmem:[%s1365 + $0x120] sm:$0xff]
        %v1403 = vld [vmem:[%s1365 + $0x128] sm:$0xff]
        %v1404 = vld [vmem:[%s1365 + $0x130] sm:$0xff]
        %v1405 = vld [vmem:[%s1365 + $0x138] sm:$0xff]
        %v1406 = vld [vmem:[%s1365 + $0x140] sm:$0xff]
        %v1407 = vld [vmem:[%s1365 + $0x148] sm:$0xff]
        %v1408 = vld [vmem:[%s1365 + $0x150] sm:$0xff]
        %v1409 = vld [vmem:[%s1365 + $0x158] sm:$0xff]
        %v1410 = vld [vmem:[%s1365 + $0x160] sm:$0xff]
        %v1411 = vld [vmem:[%s1365 + $0x168] sm:$0xff]
        %v1412 = vld [vmem:[%s1365 + $0x170] sm:$0xff]
        %v1413 = vld [vmem:[%s1365 + $0x178] sm:$0xff]
        %v1414 = vld [vmem:[%s1365 + $0x180] sm:$0xff]
        %v1415 = vld [vmem:[%s1365 + $0x188] sm:$0xff]
        %v1416 = vld [vmem:[%s1365 + $0x190] sm:$0xff]
        %v1417 = vld [vmem:[%s1365 + $0x198] sm:$0xff]
        %v1418 = vld [vmem:[%s1365 + $0x1a0] sm:$0xff]
        %v1419 = vld [vmem:[%s1365 + $0x1a8] sm:$0xff]
        %v1420 = vld [vmem:[%s1365 + $0x1b0] sm:$0xff]
        %v1421 = vld [vmem:[%s1365 + $0x1b8] sm:$0xff]
        %v1422 = vld [vmem:[%s1365 + $0x1c0] sm:$0xff]
        %v1423 = vld [vmem:[%s1365 + $0x1c8] sm:$0xff]
        %v1424 = vld [vmem:[%s1365 + $0x1d0] sm:$0xff]
        %v1425 = vld [vmem:[%s1365 + $0x1d8] sm:$0xff]
        %v1426 = vld [vmem:[%s1365 + $0x1e0] sm:$0xff]
        %v1427 = vld [vmem:[%s1365 + $0x1e8] sm:$0xff]
        %v1428 = vld [vmem:[%s1365 + $0x1f0] sm:$0xff]
        %v1429 = vld [vmem:[%s1365 + $0x1f8] sm:$0xff]
        %v1430 = vld [vmem:[%s1365 + $0x200] sm:$0xff]
        %v1431 = vld [vmem:[%s1365 + $0x208] sm:$0xff]
        %v1432 = vld [vmem:[%s1365 + $0x210] sm:$0xff]
        %v1433 = vld [vmem:[%s1365 + $0x218] sm:$0xff]
        %v1434 = vld [vmem:[%s1365 + $0x220] sm:$0xff]
        %v1435 = vld [vmem:[%s1365 + $0x228] sm:$0xff]
        %v1436 = vld [vmem:[%s1365 + $0x230] sm:$0xff]
        %v1437 = vld [vmem:[%s1365 + $0x238] sm:$0xff]
        %v1438 = vld [vmem:[%s1365 + $0x240] sm:$0xff]
        %v1439 = vld [vmem:[%s1365 + $0x248] sm:$0xff]
        %v1440 = vld [vmem:[%s1365 + $0x250] sm:$0xff]
        %v1441 = vld [vmem:[%s1365 + $0x258] sm:$0xff]
        %v1442 = vld [vmem:[%s1365 + $0x260] sm:$0xff]
        %v1443 = vld [vmem:[%s1365 + $0x268] sm:$0xff]
        %v1444 = vld [vmem:[%s1365 + $0x270] sm:$0xff]
        %v1445 = vld [vmem:[%s1365 + $0x278] sm:$0xff]
        %v1446 = vld [vmem:[%s1365 + $0x280] sm:$0xff]
        %v1447 = vld [vmem:[%s1365 + $0x288] sm:$0xff]
        %v1448 = vld [vmem:[%s1365 + $0x290] sm:$0xff]
        %v1449 = vld [vmem:[%s1365 + $0x298] sm:$0xff]
        %v1450 = vld [vmem:[%s1365 + $0x2a0] sm:$0xff]
        %v1451 = vld [vmem:[%s1365 + $0x2a8] sm:$0xff]
        %v1452 = vld [vmem:[%s1365 + $0x2b0] sm:$0xff]
        %v1453 = vld [vmem:[%s1365 + $0x2b8] sm:$0xff]
        %v1454 = vld [vmem:[%s1365 + $0x2c0] sm:$0xff]
        %v1455 = vld [vmem:[%s1365 + $0x2c8] sm:$0xff]
        %v1456 = vld [vmem:[%s1365 + $0x2d0] sm:$0xff]
        %v1457 = vld [vmem:[%s1365 + $0x2d8] sm:$0xff]
        %v1458 = vld [vmem:[%s1365 + $0x2e0] sm:$0xff]
        %v1459 = vld [vmem:[%s1365 + $0x2e8] sm:$0xff]
        %v1460 = vld [vmem:[%s1365 + $0x2f0] sm:$0xff]
        %v1461 = vld [vmem:[%s1365 + $0x2f8] sm:$0xff]
        %v1462 = vld [vmem:[%s1365 + $0x300] sm:$0xff]
        %v1463 = vld [vmem:[%s1365 + $0x308] sm:$0xff]
        %v1464 = vld [vmem:[%s1365 + $0x310] sm:$0xff]
        %v1465 = vld [vmem:[%s1365 + $0x318] sm:$0xff]
        %v1466 = vld [vmem:[%s1365 + $0x320] sm:$0xff]
        %v1467 = vld [vmem:[%s1365 + $0x328] sm:$0xff]
        %v1468 = vld [vmem:[%s1365 + $0x330] sm:$0xff]
        %v1469 = vld [vmem:[%s1365 + $0x338] sm:$0xff]
        %v1470 = vld [vmem:[%s1365 + $0x340] sm:$0xff]
        %v1471 = vld [vmem:[%s1365 + $0x348] sm:$0xff]
        %v1472 = vld [vmem:[%s1365 + $0x350] sm:$0xff]
        %v1473 = vld [vmem:[%s1365 + $0x358] sm:$0xff]
        %v1474 = vld [vmem:[%s1365 + $0x360] sm:$0xff]
        %v1475 = vld [vmem:[%s1365 + $0x368] sm:$0xff]
        %v1476 = vld [vmem:[%s1365 + $0x370] sm:$0xff]
        %v1477 = vld [vmem:[%s1365 + $0x378] sm:$0xff]
        %v1478 = vld [vmem:[%s1365 + $0x380] sm:$0xff]
        %v1479 = vld [vmem:[%s1365 + $0x388] sm:$0xff]
        %v1480 = vld [vmem:[%s1365 + $0x390] sm:$0xff]
        %v1481 = vld [vmem:[%s1365 + $0x398] sm:$0xff]
        %v1482 = vld [vmem:[%s1365 + $0x3a0] sm:$0xff]
        %v1483 = vld [vmem:[%s1365 + $0x3a8] sm:$0xff]
        %v1484 = vld [vmem:[%s1365 + $0x3b0] sm:$0xff]
        %v1485 = vld [vmem:[%s1365 + $0x3b8] sm:$0xff]
        %v1486 = vld [vmem:[%s1365 + $0x3c0] sm:$0xff]
        %v1487 = vld [vmem:[%s1365 + $0x3c8] sm:$0xff]
        %v1488 = vld [vmem:[%s1365 + $0x3d0] sm:$0xff]
        %v1489 = vld [vmem:[%s1365 + $0x3d8] sm:$0xff]
        %v1490 = vld [vmem:[%s1365 + $0x3e0] sm:$0xff]
        %v1491 = vld [vmem:[%s1365 + $0x3e8] sm:$0xff]
        %v1492 = vld [vmem:[%s1365 + $0x3f0] sm:$0xff]
        %v1493 = vld [vmem:[%s1365 + $0x3f8] sm:$0xff]
        %1494 = vmatprep.subr.mxu0 %v1367
        %1495 = vmatpush1.msra.mxu0 %v1366
        %1496 = vmatprep.subr.mxu0 %v1369
        %1497 = vmatpush1.msra.mxu0 %v1368
        %1498 = vmatprep.subr.mxu0 %v1371
        %1499 = vmatpush1.msra.mxu0 %v1370
        %1500 = vmatprep.subr.mxu0 %v1373
        %1501 = vmatpush1.msra.mxu0 %v1372
        %1502 = vmatprep.subr.mxu0 %v1375
        %1503 = vmatpush1.msra.mxu0 %v1374
        %1504 = vmatprep.subr.mxu0 %v1377
        %1505 = vmatpush1.msra.mxu0 %v1376
        %1506 = vmatprep.subr.mxu0 %v1379
        %1507 = vmatpush1.msra.mxu0 %v1378
        %1508 = vmatprep.subr.mxu0 %v1381
        %1509 = vmatpush1.msra.mxu0 %v1380
        %1510 = vmatprep.subr.mxu0 %v1383
        %1511 = vmatpush1.msra.mxu0 %v1382
        %1512 = vmatprep.subr.mxu0 %v1385
        %1513 = vmatpush1.msra.mxu0 %v1384
        %1514 = vmatprep.subr.mxu0 %v1387
        %1515 = vmatpush1.msra.mxu0 %v1386
        %1516 = vmatprep.subr.mxu0 %v1389
        %1517 = vmatpush1.msra.mxu0 %v1388
        %1518 = vmatprep.subr.mxu0 %v1391
        %1519 = vmatpush1.msra.mxu0 %v1390
        %1520 = vmatprep.subr.mxu0 %v1393
        %1521 = vmatpush1.msra.mxu0 %v1392
        %1522 = vmatprep.subr.mxu0 %v1395
        %1523 = vmatpush1.msra.mxu0 %v1394
        %1524 = vmatprep.subr.mxu0 %v1397
        %1525 = vmatpush1.msra.mxu0 %v1396
        %1526 = vmatprep.subr.mxu0 %v1399
        %1527 = vmatpush1.msra.mxu0 %v1398
        %1528 = vmatprep.subr.mxu0 %v1401
        %1529 = vmatpush1.msra.mxu0 %v1400
        %1530 = vmatprep.subr.mxu0 %v1403
        %1531 = vmatpush1.msra.mxu0 %v1402
        %1532 = vmatprep.subr.mxu0 %v1405
        %1533 = vmatpush1.msra.mxu0 %v1404
        %1534 = vmatprep.subr.mxu0 %v1407
        %1535 = vmatpush1.msra.mxu0 %v1406
        %1536 = vmatprep.subr.mxu0 %v1409
        %1537 = vmatpush1.msra.mxu0 %v1408
        %1538 = vmatprep.subr.mxu0 %v1411
        %1539 = vmatpush1.msra.mxu0 %v1410
        %1540 = vmatprep.subr.mxu0 %v1413
        %1541 = vmatpush1.msra.mxu0 %v1412
        %1542 = vmatprep.subr.mxu0 %v1415
        %1543 = vmatpush1.msra.mxu0 %v1414
        %1544 = vmatprep.subr.mxu0 %v1417
        %1545 = vmatpush1.msra.mxu0 %v1416
        %1546 = vmatprep.subr.mxu0 %v1419
        %1547 = vmatpush1.msra.mxu0 %v1418
        %1548 = vmatprep.subr.mxu0 %v1421
        %1549 = vmatpush1.msra.mxu0 %v1420
        %1550 = vmatprep.subr.mxu0 %v1423
        %1551 = vmatpush1.msra.mxu0 %v1422
        %1552 = vmatprep.subr.mxu0 %v1425
        %1553 = vmatpush1.msra.mxu0 %v1424
        %1554 = vmatprep.subr.mxu0 %v1427
        %1555 = vmatpush1.msra.mxu0 %v1426
        %1556 = vmatprep.subr.mxu0 %v1429
        %1557 = vmatpush1.msra.mxu0 %v1428
        %1558 = vmatprep.mubr.f32.mxu0 %v649
        %1559 = vmatmul.mubr.f32.gmra.mrb[0].mxu0 %v648
        %v1560 = vpop.f32.mrb[0].mxu0
        %v1561 = vadd.f32 0.0, %v1560
        %v1562 = vpop.f32.mrb[0].mxu0
        %v1563 = vadd.f32 0.0, %v1562
        %1564 = vdwg.mxu0
        %1565 = vmatprep.subr.mxu0 %v1431
        %1566 = vmatpush1.msra.mxu0 %v1430
        %1567 = vmatprep.subr.mxu0 %v1433
        %1568 = vmatpush1.msra.mxu0 %v1432
        %1569 = vmatprep.subr.mxu0 %v1435
        %1570 = vmatpush1.msra.mxu0 %v1434
        %1571 = vmatprep.subr.mxu0 %v1437
        %1572 = vmatpush1.msra.mxu0 %v1436
        %1573 = vmatprep.subr.mxu0 %v1439
        %1574 = vmatpush1.msra.mxu0 %v1438
        %1575 = vmatprep.subr.mxu0 %v1441
        %1576 = vmatpush1.msra.mxu0 %v1440
        %1577 = vmatprep.subr.mxu0 %v1443
        %1578 = vmatpush1.msra.mxu0 %v1442
        %1579 = vmatprep.subr.mxu0 %v1445
        %1580 = vmatpush1.msra.mxu0 %v1444
        %1581 = vmatprep.subr.mxu0 %v1447
        %1582 = vmatpush1.msra.mxu0 %v1446
        %1583 = vmatprep.subr.mxu0 %v1449
        %1584 = vmatpush1.msra.mxu0 %v1448
        %1585 = vmatprep.subr.mxu0 %v1451
        %1586 = vmatpush1.msra.mxu0 %v1450
        %1587 = vmatprep.subr.mxu0 %v1453
        %1588 = vmatpush1.msra.mxu0 %v1452
        %1589 = vmatprep.subr.mxu0 %v1455
        %1590 = vmatpush1.msra.mxu0 %v1454
        %1591 = vmatprep.subr.mxu0 %v1457
        %1592 = vmatpush1.msra.mxu0 %v1456
        %1593 = vmatprep.subr.mxu0 %v1459
        %1594 = vmatpush1.msra.mxu0 %v1458
        %1595 = vmatprep.subr.mxu0 %v1461
        %1596 = vmatpush1.msra.mxu0 %v1460
        %1597 = vmatprep.subr.mxu0 %v1463
        %1598 = vmatpush1.msra.mxu0 %v1462
        %1599 = vmatprep.subr.mxu0 %v1465
        %1600 = vmatpush1.msra.mxu0 %v1464
        %1601 = vmatprep.subr.mxu0 %v1467
        %1602 = vmatpush1.msra.mxu0 %v1466
        %1603 = vmatprep.subr.mxu0 %v1469
        %1604 = vmatpush1.msra.mxu0 %v1468
        %1605 = vmatprep.subr.mxu0 %v1471
        %1606 = vmatpush1.msra.mxu0 %v1470
        %1607 = vmatprep.subr.mxu0 %v1473
        %1608 = vmatpush1.msra.mxu0 %v1472
        %1609 = vmatprep.subr.mxu0 %v1475
        %1610 = vmatpush1.msra.mxu0 %v1474
        %1611 = vmatprep.subr.mxu0 %v1477
        %1612 = vmatpush1.msra.mxu0 %v1476
        %1613 = vmatprep.subr.mxu0 %v1479
        %1614 = vmatpush1.msra.mxu0 %v1478
        %1615 = vmatprep.subr.mxu0 %v1481
        %1616 = vmatpush1.msra.mxu0 %v1480
        %1617 = vmatprep.subr.mxu0 %v1483
        %1618 = vmatpush1.msra.mxu0 %v1482
        %1619 = vmatprep.subr.mxu0 %v1485
        %1620 = vmatpush1.msra.mxu0 %v1484
        %1621 = vmatprep.subr.mxu0 %v1487
        %1622 = vmatpush1.msra.mxu0 %v1486
        %1623 = vmatprep.subr.mxu0 %v1489
        %1624 = vmatpush1.msra.mxu0 %v1488
        %1625 = vmatprep.subr.mxu0 %v1491
        %1626 = vmatpush1.msra.mxu0 %v1490
        %1627 = vmatprep.subr.mxu0 %v1493
        %1628 = vmatpush1.msra.mxu0 %v1492
        %1629 = vmatprep.mubr.f32.mxu0 %v651
        %1630 = vmatmul.mubr.f32.gmra.mrb[0].mxu0 %v650
        %v1631 = vpop.f32.mrb[0].mxu0
        %v1632 = vadd.f32 %v1561, %v1631
        %v1633 = vpop.f32.mrb[0].mxu0
        %v1634 = vadd.f32 %v1563, %v1633
        %1635 = vdwg.mxu0
        %s1636 = scalar_lea.vmem %s2, 32
        %v1637 = vld [vmem:[%s1636] sm:$0xff]
        %v1638 = vld [vmem:[%s1636 + $0x8] sm:$0xff]
        %v1640 = vsel %vm1198, %v1637, 0
        %v1643 = vsel %vm1198, %v1638, 0
        %1645 = vmatprep.subr.mxu0 %v1634
        %1646 = vmatpush1.msra.mxu0 %v1632
        %1647 = vmatprep.subr.mxu0 0.0
        %1648 = vmatpush1.msra.mxu0 0.0
        %1649 = vmatprep.subr.mxu0 0.0
        %1650 = vmatpush1.msra.mxu0 0.0
        %1651 = vmatprep.subr.mxu0 0.0
        %1652 = vmatpush1.msra.mxu0 0.0
        %1653 = vmatprep.subr.mxu0 0.0
        %1654 = vmatpush1.msra.mxu0 0.0
        %1655 = vmatprep.subr.mxu0 0.0
        %1656 = vmatpush1.msra.mxu0 0.0
        %1657 = vmatprep.subr.mxu0 0.0
        %1658 = vmatpush1.msra.mxu0 0.0
        %1659 = vmatprep.subr.mxu0 0.0
        %1660 = vmatpush1.msra.mxu0 0.0
        %1661 = vmatprep.subr.mxu0 0.0
        %1662 = vmatpush1.msra.mxu0 0.0
        %1663 = vmatprep.subr.mxu0 0.0
        %1664 = vmatpush1.msra.mxu0 0.0
        %1665 = vmatprep.subr.mxu0 0.0
        %1666 = vmatpush1.msra.mxu0 0.0
        %1667 = vmatprep.subr.mxu0 0.0
        %1668 = vmatpush1.msra.mxu0 0.0
        %1669 = vmatprep.subr.mxu0 0.0
        %1670 = vmatpush1.msra.mxu0 0.0
        %1671 = vmatprep.subr.mxu0 0.0
        %1672 = vmatpush1.msra.mxu0 0.0
        %1673 = vmatprep.subr.mxu0 0.0
        %1674 = vmatpush1.msra.mxu0 0.0
        %1675 = vmatprep.subr.mxu0 0.0
        %1676 = vmatpush1.msra.mxu0 0.0
        %1677 = vmatprep.subr.mxu0 0.0
        %1678 = vmatpush1.msra.mxu0 0.0
        %1679 = vmatprep.subr.mxu0 0.0
        %1680 = vmatpush1.msra.mxu0 0.0
        %1681 = vmatprep.subr.mxu0 0.0
        %1682 = vmatpush1.msra.mxu0 0.0
        %1683 = vmatprep.subr.mxu0 0.0
        %1684 = vmatpush1.msra.mxu0 0.0
        %1685 = vmatprep.subr.mxu0 0.0
        %1686 = vmatpush1.msra.mxu0 0.0
        %1687 = vmatprep.subr.mxu0 0.0
        %1688 = vmatpush1.msra.mxu0 0.0
        %1689 = vmatprep.subr.mxu0 0.0
        %1690 = vmatpush1.msra.mxu0 0.0
        %1691 = vmatprep.subr.mxu0 0.0
        %1692 = vmatpush1.msra.mxu0 0.0
        %1693 = vmatprep.subr.mxu0 0.0
        %1694 = vmatpush1.msra.mxu0 0.0
        %1695 = vmatprep.subr.mxu0 0.0
        %1696 = vmatpush1.msra.mxu0 0.0
        %1697 = vmatprep.subr.mxu0 0.0
        %1698 = vmatpush1.msra.mxu0 0.0
        %1699 = vmatprep.subr.mxu0 0.0
        %1700 = vmatpush1.msra.mxu0 0.0
        %1701 = vmatprep.subr.mxu0 0.0
        %1702 = vmatpush1.msra.mxu0 0.0
        %1703 = vmatprep.subr.mxu0 0.0
        %1704 = vmatpush1.msra.mxu0 0.0
        %1705 = vmatprep.subr.mxu0 0.0
        %1706 = vmatpush1.msra.mxu0 0.0
        %1707 = vmatprep.subr.mxu0 0.0
        %1708 = vmatpush1.msra.mxu0 0.0
        %1709 = vmatprep.mubr.f32.mxu0 0.0
        %1710 = vmatmul.mubr.f32.gmra.mrb[0].mxu0 %v1640
        %v1711 = vpop.f32.mrb[0].mxu0
        %v1712 = vadd.f32 0.0, %v1711
        %v1713 = vpop.f32.mrb[0].mxu0
        %v1714 = vadd.f32 0.0, %v1713
        %1715 = vmatprep.mubr.f32.mxu0 0.0
        %1716 = vmatmul.mubr.f32.gmra.mrb[0].mxu0 %v1643
        %v1717 = vpop.f32.mrb[0].mxu0
        %v1718 = vadd.f32 0.0, %v1717
        %v1719 = vpop.f32.mrb[0].mxu0
        %v1720 = vadd.f32 0.0, %v1719
        %1721 = vdwg.mxu0
        %v1722 = vadd.f32 %v1355, %v1712
        %v1723 = vadd.f32 %v1357, %v1714
        %v1724 = vadd.f32 %v1361, %v1718
        %v1725 = vadd.f32 %v1363, %v1720
        %s1726 = scalar_lea.vmem %s8, 16
        %v1727 = vld [vmem:[%s1726] sm:$0xff]
        %v1728 = vld [vmem:[%s1726 + $0x8] sm:$0xff]
        %v1729 = vadd.f32 %v1722, %v1723
        %1730 = vadd.xlane.f32.xlu0 %v1729
        %v1731 = vpop.xlane.xlu0 %1730
        %v1732 = vadd.f32 %v1724, %v1725
        %1733 = vadd.xlane.f32.xlu0 %v1732
        %v1734 = vpop.xlane.xlu0 %1733
        %v1735 = vmul.f32 %v1731, 0.0048076925
        %v1736 = vmul.f32 %v1734, 0.0048076925
        %v1737 = vmul.f32 %v1722, %v1722
        %v1738 = vmul.f32 %v1723, %v1723
        %v1739 = vmul.f32 %v1724, %v1724
        %v1740 = vmul.f32 %v1725, %v1725
        %v1741 = vadd.f32 %v1737, %v1738
        %1742 = vadd.xlane.f32.xlu0 %v1741
        %v1743 = vpop.xlane.xlu0 %1742
        %v1744 = vadd.f32 %v1739, %v1740
        %1745 = vadd.xlane.f32.xlu0 %v1744
        %v1746 = vpop.xlane.xlu0 %1745
        %v1747 = vmul.f32 %v1743, 0.0048076925
        %v1748 = vmul.f32 %v1746, 0.0048076925
        %v1749 = vmul.f32 %v1735, %v1735
        %v1750 = vmul.f32 %v1736, %v1736
        %v1751 = vsub.f32 %v1747, %v1749
        %v1752 = vsub.f32 %v1748, %v1750
        %v1753 = vmax.f32 %v1751, 0.0
        %v1754 = vmax.f32 %v1752, 0.0
        %v1755 = vsub.f32 %v1722, %v1735
        %v1756 = vsub.f32 %v1723, %v1735
        %v1757 = vsub.f32 %v1724, %v1736
        %v1758 = vsub.f32 %v1725, %v1736
        %v1759 = vadd.f32 %v1753, 1e-05
        %v1760 = vadd.f32 %v1754, 1e-05
        %v1761 = vrsqrt.pop %v1759
        %v1762 = vrsqrt.pop %v1760
        %v1763 = vmul.f32 %v1755, %v1761
        %v1764 = vmul.f32 %v1756, %v1761
        %v1765 = vmul.f32 %v1757, %v1762
        %v1766 = vmul.f32 %v1758, %v1762
        %1768 = vset.pattern.permute.xlu0 0
        %1769 = vperm.xlu0 %1768, %v1727
        %v1770 = vpop.permute.xlu0 %1769
        %1773 = vset.pattern.permute.xlu0 0
        %1774 = vperm.xlu0 %1773, %v1728
        %v1775 = vpop.permute.xlu0 %1774
        %v1777 = vmul.f32 %v1763, %v1770
        %v1778 = vmul.f32 %v1764, %v1770
        %v1779 = vmul.f32 %v1765, %v1775
        %v1780 = vmul.f32 %v1766, %v1775
        %1781 = vset.pattern.permute.xlu0 1
        %1782 = vperm.xlu0 %1781, %v1727
        %v1783 = vpop.permute.xlu0 %1782
        %1785 = vset.pattern.permute.xlu0 1
        %1786 = vperm.xlu0 %1785, %v1728
        %v1787 = vpop.permute.xlu0 %1786
        %v1789 = vadd.f32 %v1777, %v1783
        %v1790 = vadd.f32 %v1778, %v1783
        %v1791 = vadd.f32 %v1779, %v1787
        %v1792 = vadd.f32 %v1780, %v1787
        %vm1793 = vcmp.ge.f32.partialorder %v1789, 0.0
        %vm1794 = vcmp.ge.f32.partialorder %v1790, 0.0
        %vm1795 = vcmp.ge.f32.partialorder %v1791, 0.0
        %vm1796 = vcmp.ge.f32.partialorder %v1792, 0.0
        %1797 = vset.pattern.permute.xlu0 2
        %1798 = vperm.xlu0 %1797, %v1727
        %v1799 = vpop.permute.xlu0 %1798
        %1801 = vset.pattern.permute.xlu0 2
        %1802 = vperm.xlu0 %1801, %v1728
        %v1803 = vpop.permute.xlu0 %1802
        %v1805 = vmul.f32 %v1799, %v1789
        %v1806 = vmul.f32 %v1799, %v1790
        %v1807 = vmul.f32 %v1803, %v1791
        %v1808 = vmul.f32 %v1803, %v1792
        %v1809 = vsel %vm1793, %v1789, %v1805
        %v1810 = vsel %vm1794, %v1790, %v1806
        %v1811 = vsel %vm1795, %v1791, %v1807
        %v1812 = vsel %vm1796, %v1792, %v1808
        %v1813 = vld [vmem:[#allocation10] sm:$0xff]
        %v1814 = vld [vmem:[#allocation10 + $0x8] sm:$0xff]
        %v1815 = vld [vmem:[#allocation10 + $0x10] sm:$0xff]
        %v1816 = vld [vmem:[#allocation10 + $0x18] sm:$0xff]
        %v1817 = vld [vmem:[#allocation10 + $0x20] sm:$0xff]
        %v1818 = vld [vmem:[#allocation10 + $0x28] sm:$0xff]
        %v1819 = vld [vmem:[#allocation10 + $0x30] sm:$0xff]
        %v1820 = vld [vmem:[#allocation10 + $0x38] sm:$0xff]
        %v1821 = vld [vmem:[#allocation10 + $0x40] sm:$0xff]
        %v1822 = vld [vmem:[#allocation10 + $0x48] sm:$0xff]
        %v1823 = vld [vmem:[#allocation10 + $0x50] sm:$0xff]
        %v1824 = vld [vmem:[#allocation10 + $0x58] sm:$0xff]
        %v1825 = vld [vmem:[#allocation10 + $0x60] sm:$0xff]
        %v1826 = vld [vmem:[#allocation10 + $0x68] sm:$0xff]
        %v1827 = vld [vmem:[#allocation10 + $0x70] sm:$0xff]
        %v1828 = vld [vmem:[#allocation10 + $0x78] sm:$0xff]
        %v1829 = vld [vmem:[#allocation10 + $0x80] sm:$0xff]
        %v1830 = vld [vmem:[#allocation10 + $0x88] sm:$0xff]
        %v1831 = vld [vmem:[#allocation10 + $0x90] sm:$0xff]
        %v1832 = vld [vmem:[#allocation10 + $0x98] sm:$0xff]
        %v1833 = vld [vmem:[#allocation10 + $0xa0] sm:$0xff]
        %v1834 = vld [vmem:[#allocation10 + $0xa8] sm:$0xff]
        %v1835 = vld [vmem:[#allocation10 + $0xb0] sm:$0xff]
        %v1836 = vld [vmem:[#allocation10 + $0xb8] sm:$0xff]
        %v1837 = vld [vmem:[#allocation10 + $0xc0] sm:$0xff]
        %v1838 = vld [vmem:[#allocation10 + $0xc8] sm:$0xff]
        %v1839 = vld [vmem:[#allocation10 + $0xd0] sm:$0xff]
        %v1840 = vld [vmem:[#allocation10 + $0xd8] sm:$0xff]
        %v1841 = vld [vmem:[#allocation10 + $0xe0] sm:$0xff]
        %v1842 = vld [vmem:[#allocation10 + $0xe8] sm:$0xff]
        %v1843 = vld [vmem:[#allocation10 + $0xf0] sm:$0xff]
        %v1844 = vld [vmem:[#allocation10 + $0xf8] sm:$0xff]
        %1845 = vmatprep.subr.mxu0 0.0
        %1846 = vmatpush1.msra.mxu0 %v1813
        %1847 = vmatprep.subr.mxu0 0.0
        %1848 = vmatpush1.msra.mxu0 %v1814
        %1849 = vmatprep.subr.mxu0 0.0
        %1850 = vmatpush1.msra.mxu0 %v1815
        %1851 = vmatprep.subr.mxu0 0.0
        %1852 = vmatpush1.msra.mxu0 %v1816
        %1853 = vmatprep.subr.mxu0 0.0
        %1854 = vmatpush1.msra.mxu0 %v1817
        %1855 = vmatprep.subr.mxu0 0.0
        %1856 = vmatpush1.msra.mxu0 %v1818
        %1857 = vmatprep.subr.mxu0 0.0
        %1858 = vmatpush1.msra.mxu0 %v1819
        %1859 = vmatprep.subr.mxu0 0.0
        %1860 = vmatpush1.msra.mxu0 %v1820
        %1861 = vmatprep.subr.mxu0 0.0
        %1862 = vmatpush1.msra.mxu0 %v1821
        %1863 = vmatprep.subr.mxu0 0.0
        %1864 = vmatpush1.msra.mxu0 %v1822
        %1865 = vmatprep.subr.mxu0 0.0
        %1866 = vmatpush1.msra.mxu0 %v1823
        %1867 = vmatprep.subr.mxu0 0.0
        %1868 = vmatpush1.msra.mxu0 %v1824
        %1869 = vmatprep.subr.mxu0 0.0
        %1870 = vmatpush1.msra.mxu0 %v1825
        %1871 = vmatprep.subr.mxu0 0.0
        %1872 = vmatpush1.msra.mxu0 %v1826
        %1873 = vmatprep.subr.mxu0 0.0
        %1874 = vmatpush1.msra.mxu0 %v1827
        %1875 = vmatprep.subr.mxu0 0.0
        %1876 = vmatpush1.msra.mxu0 %v1828
        %1877 = vmatprep.subr.mxu0 0.0
        %1878 = vmatpush1.msra.mxu0 %v1829
        %1879 = vmatprep.subr.mxu0 0.0
        %1880 = vmatpush1.msra.mxu0 %v1830
        %1881 = vmatprep.subr.mxu0 0.0
        %1882 = vmatpush1.msra.mxu0 %v1831
        %1883 = vmatprep.subr.mxu0 0.0
        %1884 = vmatpush1.msra.mxu0 %v1832
        %1885 = vmatprep.subr.mxu0 0.0
        %1886 = vmatpush1.msra.mxu0 %v1833
        %1887 = vmatprep.subr.mxu0 0.0
        %1888 = vmatpush1.msra.mxu0 %v1834
        %1889 = vmatprep.subr.mxu0 0.0
        %1890 = vmatpush1.msra.mxu0 %v1835
        %1891 = vmatprep.subr.mxu0 0.0
        %1892 = vmatpush1.msra.mxu0 %v1836
        %1893 = vmatprep.subr.mxu0 0.0
        %1894 = vmatpush1.msra.mxu0 %v1837
        %1895 = vmatprep.subr.mxu0 0.0
        %1896 = vmatpush1.msra.mxu0 %v1838
        %1897 = vmatprep.subr.mxu0 0.0
        %1898 = vmatpush1.msra.mxu0 %v1839
        %1899 = vmatprep.subr.mxu0 0.0
        %1900 = vmatpush1.msra.mxu0 %v1840
        %1901 = vmatprep.subr.mxu0 0.0
        %1902 = vmatpush1.msra.mxu0 %v1841
        %1903 = vmatprep.subr.mxu0 0.0
        %1904 = vmatpush1.msra.mxu0 %v1842
        %1905 = vmatprep.subr.mxu0 0.0
        %1906 = vmatpush1.msra.mxu0 %v1843
        %1907 = vmatprep.subr.mxu0 0.0
        %1908 = vmatpush1.msra.mxu0 %v1844
        %1909 = vmatprep.mubr.f32.mxu0 %v1810
        %1910 = vmatmul.mubr.f32.gmra.mrb[0].mxu0 %v1809
        %v1911 = vpop.f32.mrb[0].mxu0
        %v1912 = vadd.f32 0.0, %v1911
        %v1913 = vpop.f32.mrb[0].mxu0
        %1914 = vmatprep.mubr.f32.mxu0 %v1812
        %1915 = vmatmul.mubr.f32.gmra.mrb[0].mxu0 %v1811
        %v1916 = vpop.f32.mrb[0].mxu0
        %v1917 = vadd.f32 0.0, %v1916
        %v1918 = vpop.f32.mrb[0].mxu0
        %1919 = vdwg.mxu0
        %v1920 = vld [vmem:[#allocation5] sm:$0xff]
        %v1921 = vld [vmem:[#allocation5 + $0x8] sm:$0xff]
        %s1922 = scalar_lea.vmem [#allocation10], 256
        %v1923 = vld [vmem:[%s1922] sm:$0xff]
        %v1924 = vld [vmem:[%s1922 + $0x8] sm:$0xff]
        %v1925 = vld [vmem:[%s1922 + $0x10] sm:$0xff]
        %v1926 = vld [vmem:[%s1922 + $0x18] sm:$0xff]
        %v1927 = vld [vmem:[%s1922 + $0x20] sm:$0xff]
        %v1928 = vld [vmem:[%s1922 + $0x28] sm:$0xff]
        %v1929 = vld [vmem:[%s1922 + $0x30] sm:$0xff]
        %v1930 = vld [vmem:[%s1922 + $0x38] sm:$0xff]
        %v1931 = vld [vmem:[%s1922 + $0x40] sm:$0xff]
        %v1932 = vld [vmem:[%s1922 + $0x48] sm:$0xff]
        %v1933 = vld [vmem:[%s1922 + $0x50] sm:$0xff]
        %v1934 = vld [vmem:[%s1922 + $0x58] sm:$0xff]
        %v1935 = vld [vmem:[%s1922 + $0x60] sm:$0xff]
        %v1936 = vld [vmem:[%s1922 + $0x68] sm:$0xff]
        %v1937 = vld [vmem:[%s1922 + $0x70] sm:$0xff]
        %v1938 = vld [vmem:[%s1922 + $0x78] sm:$0xff]
        %v1939 = vld [vmem:[%s1922 + $0x80] sm:$0xff]
        %v1940 = vld [vmem:[%s1922 + $0x88] sm:$0xff]
        %v1941 = vld [vmem:[%s1922 + $0x90] sm:$0xff]
        %v1942 = vld [vmem:[%s1922 + $0x98] sm:$0xff]
        %v1943 = vld [vmem:[%s1922 + $0xa0] sm:$0xff]
        %v1944 = vld [vmem:[%s1922 + $0xa8] sm:$0xff]
        %v1945 = vld [vmem:[%s1922 + $0xb0] sm:$0xff]
        %v1946 = vld [vmem:[%s1922 + $0xb8] sm:$0xff]
        %v1947 = vld [vmem:[%s1922 + $0xc0] sm:$0xff]
        %v1948 = vld [vmem:[%s1922 + $0xc8] sm:$0xff]
        %v1949 = vld [vmem:[%s1922 + $0xd0] sm:$0xff]
        %v1950 = vld [vmem:[%s1922 + $0xd8] sm:$0xff]
        %v1951 = vld [vmem:[%s1922 + $0xe0] sm:$0xff]
        %v1952 = vld [vmem:[%s1922 + $0xe8] sm:$0xff]
        %v1953 = vld [vmem:[%s1922 + $0xf0] sm:$0xff]
        %v1954 = vld [vmem:[%s1922 + $0xf8] sm:$0xff]
        %1955 = vmatprep.subr.mxu0 0.0
        %1956 = vmatpush1.msra.mxu0 %v1923
        %1957 = vmatprep.subr.mxu0 0.0
        %1958 = vmatpush1.msra.mxu0 %v1924
        %1959 = vmatprep.subr.mxu0 0.0
        %1960 = vmatpush1.msra.mxu0 %v1925
        %1961 = vmatprep.subr.mxu0 0.0
        %1962 = vmatpush1.msra.mxu0 %v1926
        %1963 = vmatprep.subr.mxu0 0.0
        %1964 = vmatpush1.msra.mxu0 %v1927
        %1965 = vmatprep.subr.mxu0 0.0
        %1966 = vmatpush1.msra.mxu0 %v1928
        %1967 = vmatprep.subr.mxu0 0.0
        %1968 = vmatpush1.msra.mxu0 %v1929
        %1969 = vmatprep.subr.mxu0 0.0
        %1970 = vmatpush1.msra.mxu0 %v1930
        %1971 = vmatprep.subr.mxu0 0.0
        %1972 = vmatpush1.msra.mxu0 %v1931
        %1973 = vmatprep.subr.mxu0 0.0
        %1974 = vmatpush1.msra.mxu0 %v1932
        %1975 = vmatprep.subr.mxu0 0.0
        %1976 = vmatpush1.msra.mxu0 %v1933
        %1977 = vmatprep.subr.mxu0 0.0
        %1978 = vmatpush1.msra.mxu0 %v1934
        %1979 = vmatprep.subr.mxu0 0.0
        %1980 = vmatpush1.msra.mxu0 %v1935
        %1981 = vmatprep.subr.mxu0 0.0
        %1982 = vmatpush1.msra.mxu0 %v1936
        %1983 = vmatprep.subr.mxu0 0.0
        %1984 = vmatpush1.msra.mxu0 %v1937
        %1985 = vmatprep.subr.mxu0 0.0
        %1986 = vmatpush1.msra.mxu0 %v1938
        %1987 = vmatprep.subr.mxu0 0.0
        %1988 = vmatpush1.msra.mxu0 %v1939
        %1989 = vmatprep.subr.mxu0 0.0
        %1990 = vmatpush1.msra.mxu0 %v1940
        %1991 = vmatprep.subr.mxu0 0.0
        %1992 = vmatpush1.msra.mxu0 %v1941
        %1993 = vmatprep.subr.mxu0 0.0
        %1994 = vmatpush1.msra.mxu0 %v1942
        %1995 = vmatprep.subr.mxu0 0.0
        %1996 = vmatpush1.msra.mxu0 %v1943
        %1997 = vmatprep.subr.mxu0 0.0
        %1998 = vmatpush1.msra.mxu0 %v1944
        %1999 = vmatprep.subr.mxu0 0.0
        %2000 = vmatpush1.msra.mxu0 %v1945
        %2001 = vmatprep.subr.mxu0 0.0
        %2002 = vmatpush1.msra.mxu0 %v1946
        %2003 = vmatprep.subr.mxu0 0.0
        %2004 = vmatpush1.msra.mxu0 %v1947
        %2005 = vmatprep.subr.mxu0 0.0
        %2006 = vmatpush1.msra.mxu0 %v1948
        %2007 = vmatprep.subr.mxu0 0.0
        %2008 = vmatpush1.msra.mxu0 %v1949
        %2009 = vmatprep.subr.mxu0 0.0
        %2010 = vmatpush1.msra.mxu0 %v1950
        %2011 = vmatprep.subr.mxu0 0.0
        %2012 = vmatpush1.msra.mxu0 %v1951
        %2013 = vmatprep.subr.mxu0 0.0
        %2014 = vmatpush1.msra.mxu0 %v1952
        %2015 = vmatprep.subr.mxu0 0.0
        %2016 = vmatpush1.msra.mxu0 %v1953
        %2017 = vmatprep.subr.mxu0 0.0
        %2018 = vmatpush1.msra.mxu0 %v1954
        %2019 = vmatprep.mubr.f32.mxu0 %v1810
        %2020 = vmatmul.mubr.f32.gmra.mrb[0].mxu0 %v1809
        %v2021 = vpop.f32.mrb[0].mxu0
        %v2022 = vadd.f32 0.0, %v2021
        %v2023 = vpop.f32.mrb[0].mxu0
        %2024 = vmatprep.mubr.f32.mxu0 %v1812
        %2025 = vmatmul.mubr.f32.gmra.mrb[0].mxu0 %v1811
        %v2026 = vpop.f32.mrb[0].mxu0
        %v2027 = vadd.f32 0.0, %v2026
        %v2028 = vpop.f32.mrb[0].mxu0
        %2029 = vdwg.mxu0
        %s2030 = scalar_lea.vmem [#allocation5], 16
        %v2031 = vld [vmem:[%s2030] sm:$0xff]
        %v2032 = vld [vmem:[%s2030 + $0x8] sm:$0xff]
        %vm2033 = vcmask 130048
        %v2035 = vsel %vm2033, %v2031, 0
        %v2038 = vsel %vm2033, %v2032, 0
        %2040 = vmatprep.subr.mxu0 0.0
        %2041 = vmatpush1.msra.mxu0 %v2022
        %2042 = vmatprep.subr.mxu0 0.0
        %2043 = vmatpush1.msra.mxu0 %v2027
        %2044 = vmatprep.subr.mxu0 0.0
        %2045 = vmatpush1.msra.mxu0 0.0
        %2046 = vmatprep.subr.mxu0 0.0
        %2047 = vmatpush1.msra.mxu0 0.0
        %2048 = vmatprep.subr.mxu0 0.0
        %2049 = vmatpush1.msra.mxu0 0.0
        %2050 = vmatprep.subr.mxu0 0.0
        %2051 = vmatpush1.msra.mxu0 0.0
        %2052 = vmatprep.subr.mxu0 0.0
        %2053 = vmatpush1.msra.mxu0 0.0
        %2054 = vmatprep.subr.mxu0 0.0
        %2055 = vmatpush1.msra.mxu0 0.0
        %2056 = vmatprep.subr.mxu0 0.0
        %2057 = vmatpush1.msra.mxu0 0.0
        %2058 = vmatprep.subr.mxu0 0.0
        %2059 = vmatpush1.msra.mxu0 0.0
        %2060 = vmatprep.subr.mxu0 0.0
        %2061 = vmatpush1.msra.mxu0 0.0
        %2062 = vmatprep.subr.mxu0 0.0
        %2063 = vmatpush1.msra.mxu0 0.0
        %2064 = vmatprep.subr.mxu0 0.0
        %2065 = vmatpush1.msra.mxu0 0.0
        %2066 = vmatprep.subr.mxu0 0.0
        %2067 = vmatpush1.msra.mxu0 0.0
        %2068 = vmatprep.subr.mxu0 0.0
        %2069 = vmatpush1.msra.mxu0 0.0
        %2070 = vmatprep.subr.mxu0 0.0
        %2071 = vmatpush1.msra.mxu0 0.0
        %2072 = vmatprep.subr.mxu0 0.0
        %2073 = vmatpush1.msra.mxu0 0.0
        %2074 = vmatprep.subr.mxu0 0.0
        %2075 = vmatpush1.msra.mxu0 0.0
        %2076 = vmatprep.subr.mxu0 0.0
        %2077 = vmatpush1.msra.mxu0 0.0
        %2078 = vmatprep.subr.mxu0 0.0
        %2079 = vmatpush1.msra.mxu0 0.0
        %2080 = vmatprep.subr.mxu0 0.0
        %2081 = vmatpush1.msra.mxu0 0.0
        %2082 = vmatprep.subr.mxu0 0.0
        %2083 = vmatpush1.msra.mxu0 0.0
        %2084 = vmatprep.subr.mxu0 0.0
        %2085 = vmatpush1.msra.mxu0 0.0
        %2086 = vmatprep.subr.mxu0 0.0
        %2087 = vmatpush1.msra.mxu0 0.0
        %2088 = vmatprep.subr.mxu0 0.0
        %2089 = vmatpush1.msra.mxu0 0.0
        %2090 = vmatprep.subr.mxu0 0.0
        %2091 = vmatpush1.msra.mxu0 0.0
        %2092 = vmatprep.subr.mxu0 0.0
        %2093 = vmatpush1.msra.mxu0 0.0
        %2094 = vmatprep.subr.mxu0 0.0
        %2095 = vmatpush1.msra.mxu0 0.0
        %2096 = vmatprep.subr.mxu0 0.0
        %2097 = vmatpush1.msra.mxu0 0.0
        %2098 = vmatprep.subr.mxu0 0.0
        %2099 = vmatpush1.msra.mxu0 0.0
        %2100 = vmatprep.subr.mxu0 0.0
        %2101 = vmatpush1.msra.mxu0 0.0
        %2102 = vmatprep.subr.mxu0 0.0
        %2103 = vmatpush1.msra.mxu0 0.0
        %2104 = vmatprep.mubr.f32.mxu0 0.0
        %2105 = vmatmul.mubr.f32.gmra.mrb[0].mxu0 %v2035
        %v2106 = vpop.f32.mrb[0].mxu0
        %v2107 = vadd.f32 0.0, %v2106
        %v2108 = vpop.f32.mrb[0].mxu0
        %2109 = vmatprep.mubr.f32.mxu0 0.0
        %2110 = vmatmul.mubr.f32.gmra.mrb[0].mxu0 %v2038
        %v2111 = vpop.f32.mrb[0].mxu0
        %v2112 = vadd.f32 0.0, %v2111
        %v2113 = vpop.f32.mrb[0].mxu0
        %2114 = vdwg.mxu0
        %v2116 = vsel %vm2033, %v1920, 0
        %v2119 = vsel %vm2033, %v1921, 0
        %2121 = vmatprep.subr.mxu0 0.0
        %2122 = vmatpush1.msra.mxu0 %v1912
        %2123 = vmatprep.subr.mxu0 0.0
        %2124 = vmatpush1.msra.mxu0 %v1917
        %2125 = vmatprep.subr.mxu0 0.0
        %2126 = vmatpush1.msra.mxu0 0.0
        %2127 = vmatprep.subr.mxu0 0.0
        %2128 = vmatpush1.msra.mxu0 0.0
        %2129 = vmatprep.subr.mxu0 0.0
        %2130 = vmatpush1.msra.mxu0 0.0
        %2131 = vmatprep.subr.mxu0 0.0
        %2132 = vmatpush1.msra.mxu0 0.0
        %2133 = vmatprep.subr.mxu0 0.0
        %2134 = vmatpush1.msra.mxu0 0.0
        %2135 = vmatprep.subr.mxu0 0.0
        %2136 = vmatpush1.msra.mxu0 0.0
        %2137 = vmatprep.subr.mxu0 0.0
        %2138 = vmatpush1.msra.mxu0 0.0
        %2139 = vmatprep.subr.mxu0 0.0
        %2140 = vmatpush1.msra.mxu0 0.0
        %2141 = vmatprep.subr.mxu0 0.0
        %2142 = vmatpush1.msra.mxu0 0.0
        %2143 = vmatprep.subr.mxu0 0.0
        %2144 = vmatpush1.msra.mxu0 0.0
        %2145 = vmatprep.subr.mxu0 0.0
        %2146 = vmatpush1.msra.mxu0 0.0
        %2147 = vmatprep.subr.mxu0 0.0
        %2148 = vmatpush1.msra.mxu0 0.0
        %2149 = vmatprep.subr.mxu0 0.0
        %2150 = vmatpush1.msra.mxu0 0.0
        %2151 = vmatprep.subr.mxu0 0.0
        %2152 = vmatpush1.msra.mxu0 0.0
        %2153 = vmatprep.subr.mxu0 0.0
        %2154 = vmatpush1.msra.mxu0 0.0
        %2155 = vmatprep.subr.mxu0 0.0
        %2156 = vmatpush1.msra.mxu0 0.0
        %2157 = vmatprep.subr.mxu0 0.0
        %2158 = vmatpush1.msra.mxu0 0.0
        %2159 = vmatprep.subr.mxu0 0.0
        %2160 = vmatpush1.msra.mxu0 0.0
        %2161 = vmatprep.subr.mxu0 0.0
        %2162 = vmatpush1.msra.mxu0 0.0
        %2163 = vmatprep.subr.mxu0 0.0
        %2164 = vmatpush1.msra.mxu0 0.0
        %2165 = vmatprep.subr.mxu0 0.0
        %2166 = vmatpush1.msra.mxu0 0.0
        %2167 = vmatprep.subr.mxu0 0.0
        %2168 = vmatpush1.msra.mxu0 0.0
        %2169 = vmatprep.subr.mxu0 0.0
        %2170 = vmatpush1.msra.mxu0 0.0
        %2171 = vmatprep.subr.mxu0 0.0
        %2172 = vmatpush1.msra.mxu0 0.0
        %2173 = vmatprep.subr.mxu0 0.0
        %2174 = vmatpush1.msra.mxu0 0.0
        %2175 = vmatprep.subr.mxu0 0.0
        %2176 = vmatpush1.msra.mxu0 0.0
        %2177 = vmatprep.subr.mxu0 0.0
        %2178 = vmatpush1.msra.mxu0 0.0
        %2179 = vmatprep.subr.mxu0 0.0
        %2180 = vmatpush1.msra.mxu0 0.0
        %2181 = vmatprep.subr.mxu0 0.0
        %2182 = vmatpush1.msra.mxu0 0.0
        %2183 = vmatprep.subr.mxu0 0.0
        %2184 = vmatpush1.msra.mxu0 0.0
        %2185 = vmatprep.mubr.f32.mxu0 0.0
        %2186 = vmatmul.mubr.f32.gmra.mrb[0].mxu0 %v2116
        %v2187 = vpop.f32.mrb[0].mxu0
        %v2188 = vadd.f32 %v2107, %v2187
        %v2189 = vpop.f32.mrb[0].mxu0
        %2190 = vmatprep.mubr.f32.mxu0 0.0
        %2191 = vmatmul.mubr.f32.gmra.mrb[0].mxu0 %v2119
        %v2192 = vpop.f32.mrb[0].mxu0
        %v2193 = vadd.f32 %v2112, %v2192
        %v2194 = vpop.f32.mrb[0].mxu0
        %2195 = vdwg.mxu0
        %s2196 = scalar_lea.vmem [#allocation10], 512
        %v2197 = vld [vmem:[%s2196] sm:$0xff]
        %v2198 = vld [vmem:[%s2196 + $0x8] sm:$0xff]
        %v2199 = vld [vmem:[%s2196 + $0x10] sm:$0xff]
        %v2200 = vld [vmem:[%s2196 + $0x18] sm:$0xff]
        %v2201 = vld [vmem:[%s2196 + $0x20] sm:$0xff]
        %v2202 = vld [vmem:[%s2196 + $0x28] sm:$0xff]
        %v2203 = vld [vmem:[%s2196 + $0x30] sm:$0xff]
        %v2204 = vld [vmem:[%s2196 + $0x38] sm:$0xff]
        %v2205 = vld [vmem:[%s2196 + $0x40] sm:$0xff]
        %v2206 = vld [vmem:[%s2196 + $0x48] sm:$0xff]
        %v2207 = vld [vmem:[%s2196 + $0x50] sm:$0xff]
        %v2208 = vld [vmem:[%s2196 + $0x58] sm:$0xff]
        %v2209 = vld [vmem:[%s2196 + $0x60] sm:$0xff]
        %v2210 = vld [vmem:[%s2196 + $0x68] sm:$0xff]
        %v2211 = vld [vmem:[%s2196 + $0x70] sm:$0xff]
        %v2212 = vld [vmem:[%s2196 + $0x78] sm:$0xff]
        %v2213 = vld [vmem:[%s2196 + $0x80] sm:$0xff]
        %v2214 = vld [vmem:[%s2196 + $0x88] sm:$0xff]
        %v2215 = vld [vmem:[%s2196 + $0x90] sm:$0xff]
        %v2216 = vld [vmem:[%s2196 + $0x98] sm:$0xff]
        %v2217 = vld [vmem:[%s2196 + $0xa0] sm:$0xff]
        %v2218 = vld [vmem:[%s2196 + $0xa8] sm:$0xff]
        %v2219 = vld [vmem:[%s2196 + $0xb0] sm:$0xff]
        %v2220 = vld [vmem:[%s2196 + $0xb8] sm:$0xff]
        %v2221 = vld [vmem:[%s2196 + $0xc0] sm:$0xff]
        %v2222 = vld [vmem:[%s2196 + $0xc8] sm:$0xff]
        %v2223 = vld [vmem:[%s2196 + $0xd0] sm:$0xff]
        %v2224 = vld [vmem:[%s2196 + $0xd8] sm:$0xff]
        %v2225 = vld [vmem:[%s2196 + $0xe0] sm:$0xff]
        %v2226 = vld [vmem:[%s2196 + $0xe8] sm:$0xff]
        %v2227 = vld [vmem:[%s2196 + $0xf0] sm:$0xff]
        %v2228 = vld [vmem:[%s2196 + $0xf8] sm:$0xff]
        %2229 = vmatprep.subr.mxu0 0.0
        %2230 = vmatpush1.msra.mxu0 %v2197
        %2231 = vmatprep.subr.mxu0 0.0
        %2232 = vmatpush1.msra.mxu0 %v2198
        %2233 = vmatprep.subr.mxu0 0.0
        %2234 = vmatpush1.msra.mxu0 %v2199
        %2235 = vmatprep.subr.mxu0 0.0
        %2236 = vmatpush1.msra.mxu0 %v2200
        %2237 = vmatprep.subr.mxu0 0.0
        %2238 = vmatpush1.msra.mxu0 %v2201
        %2239 = vmatprep.subr.mxu0 0.0
        %2240 = vmatpush1.msra.mxu0 %v2202
        %2241 = vmatprep.subr.mxu0 0.0
        %2242 = vmatpush1.msra.mxu0 %v2203
        %2243 = vmatprep.subr.mxu0 0.0
        %2244 = vmatpush1.msra.mxu0 %v2204
        %2245 = vmatprep.subr.mxu0 0.0
        %2246 = vmatpush1.msra.mxu0 %v2205
        %2247 = vmatprep.subr.mxu0 0.0
        %2248 = vmatpush1.msra.mxu0 %v2206
        %2249 = vmatprep.subr.mxu0 0.0
        %2250 = vmatpush1.msra.mxu0 %v2207
        %2251 = vmatprep.subr.mxu0 0.0
        %2252 = vmatpush1.msra.mxu0 %v2208
        %2253 = vmatprep.subr.mxu0 0.0
        %2254 = vmatpush1.msra.mxu0 %v2209
        %2255 = vmatprep.subr.mxu0 0.0
        %2256 = vmatpush1.msra.mxu0 %v2210
        %2257 = vmatprep.subr.mxu0 0.0
        %2258 = vmatpush1.msra.mxu0 %v2211
        %2259 = vmatprep.subr.mxu0 0.0
        %2260 = vmatpush1.msra.mxu0 %v2212
        %2261 = vmatprep.subr.mxu0 0.0
        %2262 = vmatpush1.msra.mxu0 %v2213
        %2263 = vmatprep.subr.mxu0 0.0
        %2264 = vmatpush1.msra.mxu0 %v2214
        %2265 = vmatprep.subr.mxu0 0.0
        %2266 = vmatpush1.msra.mxu0 %v2215
        %2267 = vmatprep.subr.mxu0 0.0
        %2268 = vmatpush1.msra.mxu0 %v2216
        %2269 = vmatprep.subr.mxu0 0.0
        %2270 = vmatpush1.msra.mxu0 %v2217
        %2271 = vmatprep.subr.mxu0 0.0
        %2272 = vmatpush1.msra.mxu0 %v2218
        %2273 = vmatprep.subr.mxu0 0.0
        %2274 = vmatpush1.msra.mxu0 %v2219
        %2275 = vmatprep.subr.mxu0 0.0
        %2276 = vmatpush1.msra.mxu0 %v2220
        %2277 = vmatprep.subr.mxu0 0.0
        %2278 = vmatpush1.msra.mxu0 %v2221
        %2279 = vmatprep.subr.mxu0 0.0
        %2280 = vmatpush1.msra.mxu0 %v2222
        %2281 = vmatprep.subr.mxu0 0.0
        %2282 = vmatpush1.msra.mxu0 %v2223
        %2283 = vmatprep.subr.mxu0 0.0
        %2284 = vmatpush1.msra.mxu0 %v2224
        %2285 = vmatprep.subr.mxu0 0.0
        %2286 = vmatpush1.msra.mxu0 %v2225
        %2287 = vmatprep.subr.mxu0 0.0
        %2288 = vmatpush1.msra.mxu0 %v2226
        %2289 = vmatprep.subr.mxu0 0.0
        %2290 = vmatpush1.msra.mxu0 %v2227
        %2291 = vmatprep.subr.mxu0 0.0
        %2292 = vmatpush1.msra.mxu0 %v2228
        %2293 = vmatprep.mubr.f32.mxu0 %v1810
        %2294 = vmatmul.mubr.f32.gmra.mrb[0].mxu0 %v1809
        %v2295 = vpop.f32.mrb[0].mxu0
        %v2296 = vadd.f32 0.0, %v2295
        %v2297 = vpop.f32.mrb[0].mxu0
        %2298 = vmatprep.mubr.f32.mxu0 %v1812
        %2299 = vmatmul.mubr.f32.gmra.mrb[0].mxu0 %v1811
        %v2300 = vpop.f32.mrb[0].mxu0
        %v2301 = vadd.f32 0.0, %v2300
        %v2302 = vpop.f32.mrb[0].mxu0
        %2303 = vdwg.mxu0
        %s2304 = scalar_lea.vmem [#allocation5], 32
        %v2305 = vld [vmem:[%s2304] sm:$0xff]
        %v2306 = vld [vmem:[%s2304 + $0x8] sm:$0xff]
        %v2308 = vsel %vm2033, %v2305, 0
        %v2311 = vsel %vm2033, %v2306, 0
        %2313 = vmatprep.subr.mxu0 0.0
        %2314 = vmatpush1.msra.mxu0 %v2296
        %2315 = vmatprep.subr.mxu0 0.0
        %2316 = vmatpush1.msra.mxu0 %v2301
        %2317 = vmatprep.subr.mxu0 0.0
        %2318 = vmatpush1.msra.mxu0 0.0
        %2319 = vmatprep.subr.mxu0 0.0
        %2320 = vmatpush1.msra.mxu0 0.0
        %2321 = vmatprep.subr.mxu0 0.0
        %2322 = vmatpush1.msra.mxu0 0.0
        %2323 = vmatprep.subr.mxu0 0.0
        %2324 = vmatpush1.msra.mxu0 0.0
        %2325 = vmatprep.subr.mxu0 0.0
        %2326 = vmatpush1.msra.mxu0 0.0
        %2327 = vmatprep.subr.mxu0 0.0
        %2328 = vmatpush1.msra.mxu0 0.0
        %2329 = vmatprep.subr.mxu0 0.0
        %2330 = vmatpush1.msra.mxu0 0.0
        %2331 = vmatprep.subr.mxu0 0.0
        %2332 = vmatpush1.msra.mxu0 0.0
        %2333 = vmatprep.subr.mxu0 0.0
        %2334 = vmatpush1.msra.mxu0 0.0
        %2335 = vmatprep.subr.mxu0 0.0
        %2336 = vmatpush1.msra.mxu0 0.0
        %2337 = vmatprep.subr.mxu0 0.0
        %2338 = vmatpush1.msra.mxu0 0.0
        %2339 = vmatprep.subr.mxu0 0.0
        %2340 = vmatpush1.msra.mxu0 0.0
        %2341 = vmatprep.subr.mxu0 0.0
        %2342 = vmatpush1.msra.mxu0 0.0
        %2343 = vmatprep.subr.mxu0 0.0
        %2344 = vmatpush1.msra.mxu0 0.0
        %2345 = vmatprep.subr.mxu0 0.0
        %2346 = vmatpush1.msra.mxu0 0.0
        %2347 = vmatprep.subr.mxu0 0.0
        %2348 = vmatpush1.msra.mxu0 0.0
        %2349 = vmatprep.subr.mxu0 0.0
        %2350 = vmatpush1.msra.mxu0 0.0
        %2351 = vmatprep.subr.mxu0 0.0
        %2352 = vmatpush1.msra.mxu0 0.0
        %2353 = vmatprep.subr.mxu0 0.0
        %2354 = vmatpush1.msra.mxu0 0.0
        %2355 = vmatprep.subr.mxu0 0.0
        %2356 = vmatpush1.msra.mxu0 0.0
        %2357 = vmatprep.subr.mxu0 0.0
        %2358 = vmatpush1.msra.mxu0 0.0
        %2359 = vmatprep.subr.mxu0 0.0
        %2360 = vmatpush1.msra.mxu0 0.0
        %2361 = vmatprep.subr.mxu0 0.0
        %2362 = vmatpush1.msra.mxu0 0.0
        %2363 = vmatprep.subr.mxu0 0.0
        %2364 = vmatpush1.msra.mxu0 0.0
        %2365 = vmatprep.subr.mxu0 0.0
        %2366 = vmatpush1.msra.mxu0 0.0
        %2367 = vmatprep.subr.mxu0 0.0
        %2368 = vmatpush1.msra.mxu0 0.0
        %2369 = vmatprep.subr.mxu0 0.0
        %2370 = vmatpush1.msra.mxu0 0.0
        %2371 = vmatprep.subr.mxu0 0.0
        %2372 = vmatpush1.msra.mxu0 0.0
        %2373 = vmatprep.subr.mxu0 0.0
        %2374 = vmatpush1.msra.mxu0 0.0
        %2375 = vmatprep.subr.mxu0 0.0
        %2376 = vmatpush1.msra.mxu0 0.0
        %2377 = vmatprep.mubr.f32.mxu0 0.0
        %2378 = vmatmul.mubr.f32.gmra.mrb[0].mxu0 %v2308
        %v2379 = vpop.f32.mrb[0].mxu0
        %v2380 = vadd.f32 0.0, %v2379
        %v2381 = vpop.f32.mrb[0].mxu0
        %2382 = vmatprep.mubr.f32.mxu0 0.0
        %2383 = vmatmul.mubr.f32.gmra.mrb[0].mxu0 %v2311
        %v2384 = vpop.f32.mrb[0].mxu0
        %v2385 = vadd.f32 0.0, %v2384
        %v2386 = vpop.f32.mrb[0].mxu0
        %2387 = vdwg.mxu0
        %v2388 = vadd.f32 %v2188, %v2380
        %v2389 = vadd.f32 %v2193, %v2385
        %s2390 = scalar_lea.vmem [#allocation10], 768
        %v2391 = vld [vmem:[%s2390] sm:$0xff]
        %v2392 = vld [vmem:[%s2390 + $0x8] sm:$0xff]
        %v2393 = vld [vmem:[%s2390 + $0x10] sm:$0xff]
        %v2394 = vld [vmem:[%s2390 + $0x18] sm:$0xff]
        %v2395 = vld [vmem:[%s2390 + $0x20] sm:$0xff]
        %v2396 = vld [vmem:[%s2390 + $0x28] sm:$0xff]
        %v2397 = vld [vmem:[%s2390 + $0x30] sm:$0xff]
        %v2398 = vld [vmem:[%s2390 + $0x38] sm:$0xff]
        %v2399 = vld [vmem:[%s2390 + $0x40] sm:$0xff]
        %v2400 = vld [vmem:[%s2390 + $0x48] sm:$0xff]
        %v2401 = vld [vmem:[%s2390 + $0x50] sm:$0xff]
        %v2402 = vld [vmem:[%s2390 + $0x58] sm:$0xff]
        %v2403 = vld [vmem:[%s2390 + $0x60] sm:$0xff]
        %v2404 = vld [vmem:[%s2390 + $0x68] sm:$0xff]
        %v2405 = vld [vmem:[%s2390 + $0x70] sm:$0xff]
        %v2406 = vld [vmem:[%s2390 + $0x78] sm:$0xff]
        %v2407 = vld [vmem:[%s2390 + $0x80] sm:$0xff]
        %v2408 = vld [vmem:[%s2390 + $0x88] sm:$0xff]
        %v2409 = vld [vmem:[%s2390 + $0x90] sm:$0xff]
        %v2410 = vld [vmem:[%s2390 + $0x98] sm:$0xff]
        %v2411 = vld [vmem:[%s2390 + $0xa0] sm:$0xff]
        %v2412 = vld [vmem:[%s2390 + $0xa8] sm:$0xff]
        %v2413 = vld [vmem:[%s2390 + $0xb0] sm:$0xff]
        %v2414 = vld [vmem:[%s2390 + $0xb8] sm:$0xff]
        %v2415 = vld [vmem:[%s2390 + $0xc0] sm:$0xff]
        %v2416 = vld [vmem:[%s2390 + $0xc8] sm:$0xff]
        %v2417 = vld [vmem:[%s2390 + $0xd0] sm:$0xff]
        %v2418 = vld [vmem:[%s2390 + $0xd8] sm:$0xff]
        %v2419 = vld [vmem:[%s2390 + $0xe0] sm:$0xff]
        %v2420 = vld [vmem:[%s2390 + $0xe8] sm:$0xff]
        %v2421 = vld [vmem:[%s2390 + $0xf0] sm:$0xff]
        %v2422 = vld [vmem:[%s2390 + $0xf8] sm:$0xff]
        %2423 = vmatprep.subr.mxu0 0.0
        %2424 = vmatpush1.msra.mxu0 %v2391
        %2425 = vmatprep.subr.mxu0 0.0
        %2426 = vmatpush1.msra.mxu0 %v2392
        %2427 = vmatprep.subr.mxu0 0.0
        %2428 = vmatpush1.msra.mxu0 %v2393
        %2429 = vmatprep.subr.mxu0 0.0
        %2430 = vmatpush1.msra.mxu0 %v2394
        %2431 = vmatprep.subr.mxu0 0.0
        %2432 = vmatpush1.msra.mxu0 %v2395
        %2433 = vmatprep.subr.mxu0 0.0
        %2434 = vmatpush1.msra.mxu0 %v2396
        %2435 = vmatprep.subr.mxu0 0.0
        %2436 = vmatpush1.msra.mxu0 %v2397
        %2437 = vmatprep.subr.mxu0 0.0
        %2438 = vmatpush1.msra.mxu0 %v2398
        %2439 = vmatprep.subr.mxu0 0.0
        %2440 = vmatpush1.msra.mxu0 %v2399
        %2441 = vmatprep.subr.mxu0 0.0
        %2442 = vmatpush1.msra.mxu0 %v2400
        %2443 = vmatprep.subr.mxu0 0.0
        %2444 = vmatpush1.msra.mxu0 %v2401
        %2445 = vmatprep.subr.mxu0 0.0
        %2446 = vmatpush1.msra.mxu0 %v2402
        %2447 = vmatprep.subr.mxu0 0.0
        %2448 = vmatpush1.msra.mxu0 %v2403
        %2449 = vmatprep.subr.mxu0 0.0
        %2450 = vmatpush1.msra.mxu0 %v2404
        %2451 = vmatprep.subr.mxu0 0.0
        %2452 = vmatpush1.msra.mxu0 %v2405
        %2453 = vmatprep.subr.mxu0 0.0
        %2454 = vmatpush1.msra.mxu0 %v2406
        %2455 = vmatprep.subr.mxu0 0.0
        %2456 = vmatpush1.msra.mxu0 %v2407
        %2457 = vmatprep.subr.mxu0 0.0
        %2458 = vmatpush1.msra.mxu0 %v2408
        %2459 = vmatprep.subr.mxu0 0.0
        %2460 = vmatpush1.msra.mxu0 %v2409
        %2461 = vmatprep.subr.mxu0 0.0
        %2462 = vmatpush1.msra.mxu0 %v2410
        %2463 = vmatprep.subr.mxu0 0.0
        %2464 = vmatpush1.msra.mxu0 %v2411
        %2465 = vmatprep.subr.mxu0 0.0
        %2466 = vmatpush1.msra.mxu0 %v2412
        %2467 = vmatprep.subr.mxu0 0.0
        %2468 = vmatpush1.msra.mxu0 %v2413
        %2469 = vmatprep.subr.mxu0 0.0
        %2470 = vmatpush1.msra.mxu0 %v2414
        %2471 = vmatprep.subr.mxu0 0.0
        %2472 = vmatpush1.msra.mxu0 %v2415
        %2473 = vmatprep.subr.mxu0 0.0
        %2474 = vmatpush1.msra.mxu0 %v2416
        %2475 = vmatprep.subr.mxu0 0.0
        %2476 = vmatpush1.msra.mxu0 %v2417
        %2477 = vmatprep.subr.mxu0 0.0
        %2478 = vmatpush1.msra.mxu0 %v2418
        %2479 = vmatprep.subr.mxu0 0.0
        %2480 = vmatpush1.msra.mxu0 %v2419
        %2481 = vmatprep.subr.mxu0 0.0
        %2482 = vmatpush1.msra.mxu0 %v2420
        %2483 = vmatprep.subr.mxu0 0.0
        %2484 = vmatpush1.msra.mxu0 %v2421
        %2485 = vmatprep.subr.mxu0 0.0
        %2486 = vmatpush1.msra.mxu0 %v2422
        %2487 = vmatprep.mubr.f32.mxu0 %v1810
        %2488 = vmatmul.mubr.f32.gmra.mrb[0].mxu0 %v1809
        %v2489 = vpop.f32.mrb[0].mxu0
        %v2490 = vadd.f32 0.0, %v2489
        %v2491 = vpop.f32.mrb[0].mxu0
        %2492 = vmatprep.mubr.f32.mxu0 %v1812
        %2493 = vmatmul.mubr.f32.gmra.mrb[0].mxu0 %v1811
        %v2494 = vpop.f32.mrb[0].mxu0
        %v2495 = vadd.f32 0.0, %v2494
        %v2496 = vpop.f32.mrb[0].mxu0
        %2497 = vdwg.mxu0
        %s2498 = scalar_lea.vmem [#allocation5], 48
        %v2499 = vld [vmem:[%s2498] sm:$0xff]
        %v2500 = vld [vmem:[%s2498 + $0x8] sm:$0xff]
        %v2502 = vsel %vm2033, %v2499, 0
        %v2505 = vsel %vm2033, %v2500, 0
        %2507 = vmatprep.subr.mxu0 0.0
        %2508 = vmatpush1.msra.mxu0 %v2490
        %2509 = vmatprep.subr.mxu0 0.0
        %2510 = vmatpush1.msra.mxu0 %v2495
        %2511 = vmatprep.subr.mxu0 0.0
        %2512 = vmatpush1.msra.mxu0 0.0
        %2513 = vmatprep.subr.mxu0 0.0
        %2514 = vmatpush1.msra.mxu0 0.0
        %2515 = vmatprep.subr.mxu0 0.0
        %2516 = vmatpush1.msra.mxu0 0.0
        %2517 = vmatprep.subr.mxu0 0.0
        %2518 = vmatpush1.msra.mxu0 0.0
        %2519 = vmatprep.subr.mxu0 0.0
        %2520 = vmatpush1.msra.mxu0 0.0
        %2521 = vmatprep.subr.mxu0 0.0
        %2522 = vmatpush1.msra.mxu0 0.0
        %2523 = vmatprep.subr.mxu0 0.0
        %2524 = vmatpush1.msra.mxu0 0.0
        %2525 = vmatprep.subr.mxu0 0.0
        %2526 = vmatpush1.msra.mxu0 0.0
        %2527 = vmatprep.subr.mxu0 0.0
        %2528 = vmatpush1.msra.mxu0 0.0
        %2529 = vmatprep.subr.mxu0 0.0
        %2530 = vmatpush1.msra.mxu0 0.0
        %2531 = vmatprep.subr.mxu0 0.0
        %2532 = vmatpush1.msra.mxu0 0.0
        %2533 = vmatprep.subr.mxu0 0.0
        %2534 = vmatpush1.msra.mxu0 0.0
        %2535 = vmatprep.subr.mxu0 0.0
        %2536 = vmatpush1.msra.mxu0 0.0
        %2537 = vmatprep.subr.mxu0 0.0
        %2538 = vmatpush1.msra.mxu0 0.0
        %2539 = vmatprep.subr.mxu0 0.0
        %2540 = vmatpush1.msra.mxu0 0.0
        %2541 = vmatprep.subr.mxu0 0.0
        %2542 = vmatpush1.msra.mxu0 0.0
        %2543 = vmatprep.subr.mxu0 0.0
        %2544 = vmatpush1.msra.mxu0 0.0
        %2545 = vmatprep.subr.mxu0 0.0
        %2546 = vmatpush1.msra.mxu0 0.0
        %2547 = vmatprep.subr.mxu0 0.0
        %2548 = vmatpush1.msra.mxu0 0.0
        %2549 = vmatprep.subr.mxu0 0.0
        %2550 = vmatpush1.msra.mxu0 0.0
        %2551 = vmatprep.subr.mxu0 0.0
        %2552 = vmatpush1.msra.mxu0 0.0
        %2553 = vmatprep.subr.mxu0 0.0
        %2554 = vmatpush1.msra.mxu0 0.0
        %2555 = vmatprep.subr.mxu0 0.0
        %2556 = vmatpush1.msra.mxu0 0.0
        %2557 = vmatprep.subr.mxu0 0.0
        %2558 = vmatpush1.msra.mxu0 0.0
        %2559 = vmatprep.subr.mxu0 0.0
        %2560 = vmatpush1.msra.mxu0 0.0
        %2561 = vmatprep.subr.mxu0 0.0
        %2562 = vmatpush1.msra.mxu0 0.0
        %2563 = vmatprep.subr.mxu0 0.0
        %2564 = vmatpush1.msra.mxu0 0.0
        %2565 = vmatprep.subr.mxu0 0.0
        %2566 = vmatpush1.msra.mxu0 0.0
        %2567 = vmatprep.subr.mxu0 0.0
        %2568 = vmatpush1.msra.mxu0 0.0
        %2569 = vmatprep.subr.mxu0 0.0
        %2570 = vmatpush1.msra.mxu0 0.0
        %2571 = vmatprep.mubr.f32.mxu0 0.0
        %2572 = vmatmul.mubr.f32.gmra.mrb[0].mxu0 %v2502
        %v2573 = vpop.f32.mrb[0].mxu0
        %v2574 = vadd.f32 0.0, %v2573
        %v2575 = vpop.f32.mrb[0].mxu0
        %2576 = vmatprep.mubr.f32.mxu0 0.0
        %2577 = vmatmul.mubr.f32.gmra.mrb[0].mxu0 %v2505
        %v2578 = vpop.f32.mrb[0].mxu0
        %v2579 = vadd.f32 0.0, %v2578
        %v2580 = vpop.f32.mrb[0].mxu0
        %2581 = vdwg.mxu0
        %v2582 = vadd.f32 %v2388, %v2574
        %v2583 = vadd.f32 %v2389, %v2579
        %s2584 = scalar_lea.vmem [#allocation10], 1024
        %v2585 = vld [vmem:[%s2584] sm:$0xff]
        %v2586 = vld [vmem:[%s2584 + $0x8] sm:$0xff]
        %v2587 = vld [vmem:[%s2584 + $0x10] sm:$0xff]
        %v2588 = vld [vmem:[%s2584 + $0x18] sm:$0xff]
        %v2589 = vld [vmem:[%s2584 + $0x20] sm:$0xff]
        %v2590 = vld [vmem:[%s2584 + $0x28] sm:$0xff]
        %v2591 = vld [vmem:[%s2584 + $0x30] sm:$0xff]
        %v2592 = vld [vmem:[%s2584 + $0x38] sm:$0xff]
        %v2593 = vld [vmem:[%s2584 + $0x40] sm:$0xff]
        %v2594 = vld [vmem:[%s2584 + $0x48] sm:$0xff]
        %v2595 = vld [vmem:[%s2584 + $0x50] sm:$0xff]
        %v2596 = vld [vmem:[%s2584 + $0x58] sm:$0xff]
        %v2597 = vld [vmem:[%s2584 + $0x60] sm:$0xff]
        %v2598 = vld [vmem:[%s2584 + $0x68] sm:$0xff]
        %v2599 = vld [vmem:[%s2584 + $0x70] sm:$0xff]
        %v2600 = vld [vmem:[%s2584 + $0x78] sm:$0xff]
        %v2601 = vld [vmem:[%s2584 + $0x80] sm:$0xff]
        %v2602 = vld [vmem:[%s2584 + $0x88] sm:$0xff]
        %v2603 = vld [vmem:[%s2584 + $0x90] sm:$0xff]
        %v2604 = vld [vmem:[%s2584 + $0x98] sm:$0xff]
        %v2605 = vld [vmem:[%s2584 + $0xa0] sm:$0xff]
        %v2606 = vld [vmem:[%s2584 + $0xa8] sm:$0xff]
        %v2607 = vld [vmem:[%s2584 + $0xb0] sm:$0xff]
        %v2608 = vld [vmem:[%s2584 + $0xb8] sm:$0xff]
        %v2609 = vld [vmem:[%s2584 + $0xc0] sm:$0xff]
        %v2610 = vld [vmem:[%s2584 + $0xc8] sm:$0xff]
        %v2611 = vld [vmem:[%s2584 + $0xd0] sm:$0xff]
        %v2612 = vld [vmem:[%s2584 + $0xd8] sm:$0xff]
        %v2613 = vld [vmem:[%s2584 + $0xe0] sm:$0xff]
        %v2614 = vld [vmem:[%s2584 + $0xe8] sm:$0xff]
        %v2615 = vld [vmem:[%s2584 + $0xf0] sm:$0xff]
        %v2616 = vld [vmem:[%s2584 + $0xf8] sm:$0xff]
        %2617 = vmatprep.subr.mxu0 0.0
        %2618 = vmatpush1.msra.mxu0 %v2585
        %2619 = vmatprep.subr.mxu0 0.0
        %2620 = vmatpush1.msra.mxu0 %v2586
        %2621 = vmatprep.subr.mxu0 0.0
        %2622 = vmatpush1.msra.mxu0 %v2587
        %2623 = vmatprep.subr.mxu0 0.0
        %2624 = vmatpush1.msra.mxu0 %v2588
        %2625 = vmatprep.subr.mxu0 0.0
        %2626 = vmatpush1.msra.mxu0 %v2589
        %2627 = vmatprep.subr.mxu0 0.0
        %2628 = vmatpush1.msra.mxu0 %v2590
        %2629 = vmatprep.subr.mxu0 0.0
        %2630 = vmatpush1.msra.mxu0 %v2591
        %2631 = vmatprep.subr.mxu0 0.0
        %2632 = vmatpush1.msra.mxu0 %v2592
        %2633 = vmatprep.subr.mxu0 0.0
        %2634 = vmatpush1.msra.mxu0 %v2593
        %2635 = vmatprep.subr.mxu0 0.0
        %2636 = vmatpush1.msra.mxu0 %v2594
        %2637 = vmatprep.subr.mxu0 0.0
        %2638 = vmatpush1.msra.mxu0 %v2595
        %2639 = vmatprep.subr.mxu0 0.0
        %2640 = vmatpush1.msra.mxu0 %v2596
        %2641 = vmatprep.subr.mxu0 0.0
        %2642 = vmatpush1.msra.mxu0 %v2597
        %2643 = vmatprep.subr.mxu0 0.0
        %2644 = vmatpush1.msra.mxu0 %v2598
        %2645 = vmatprep.subr.mxu0 0.0
        %2646 = vmatpush1.msra.mxu0 %v2599
        %2647 = vmatprep.subr.mxu0 0.0
        %2648 = vmatpush1.msra.mxu0 %v2600
        %2649 = vmatprep.subr.mxu0 0.0
        %2650 = vmatpush1.msra.mxu0 %v2601
        %2651 = vmatprep.subr.mxu0 0.0
        %2652 = vmatpush1.msra.mxu0 %v2602
        %2653 = vmatprep.subr.mxu0 0.0
        %2654 = vmatpush1.msra.mxu0 %v2603
        %2655 = vmatprep.subr.mxu0 0.0
        %2656 = vmatpush1.msra.mxu0 %v2604
        %2657 = vmatprep.subr.mxu0 0.0
        %2658 = vmatpush1.msra.mxu0 %v2605
        %2659 = vmatprep.subr.mxu0 0.0
        %2660 = vmatpush1.msra.mxu0 %v2606
        %2661 = vmatprep.subr.mxu0 0.0
        %2662 = vmatpush1.msra.mxu0 %v2607
        %2663 = vmatprep.subr.mxu0 0.0
        %2664 = vmatpush1.msra.mxu0 %v2608
        %2665 = vmatprep.subr.mxu0 0.0
        %2666 = vmatpush1.msra.mxu0 %v2609
        %2667 = vmatprep.subr.mxu0 0.0
        %2668 = vmatpush1.msra.mxu0 %v2610
        %2669 = vmatprep.subr.mxu0 0.0
        %2670 = vmatpush1.msra.mxu0 %v2611
        %2671 = vmatprep.subr.mxu0 0.0
        %2672 = vmatpush1.msra.mxu0 %v2612
        %2673 = vmatprep.subr.mxu0 0.0
        %2674 = vmatpush1.msra.mxu0 %v2613
        %2675 = vmatprep.subr.mxu0 0.0
        %2676 = vmatpush1.msra.mxu0 %v2614
        %2677 = vmatprep.subr.mxu0 0.0
        %2678 = vmatpush1.msra.mxu0 %v2615
        %2679 = vmatprep.subr.mxu0 0.0
        %2680 = vmatpush1.msra.mxu0 %v2616
        %2681 = vmatprep.mubr.f32.mxu0 %v1810
        %2682 = vmatmul.mubr.f32.gmra.mrb[0].mxu0 %v1809
        %v2683 = vpop.f32.mrb[0].mxu0
        %v2684 = vadd.f32 0.0, %v2683
        %v2685 = vpop.f32.mrb[0].mxu0
        %2686 = vmatprep.mubr.f32.mxu0 %v1812
        %2687 = vmatmul.mubr.f32.gmra.mrb[0].mxu0 %v1811
        %v2688 = vpop.f32.mrb[0].mxu0
        %v2689 = vadd.f32 0.0, %v2688
        %v2690 = vpop.f32.mrb[0].mxu0
        %2691 = vdwg.mxu0
        %s2692 = scalar_lea.vmem [#allocation5], 64
        %v2693 = vld [vmem:[%s2692] sm:$0xff]
        %v2694 = vld [vmem:[%s2692 + $0x8] sm:$0xff]
        %v2696 = vsel %vm2033, %v2693, 0
        %v2699 = vsel %vm2033, %v2694, 0
        %2701 = vmatprep.subr.mxu0 0.0
        %2702 = vmatpush1.msra.mxu0 %v2684
        %2703 = vmatprep.subr.mxu0 0.0
        %2704 = vmatpush1.msra.mxu0 %v2689
        %2705 = vmatprep.subr.mxu0 0.0
        %2706 = vmatpush1.msra.mxu0 0.0
        %2707 = vmatprep.subr.mxu0 0.0
        %2708 = vmatpush1.msra.mxu0 0.0
        %2709 = vmatprep.subr.mxu0 0.0
        %2710 = vmatpush1.msra.mxu0 0.0
        %2711 = vmatprep.subr.mxu0 0.0
        %2712 = vmatpush1.msra.mxu0 0.0
        %2713 = vmatprep.subr.mxu0 0.0
        %2714 = vmatpush1.msra.mxu0 0.0
        %2715 = vmatprep.subr.mxu0 0.0
        %2716 = vmatpush1.msra.mxu0 0.0
        %2717 = vmatprep.subr.mxu0 0.0
        %2718 = vmatpush1.msra.mxu0 0.0
        %2719 = vmatprep.subr.mxu0 0.0
        %2720 = vmatpush1.msra.mxu0 0.0
        %2721 = vmatprep.subr.mxu0 0.0
        %2722 = vmatpush1.msra.mxu0 0.0
        %2723 = vmatprep.subr.mxu0 0.0
        %2724 = vmatpush1.msra.mxu0 0.0
        %2725 = vmatprep.subr.mxu0 0.0
        %2726 = vmatpush1.msra.mxu0 0.0
        %2727 = vmatprep.subr.mxu0 0.0
        %2728 = vmatpush1.msra.mxu0 0.0
        %2729 = vmatprep.subr.mxu0 0.0
        %2730 = vmatpush1.msra.mxu0 0.0
        %2731 = vmatprep.subr.mxu0 0.0
        %2732 = vmatpush1.msra.mxu0 0.0
        %2733 = vmatprep.subr.mxu0 0.0
        %2734 = vmatpush1.msra.mxu0 0.0
        %2735 = vmatprep.subr.mxu0 0.0
        %2736 = vmatpush1.msra.mxu0 0.0
        %2737 = vmatprep.subr.mxu0 0.0
        %2738 = vmatpush1.msra.mxu0 0.0
        %2739 = vmatprep.subr.mxu0 0.0
        %2740 = vmatpush1.msra.mxu0 0.0
        %2741 = vmatprep.subr.mxu0 0.0
        %2742 = vmatpush1.msra.mxu0 0.0
        %2743 = vmatprep.subr.mxu0 0.0
        %2744 = vmatpush1.msra.mxu0 0.0
        %2745 = vmatprep.subr.mxu0 0.0
        %2746 = vmatpush1.msra.mxu0 0.0
        %2747 = vmatprep.subr.mxu0 0.0
        %2748 = vmatpush1.msra.mxu0 0.0
        %2749 = vmatprep.subr.mxu0 0.0
        %2750 = vmatpush1.msra.mxu0 0.0
        %2751 = vmatprep.subr.mxu0 0.0
        %2752 = vmatpush1.msra.mxu0 0.0
        %2753 = vmatprep.subr.mxu0 0.0
        %2754 = vmatpush1.msra.mxu0 0.0
        %2755 = vmatprep.subr.mxu0 0.0
        %2756 = vmatpush1.msra.mxu0 0.0
        %2757 = vmatprep.subr.mxu0 0.0
        %2758 = vmatpush1.msra.mxu0 0.0
        %2759 = vmatprep.subr.mxu0 0.0
        %2760 = vmatpush1.msra.mxu0 0.0
        %2761 = vmatprep.subr.mxu0 0.0
        %2762 = vmatpush1.msra.mxu0 0.0
        %2763 = vmatprep.subr.mxu0 0.0
        %2764 = vmatpush1.msra.mxu0 0.0
        %2765 = vmatprep.mubr.f32.mxu0 0.0
        %2766 = vmatmul.mubr.f32.gmra.mrb[0].mxu0 %v2696
        %v2767 = vpop.f32.mrb[0].mxu0
        %v2768 = vadd.f32 0.0, %v2767
        %v2769 = vpop.f32.mrb[0].mxu0
        %2770 = vmatprep.mubr.f32.mxu0 0.0
        %2771 = vmatmul.mubr.f32.gmra.mrb[0].mxu0 %v2699
        %v2772 = vpop.f32.mrb[0].mxu0
        %v2773 = vadd.f32 0.0, %v2772
        %v2774 = vpop.f32.mrb[0].mxu0
        %2775 = vdwg.mxu0
        %v2776 = vadd.f32 %v2582, %v2768
        %v2777 = vadd.f32 %v2583, %v2773
        %s2778 = scalar_lea.vmem [#allocation10], 1280
        %v2779 = vld [vmem:[%s2778] sm:$0xff]
        %v2780 = vld [vmem:[%s2778 + $0x8] sm:$0xff]
        %v2781 = vld [vmem:[%s2778 + $0x10] sm:$0xff]
        %v2782 = vld [vmem:[%s2778 + $0x18] sm:$0xff]
        %v2783 = vld [vmem:[%s2778 + $0x20] sm:$0xff]
        %v2784 = vld [vmem:[%s2778 + $0x28] sm:$0xff]
        %v2785 = vld [vmem:[%s2778 + $0x30] sm:$0xff]
        %v2786 = vld [vmem:[%s2778 + $0x38] sm:$0xff]
        %v2787 = vld [vmem:[%s2778 + $0x40] sm:$0xff]
        %v2788 = vld [vmem:[%s2778 + $0x48] sm:$0xff]
        %v2789 = vld [vmem:[%s2778 + $0x50] sm:$0xff]
        %v2790 = vld [vmem:[%s2778 + $0x58] sm:$0xff]
        %v2791 = vld [vmem:[%s2778 + $0x60] sm:$0xff]
        %v2792 = vld [vmem:[%s2778 + $0x68] sm:$0xff]
        %v2793 = vld [vmem:[%s2778 + $0x70] sm:$0xff]
        %v2794 = vld [vmem:[%s2778 + $0x78] sm:$0xff]
        %v2795 = vld [vmem:[%s2778 + $0x80] sm:$0xff]
        %v2796 = vld [vmem:[%s2778 + $0x88] sm:$0xff]
        %v2797 = vld [vmem:[%s2778 + $0x90] sm:$0xff]
        %v2798 = vld [vmem:[%s2778 + $0x98] sm:$0xff]
        %v2799 = vld [vmem:[%s2778 + $0xa0] sm:$0xff]
        %v2800 = vld [vmem:[%s2778 + $0xa8] sm:$0xff]
        %v2801 = vld [vmem:[%s2778 + $0xb0] sm:$0xff]
        %v2802 = vld [vmem:[%s2778 + $0xb8] sm:$0xff]
        %v2803 = vld [vmem:[%s2778 + $0xc0] sm:$0xff]
        %v2804 = vld [vmem:[%s2778 + $0xc8] sm:$0xff]
        %v2805 = vld [vmem:[%s2778 + $0xd0] sm:$0xff]
        %v2806 = vld [vmem:[%s2778 + $0xd8] sm:$0xff]
        %v2807 = vld [vmem:[%s2778 + $0xe0] sm:$0xff]
        %v2808 = vld [vmem:[%s2778 + $0xe8] sm:$0xff]
        %v2809 = vld [vmem:[%s2778 + $0xf0] sm:$0xff]
        %v2810 = vld [vmem:[%s2778 + $0xf8] sm:$0xff]
        %2811 = vmatprep.subr.mxu0 0.0
        %2812 = vmatpush1.msra.mxu0 %v2779
        %2813 = vmatprep.subr.mxu0 0.0
        %2814 = vmatpush1.msra.mxu0 %v2780
        %2815 = vmatprep.subr.mxu0 0.0
        %2816 = vmatpush1.msra.mxu0 %v2781
        %2817 = vmatprep.subr.mxu0 0.0
        %2818 = vmatpush1.msra.mxu0 %v2782
        %2819 = vmatprep.subr.mxu0 0.0
        %2820 = vmatpush1.msra.mxu0 %v2783
        %2821 = vmatprep.subr.mxu0 0.0
        %2822 = vmatpush1.msra.mxu0 %v2784
        %2823 = vmatprep.subr.mxu0 0.0
        %2824 = vmatpush1.msra.mxu0 %v2785
        %2825 = vmatprep.subr.mxu0 0.0
        %2826 = vmatpush1.msra.mxu0 %v2786
        %2827 = vmatprep.subr.mxu0 0.0
        %2828 = vmatpush1.msra.mxu0 %v2787
        %2829 = vmatprep.subr.mxu0 0.0
        %2830 = vmatpush1.msra.mxu0 %v2788
        %2831 = vmatprep.subr.mxu0 0.0
        %2832 = vmatpush1.msra.mxu0 %v2789
        %2833 = vmatprep.subr.mxu0 0.0
        %2834 = vmatpush1.msra.mxu0 %v2790
        %2835 = vmatprep.subr.mxu0 0.0
        %2836 = vmatpush1.msra.mxu0 %v2791
        %2837 = vmatprep.subr.mxu0 0.0
        %2838 = vmatpush1.msra.mxu0 %v2792
        %2839 = vmatprep.subr.mxu0 0.0
        %2840 = vmatpush1.msra.mxu0 %v2793
        %2841 = vmatprep.subr.mxu0 0.0
        %2842 = vmatpush1.msra.mxu0 %v2794
        %2843 = vmatprep.subr.mxu0 0.0
        %2844 = vmatpush1.msra.mxu0 %v2795
        %2845 = vmatprep.subr.mxu0 0.0
        %2846 = vmatpush1.msra.mxu0 %v2796
        %2847 = vmatprep.subr.mxu0 0.0
        %2848 = vmatpush1.msra.mxu0 %v2797
        %2849 = vmatprep.subr.mxu0 0.0
        %2850 = vmatpush1.msra.mxu0 %v2798
        %2851 = vmatprep.subr.mxu0 0.0
        %2852 = vmatpush1.msra.mxu0 %v2799
        %2853 = vmatprep.subr.mxu0 0.0
        %2854 = vmatpush1.msra.mxu0 %v2800
        %2855 = vmatprep.subr.mxu0 0.0
        %2856 = vmatpush1.msra.mxu0 %v2801
        %2857 = vmatprep.subr.mxu0 0.0
        %2858 = vmatpush1.msra.mxu0 %v2802
        %2859 = vmatprep.subr.mxu0 0.0
        %2860 = vmatpush1.msra.mxu0 %v2803
        %2861 = vmatprep.subr.mxu0 0.0
        %2862 = vmatpush1.msra.mxu0 %v2804
        %2863 = vmatprep.subr.mxu0 0.0
        %2864 = vmatpush1.msra.mxu0 %v2805
        %2865 = vmatprep.subr.mxu0 0.0
        %2866 = vmatpush1.msra.mxu0 %v2806
        %2867 = vmatprep.subr.mxu0 0.0
        %2868 = vmatpush1.msra.mxu0 %v2807
        %2869 = vmatprep.subr.mxu0 0.0
        %2870 = vmatpush1.msra.mxu0 %v2808
        %2871 = vmatprep.subr.mxu0 0.0
        %2872 = vmatpush1.msra.mxu0 %v2809
        %2873 = vmatprep.subr.mxu0 0.0
        %2874 = vmatpush1.msra.mxu0 %v2810
        %2875 = vmatprep.mubr.f32.mxu0 %v1810
        %2876 = vmatmul.mubr.f32.gmra.mrb[0].mxu0 %v1809
        %v2877 = vpop.f32.mrb[0].mxu0
        %v2878 = vadd.f32 0.0, %v2877
        %v2879 = vpop.f32.mrb[0].mxu0
        %2880 = vmatprep.mubr.f32.mxu0 %v1812
        %2881 = vmatmul.mubr.f32.gmra.mrb[0].mxu0 %v1811
        %v2882 = vpop.f32.mrb[0].mxu0
        %v2883 = vadd.f32 0.0, %v2882
        %v2884 = vpop.f32.mrb[0].mxu0
        %2885 = vdwg.mxu0
        %s2886 = scalar_lea.vmem [#allocation5], 80
        %v2887 = vld [vmem:[%s2886] sm:$0xff]
        %v2888 = vld [vmem:[%s2886 + $0x8] sm:$0xff]
        %v2890 = vsel %vm2033, %v2887, 0
        %v2893 = vsel %vm2033, %v2888, 0
        %2895 = vmatprep.subr.mxu0 0.0
        %2896 = vmatpush1.msra.mxu0 %v2878
        %2897 = vmatprep.subr.mxu0 0.0
        %2898 = vmatpush1.msra.mxu0 %v2883
        %2899 = vmatprep.subr.mxu0 0.0
        %2900 = vmatpush1.msra.mxu0 0.0
        %2901 = vmatprep.subr.mxu0 0.0
        %2902 = vmatpush1.msra.mxu0 0.0
        %2903 = vmatprep.subr.mxu0 0.0
        %2904 = vmatpush1.msra.mxu0 0.0
        %2905 = vmatprep.subr.mxu0 0.0
        %2906 = vmatpush1.msra.mxu0 0.0
        %2907 = vmatprep.subr.mxu0 0.0
        %2908 = vmatpush1.msra.mxu0 0.0
        %2909 = vmatprep.subr.mxu0 0.0
        %2910 = vmatpush1.msra.mxu0 0.0
        %2911 = vmatprep.subr.mxu0 0.0
        %2912 = vmatpush1.msra.mxu0 0.0
        %2913 = vmatprep.subr.mxu0 0.0
        %2914 = vmatpush1.msra.mxu0 0.0
        %2915 = vmatprep.subr.mxu0 0.0
        %2916 = vmatpush1.msra.mxu0 0.0
        %2917 = vmatprep.subr.mxu0 0.0
        %2918 = vmatpush1.msra.mxu0 0.0
        %2919 = vmatprep.subr.mxu0 0.0
        %2920 = vmatpush1.msra.mxu0 0.0
        %2921 = vmatprep.subr.mxu0 0.0
        %2922 = vmatpush1.msra.mxu0 0.0
        %2923 = vmatprep.subr.mxu0 0.0
        %2924 = vmatpush1.msra.mxu0 0.0
        %2925 = vmatprep.subr.mxu0 0.0
        %2926 = vmatpush1.msra.mxu0 0.0
        %2927 = vmatprep.subr.mxu0 0.0
        %2928 = vmatpush1.msra.mxu0 0.0
        %2929 = vmatprep.subr.mxu0 0.0
        %2930 = vmatpush1.msra.mxu0 0.0
        %2931 = vmatprep.subr.mxu0 0.0
        %2932 = vmatpush1.msra.mxu0 0.0
        %2933 = vmatprep.subr.mxu0 0.0
        %2934 = vmatpush1.msra.mxu0 0.0
        %2935 = vmatprep.subr.mxu0 0.0
        %2936 = vmatpush1.msra.mxu0 0.0
        %2937 = vmatprep.subr.mxu0 0.0
        %2938 = vmatpush1.msra.mxu0 0.0
        %2939 = vmatprep.subr.mxu0 0.0
        %2940 = vmatpush1.msra.mxu0 0.0
        %2941 = vmatprep.subr.mxu0 0.0
        %2942 = vmatpush1.msra.mxu0 0.0
        %2943 = vmatprep.subr.mxu0 0.0
        %2944 = vmatpush1.msra.mxu0 0.0
        %2945 = vmatprep.subr.mxu0 0.0
        %2946 = vmatpush1.msra.mxu0 0.0
        %2947 = vmatprep.subr.mxu0 0.0
        %2948 = vmatpush1.msra.mxu0 0.0
        %2949 = vmatprep.subr.mxu0 0.0
        %2950 = vmatpush1.msra.mxu0 0.0
        %2951 = vmatprep.subr.mxu0 0.0
        %2952 = vmatpush1.msra.mxu0 0.0
        %2953 = vmatprep.subr.mxu0 0.0
        %2954 = vmatpush1.msra.mxu0 0.0
        %2955 = vmatprep.subr.mxu0 0.0
        %2956 = vmatpush1.msra.mxu0 0.0
        %2957 = vmatprep.subr.mxu0 0.0
        %2958 = vmatpush1.msra.mxu0 0.0
        %2959 = vmatprep.mubr.f32.mxu0 0.0
        %2960 = vmatmul.mubr.f32.gmra.mrb[0].mxu0 %v2890
        %v2961 = vpop.f32.mrb[0].mxu0
        %v2962 = vadd.f32 0.0, %v2961
        %v2963 = vpop.f32.mrb[0].mxu0
        %2964 = vmatprep.mubr.f32.mxu0 0.0
        %2965 = vmatmul.mubr.f32.gmra.mrb[0].mxu0 %v2893
        %v2966 = vpop.f32.mrb[0].mxu0
        %v2967 = vadd.f32 0.0, %v2966
        %v2968 = vpop.f32.mrb[0].mxu0
        %2969 = vdwg.mxu0
        %v2970 = vadd.f32 %v2776, %v2962
        %v2971 = vadd.f32 %v2777, %v2967
        %s2972 = scalar_lea.vmem [#allocation10], 1536
        %v2973 = vld [vmem:[%s2972] sm:$0xff]
        %v2974 = vld [vmem:[%s2972 + $0x8] sm:$0xff]
        %v2975 = vld [vmem:[%s2972 + $0x10] sm:$0xff]
        %v2976 = vld [vmem:[%s2972 + $0x18] sm:$0xff]
        %v2977 = vld [vmem:[%s2972 + $0x20] sm:$0xff]
        %v2978 = vld [vmem:[%s2972 + $0x28] sm:$0xff]
        %v2979 = vld [vmem:[%s2972 + $0x30] sm:$0xff]
        %v2980 = vld [vmem:[%s2972 + $0x38] sm:$0xff]
        %v2981 = vld [vmem:[%s2972 + $0x40] sm:$0xff]
        %v2982 = vld [vmem:[%s2972 + $0x48] sm:$0xff]
        %v2983 = vld [vmem:[%s2972 + $0x50] sm:$0xff]
        %v2984 = vld [vmem:[%s2972 + $0x58] sm:$0xff]
        %v2985 = vld [vmem:[%s2972 + $0x60] sm:$0xff]
        %v2986 = vld [vmem:[%s2972 + $0x68] sm:$0xff]
        %v2987 = vld [vmem:[%s2972 + $0x70] sm:$0xff]
        %v2988 = vld [vmem:[%s2972 + $0x78] sm:$0xff]
        %v2989 = vld [vmem:[%s2972 + $0x80] sm:$0xff]
        %v2990 = vld [vmem:[%s2972 + $0x88] sm:$0xff]
        %v2991 = vld [vmem:[%s2972 + $0x90] sm:$0xff]
        %v2992 = vld [vmem:[%s2972 + $0x98] sm:$0xff]
        %v2993 = vld [vmem:[%s2972 + $0xa0] sm:$0xff]
        %v2994 = vld [vmem:[%s2972 + $0xa8] sm:$0xff]
        %v2995 = vld [vmem:[%s2972 + $0xb0] sm:$0xff]
        %v2996 = vld [vmem:[%s2972 + $0xb8] sm:$0xff]
        %v2997 = vld [vmem:[%s2972 + $0xc0] sm:$0xff]
        %v2998 = vld [vmem:[%s2972 + $0xc8] sm:$0xff]
        %v2999 = vld [vmem:[%s2972 + $0xd0] sm:$0xff]
        %v3000 = vld [vmem:[%s2972 + $0xd8] sm:$0xff]
        %v3001 = vld [vmem:[%s2972 + $0xe0] sm:$0xff]
        %v3002 = vld [vmem:[%s2972 + $0xe8] sm:$0xff]
        %v3003 = vld [vmem:[%s2972 + $0xf0] sm:$0xff]
        %v3004 = vld [vmem:[%s2972 + $0xf8] sm:$0xff]
        %3005 = vmatprep.subr.mxu0 0.0
        %3006 = vmatpush1.msra.mxu0 %v2973
        %3007 = vmatprep.subr.mxu0 0.0
        %3008 = vmatpush1.msra.mxu0 %v2974
        %3009 = vmatprep.subr.mxu0 0.0
        %3010 = vmatpush1.msra.mxu0 %v2975
        %3011 = vmatprep.subr.mxu0 0.0
        %3012 = vmatpush1.msra.mxu0 %v2976
        %3013 = vmatprep.subr.mxu0 0.0
        %3014 = vmatpush1.msra.mxu0 %v2977
        %3015 = vmatprep.subr.mxu0 0.0
        %3016 = vmatpush1.msra.mxu0 %v2978
        %3017 = vmatprep.subr.mxu0 0.0
        %3018 = vmatpush1.msra.mxu0 %v2979
        %3019 = vmatprep.subr.mxu0 0.0
        %3020 = vmatpush1.msra.mxu0 %v2980
        %3021 = vmatprep.subr.mxu0 0.0
        %3022 = vmatpush1.msra.mxu0 %v2981
        %3023 = vmatprep.subr.mxu0 0.0
        %3024 = vmatpush1.msra.mxu0 %v2982
        %3025 = vmatprep.subr.mxu0 0.0
        %3026 = vmatpush1.msra.mxu0 %v2983
        %3027 = vmatprep.subr.mxu0 0.0
        %3028 = vmatpush1.msra.mxu0 %v2984
        %3029 = vmatprep.subr.mxu0 0.0
        %3030 = vmatpush1.msra.mxu0 %v2985
        %3031 = vmatprep.subr.mxu0 0.0
        %3032 = vmatpush1.msra.mxu0 %v2986
        %3033 = vmatprep.subr.mxu0 0.0
        %3034 = vmatpush1.msra.mxu0 %v2987
        %3035 = vmatprep.subr.mxu0 0.0
        %3036 = vmatpush1.msra.mxu0 %v2988
        %3037 = vmatprep.subr.mxu0 0.0
        %3038 = vmatpush1.msra.mxu0 %v2989
        %3039 = vmatprep.subr.mxu0 0.0
        %3040 = vmatpush1.msra.mxu0 %v2990
        %3041 = vmatprep.subr.mxu0 0.0
        %3042 = vmatpush1.msra.mxu0 %v2991
        %3043 = vmatprep.subr.mxu0 0.0
        %3044 = vmatpush1.msra.mxu0 %v2992
        %3045 = vmatprep.subr.mxu0 0.0
        %3046 = vmatpush1.msra.mxu0 %v2993
        %3047 = vmatprep.subr.mxu0 0.0
        %3048 = vmatpush1.msra.mxu0 %v2994
        %3049 = vmatprep.subr.mxu0 0.0
        %3050 = vmatpush1.msra.mxu0 %v2995
        %3051 = vmatprep.subr.mxu0 0.0
        %3052 = vmatpush1.msra.mxu0 %v2996
        %3053 = vmatprep.subr.mxu0 0.0
        %3054 = vmatpush1.msra.mxu0 %v2997
        %3055 = vmatprep.subr.mxu0 0.0
        %3056 = vmatpush1.msra.mxu0 %v2998
        %3057 = vmatprep.subr.mxu0 0.0
        %3058 = vmatpush1.msra.mxu0 %v2999
        %3059 = vmatprep.subr.mxu0 0.0
        %3060 = vmatpush1.msra.mxu0 %v3000
        %3061 = vmatprep.subr.mxu0 0.0
        %3062 = vmatpush1.msra.mxu0 %v3001
        %3063 = vmatprep.subr.mxu0 0.0
        %3064 = vmatpush1.msra.mxu0 %v3002
        %3065 = vmatprep.subr.mxu0 0.0
        %3066 = vmatpush1.msra.mxu0 %v3003
        %3067 = vmatprep.subr.mxu0 0.0
        %3068 = vmatpush1.msra.mxu0 %v3004
        %3069 = vmatprep.mubr.f32.mxu0 %v1810
        %3070 = vmatmul.mubr.f32.gmra.mrb[0].mxu0 %v1809
        %v3071 = vpop.f32.mrb[0].mxu0
        %v3072 = vadd.f32 0.0, %v3071
        %v3073 = vpop.f32.mrb[0].mxu0
        %3074 = vmatprep.mubr.f32.mxu0 %v1812
        %3075 = vmatmul.mubr.f32.gmra.mrb[0].mxu0 %v1811
        %v3076 = vpop.f32.mrb[0].mxu0
        %v3077 = vadd.f32 0.0, %v3076
        %v3078 = vpop.f32.mrb[0].mxu0
        %3079 = vdwg.mxu0
        %s3080 = scalar_lea.vmem [#allocation5], 96
        %v3081 = vld [vmem:[%s3080] sm:$0xff]
        %v3082 = vld [vmem:[%s3080 + $0x8] sm:$0xff]
        %v3084 = vsel %vm2033, %v3081, 0
        %v3087 = vsel %vm2033, %v3082, 0
        %3089 = vmatprep.subr.mxu0 0.0
        %3090 = vmatpush1.msra.mxu0 %v3072
        %3091 = vmatprep.subr.mxu0 0.0
        %3092 = vmatpush1.msra.mxu0 %v3077
        %3093 = vmatprep.subr.mxu0 0.0
        %3094 = vmatpush1.msra.mxu0 0.0
        %3095 = vmatprep.subr.mxu0 0.0
        %3096 = vmatpush1.msra.mxu0 0.0
        %3097 = vmatprep.subr.mxu0 0.0
        %3098 = vmatpush1.msra.mxu0 0.0
        %3099 = vmatprep.subr.mxu0 0.0
        %3100 = vmatpush1.msra.mxu0 0.0
        %3101 = vmatprep.subr.mxu0 0.0
        %3102 = vmatpush1.msra.mxu0 0.0
        %3103 = vmatprep.subr.mxu0 0.0
        %3104 = vmatpush1.msra.mxu0 0.0
        %3105 = vmatprep.subr.mxu0 0.0
        %3106 = vmatpush1.msra.mxu0 0.0
        %3107 = vmatprep.subr.mxu0 0.0
        %3108 = vmatpush1.msra.mxu0 0.0
        %3109 = vmatprep.subr.mxu0 0.0
        %3110 = vmatpush1.msra.mxu0 0.0
        %3111 = vmatprep.subr.mxu0 0.0
        %3112 = vmatpush1.msra.mxu0 0.0
        %3113 = vmatprep.subr.mxu0 0.0
        %3114 = vmatpush1.msra.mxu0 0.0
        %3115 = vmatprep.subr.mxu0 0.0
        %3116 = vmatpush1.msra.mxu0 0.0
        %3117 = vmatprep.subr.mxu0 0.0
        %3118 = vmatpush1.msra.mxu0 0.0
        %3119 = vmatprep.subr.mxu0 0.0
        %3120 = vmatpush1.msra.mxu0 0.0
        %3121 = vmatprep.subr.mxu0 0.0
        %3122 = vmatpush1.msra.mxu0 0.0
        %3123 = vmatprep.subr.mxu0 0.0
        %3124 = vmatpush1.msra.mxu0 0.0
        %3125 = vmatprep.subr.mxu0 0.0
        %3126 = vmatpush1.msra.mxu0 0.0
        %3127 = vmatprep.subr.mxu0 0.0
        %3128 = vmatpush1.msra.mxu0 0.0
        %3129 = vmatprep.subr.mxu0 0.0
        %3130 = vmatpush1.msra.mxu0 0.0
        %3131 = vmatprep.subr.mxu0 0.0
        %3132 = vmatpush1.msra.mxu0 0.0
        %3133 = vmatprep.subr.mxu0 0.0
        %3134 = vmatpush1.msra.mxu0 0.0
        %3135 = vmatprep.subr.mxu0 0.0
        %3136 = vmatpush1.msra.mxu0 0.0
        %3137 = vmatprep.subr.mxu0 0.0
        %3138 = vmatpush1.msra.mxu0 0.0
        %3139 = vmatprep.subr.mxu0 0.0
        %3140 = vmatpush1.msra.mxu0 0.0
        %3141 = vmatprep.subr.mxu0 0.0
        %3142 = vmatpush1.msra.mxu0 0.0
        %3143 = vmatprep.subr.mxu0 0.0
        %3144 = vmatpush1.msra.mxu0 0.0
        %3145 = vmatprep.subr.mxu0 0.0
        %3146 = vmatpush1.msra.mxu0 0.0
        %3147 = vmatprep.subr.mxu0 0.0
        %3148 = vmatpush1.msra.mxu0 0.0
        %3149 = vmatprep.subr.mxu0 0.0
        %3150 = vmatpush1.msra.mxu0 0.0
        %3151 = vmatprep.subr.mxu0 0.0
        %3152 = vmatpush1.msra.mxu0 0.0
        %3153 = vmatprep.mubr.f32.mxu0 0.0
        %3154 = vmatmul.mubr.f32.gmra.mrb[0].mxu0 %v3084
        %v3155 = vpop.f32.mrb[0].mxu0
        %v3156 = vadd.f32 0.0, %v3155
        %v3157 = vpop.f32.mrb[0].mxu0
        %3158 = vmatprep.mubr.f32.mxu0 0.0
        %3159 = vmatmul.mubr.f32.gmra.mrb[0].mxu0 %v3087
        %v3160 = vpop.f32.mrb[0].mxu0
        %v3161 = vadd.f32 0.0, %v3160
        %v3162 = vpop.f32.mrb[0].mxu0
        %3163 = vdwg.mxu0
        %v3164 = vadd.f32 %v2970, %v3156
        %v3165 = vadd.f32 %v2971, %v3161
        %s3166 = scalar_lea.vmem [#allocation10], 1792
        %v3167 = vld [vmem:[%s3166] sm:$0xff]
        %v3168 = vld [vmem:[%s3166 + $0x8] sm:$0xff]
        %v3169 = vld [vmem:[%s3166 + $0x10] sm:$0xff]
        %v3170 = vld [vmem:[%s3166 + $0x18] sm:$0xff]
        %v3171 = vld [vmem:[%s3166 + $0x20] sm:$0xff]
        %v3172 = vld [vmem:[%s3166 + $0x28] sm:$0xff]
        %v3173 = vld [vmem:[%s3166 + $0x30] sm:$0xff]
        %v3174 = vld [vmem:[%s3166 + $0x38] sm:$0xff]
        %v3175 = vld [vmem:[%s3166 + $0x40] sm:$0xff]
        %v3176 = vld [vmem:[%s3166 + $0x48] sm:$0xff]
        %v3177 = vld [vmem:[%s3166 + $0x50] sm:$0xff]
        %v3178 = vld [vmem:[%s3166 + $0x58] sm:$0xff]
        %v3179 = vld [vmem:[%s3166 + $0x60] sm:$0xff]
        %v3180 = vld [vmem:[%s3166 + $0x68] sm:$0xff]
        %v3181 = vld [vmem:[%s3166 + $0x70] sm:$0xff]
        %v3182 = vld [vmem:[%s3166 + $0x78] sm:$0xff]
        %v3183 = vld [vmem:[%s3166 + $0x80] sm:$0xff]
        %v3184 = vld [vmem:[%s3166 + $0x88] sm:$0xff]
        %v3185 = vld [vmem:[%s3166 + $0x90] sm:$0xff]
        %v3186 = vld [vmem:[%s3166 + $0x98] sm:$0xff]
        %v3187 = vld [vmem:[%s3166 + $0xa0] sm:$0xff]
        %v3188 = vld [vmem:[%s3166 + $0xa8] sm:$0xff]
        %v3189 = vld [vmem:[%s3166 + $0xb0] sm:$0xff]
        %v3190 = vld [vmem:[%s3166 + $0xb8] sm:$0xff]
        %v3191 = vld [vmem:[%s3166 + $0xc0] sm:$0xff]
        %v3192 = vld [vmem:[%s3166 + $0xc8] sm:$0xff]
        %v3193 = vld [vmem:[%s3166 + $0xd0] sm:$0xff]
        %v3194 = vld [vmem:[%s3166 + $0xd8] sm:$0xff]
        %v3195 = vld [vmem:[%s3166 + $0xe0] sm:$0xff]
        %v3196 = vld [vmem:[%s3166 + $0xe8] sm:$0xff]
        %v3197 = vld [vmem:[%s3166 + $0xf0] sm:$0xff]
        %v3198 = vld [vmem:[%s3166 + $0xf8] sm:$0xff]
        %3199 = vmatprep.subr.mxu0 0.0
        %3200 = vmatpush1.msra.mxu0 %v3167
        %3201 = vmatprep.subr.mxu0 0.0
        %3202 = vmatpush1.msra.mxu0 %v3168
        %3203 = vmatprep.subr.mxu0 0.0
        %3204 = vmatpush1.msra.mxu0 %v3169
        %3205 = vmatprep.subr.mxu0 0.0
        %3206 = vmatpush1.msra.mxu0 %v3170
        %3207 = vmatprep.subr.mxu0 0.0
        %3208 = vmatpush1.msra.mxu0 %v3171
        %3209 = vmatprep.subr.mxu0 0.0
        %3210 = vmatpush1.msra.mxu0 %v3172
        %3211 = vmatprep.subr.mxu0 0.0
        %3212 = vmatpush1.msra.mxu0 %v3173
        %3213 = vmatprep.subr.mxu0 0.0
        %3214 = vmatpush1.msra.mxu0 %v3174
        %3215 = vmatprep.subr.mxu0 0.0
        %3216 = vmatpush1.msra.mxu0 %v3175
        %3217 = vmatprep.subr.mxu0 0.0
        %3218 = vmatpush1.msra.mxu0 %v3176
        %3219 = vmatprep.subr.mxu0 0.0
        %3220 = vmatpush1.msra.mxu0 %v3177
        %3221 = vmatprep.subr.mxu0 0.0
        %3222 = vmatpush1.msra.mxu0 %v3178
        %3223 = vmatprep.subr.mxu0 0.0
        %3224 = vmatpush1.msra.mxu0 %v3179
        %3225 = vmatprep.subr.mxu0 0.0
        %3226 = vmatpush1.msra.mxu0 %v3180
        %3227 = vmatprep.subr.mxu0 0.0
        %3228 = vmatpush1.msra.mxu0 %v3181
        %3229 = vmatprep.subr.mxu0 0.0
        %3230 = vmatpush1.msra.mxu0 %v3182
        %3231 = vmatprep.subr.mxu0 0.0
        %3232 = vmatpush1.msra.mxu0 %v3183
        %3233 = vmatprep.subr.mxu0 0.0
        %3234 = vmatpush1.msra.mxu0 %v3184
        %3235 = vmatprep.subr.mxu0 0.0
        %3236 = vmatpush1.msra.mxu0 %v3185
        %3237 = vmatprep.subr.mxu0 0.0
        %3238 = vmatpush1.msra.mxu0 %v3186
        %3239 = vmatprep.subr.mxu0 0.0
        %3240 = vmatpush1.msra.mxu0 %v3187
        %3241 = vmatprep.subr.mxu0 0.0
        %3242 = vmatpush1.msra.mxu0 %v3188
        %3243 = vmatprep.subr.mxu0 0.0
        %3244 = vmatpush1.msra.mxu0 %v3189
        %3245 = vmatprep.subr.mxu0 0.0
        %3246 = vmatpush1.msra.mxu0 %v3190
        %3247 = vmatprep.subr.mxu0 0.0
        %3248 = vmatpush1.msra.mxu0 %v3191
        %3249 = vmatprep.subr.mxu0 0.0
        %3250 = vmatpush1.msra.mxu0 %v3192
        %3251 = vmatprep.subr.mxu0 0.0
        %3252 = vmatpush1.msra.mxu0 %v3193
        %3253 = vmatprep.subr.mxu0 0.0
        %3254 = vmatpush1.msra.mxu0 %v3194
        %3255 = vmatprep.subr.mxu0 0.0
        %3256 = vmatpush1.msra.mxu0 %v3195
        %3257 = vmatprep.subr.mxu0 0.0
        %3258 = vmatpush1.msra.mxu0 %v3196
        %3259 = vmatprep.subr.mxu0 0.0
        %3260 = vmatpush1.msra.mxu0 %v3197
        %3261 = vmatprep.subr.mxu0 0.0
        %3262 = vmatpush1.msra.mxu0 %v3198
        %3263 = vmatprep.mubr.f32.mxu0 %v1810
        %3264 = vmatmul.mubr.f32.gmra.mrb[0].mxu0 %v1809
        %v3265 = vpop.f32.mrb[0].mxu0
        %v3266 = vadd.f32 0.0, %v3265
        %v3267 = vpop.f32.mrb[0].mxu0
        %3268 = vmatprep.mubr.f32.mxu0 %v1812
        %3269 = vmatmul.mubr.f32.gmra.mrb[0].mxu0 %v1811
        %v3270 = vpop.f32.mrb[0].mxu0
        %v3271 = vadd.f32 0.0, %v3270
        %v3272 = vpop.f32.mrb[0].mxu0
        %3273 = vdwg.mxu0
        %s3274 = scalar_lea.vmem [#allocation5], 112
        %v3275 = vld [vmem:[%s3274] sm:$0xff]
        %v3276 = vld [vmem:[%s3274 + $0x8] sm:$0xff]
        %v3278 = vsel %vm2033, %v3275, 0
        %v3281 = vsel %vm2033, %v3276, 0
        %3283 = vmatprep.subr.mxu0 0.0
        %3284 = vmatpush1.msra.mxu0 %v3266
        %3285 = vmatprep.subr.mxu0 0.0
        %3286 = vmatpush1.msra.mxu0 %v3271
        %3287 = vmatprep.subr.mxu0 0.0
        %3288 = vmatpush1.msra.mxu0 0.0
        %3289 = vmatprep.subr.mxu0 0.0
        %3290 = vmatpush1.msra.mxu0 0.0
        %3291 = vmatprep.subr.mxu0 0.0
        %3292 = vmatpush1.msra.mxu0 0.0
        %3293 = vmatprep.subr.mxu0 0.0
        %3294 = vmatpush1.msra.mxu0 0.0
        %3295 = vmatprep.subr.mxu0 0.0
        %3296 = vmatpush1.msra.mxu0 0.0
        %3297 = vmatprep.subr.mxu0 0.0
        %3298 = vmatpush1.msra.mxu0 0.0
        %3299 = vmatprep.subr.mxu0 0.0
        %3300 = vmatpush1.msra.mxu0 0.0
        %3301 = vmatprep.subr.mxu0 0.0
        %3302 = vmatpush1.msra.mxu0 0.0
        %3303 = vmatprep.subr.mxu0 0.0
        %3304 = vmatpush1.msra.mxu0 0.0
        %3305 = vmatprep.subr.mxu0 0.0
        %3306 = vmatpush1.msra.mxu0 0.0
        %3307 = vmatprep.subr.mxu0 0.0
        %3308 = vmatpush1.msra.mxu0 0.0
        %3309 = vmatprep.subr.mxu0 0.0
        %3310 = vmatpush1.msra.mxu0 0.0
        %3311 = vmatprep.subr.mxu0 0.0
        %3312 = vmatpush1.msra.mxu0 0.0
        %3313 = vmatprep.subr.mxu0 0.0
        %3314 = vmatpush1.msra.mxu0 0.0
        %3315 = vmatprep.subr.mxu0 0.0
        %3316 = vmatpush1.msra.mxu0 0.0
        %3317 = vmatprep.subr.mxu0 0.0
        %3318 = vmatpush1.msra.mxu0 0.0
        %3319 = vmatprep.subr.mxu0 0.0
        %3320 = vmatpush1.msra.mxu0 0.0
        %3321 = vmatprep.subr.mxu0 0.0
        %3322 = vmatpush1.msra.mxu0 0.0
        %3323 = vmatprep.subr.mxu0 0.0
        %3324 = vmatpush1.msra.mxu0 0.0
        %3325 = vmatprep.subr.mxu0 0.0
        %3326 = vmatpush1.msra.mxu0 0.0
        %3327 = vmatprep.subr.mxu0 0.0
        %3328 = vmatpush1.msra.mxu0 0.0
        %3329 = vmatprep.subr.mxu0 0.0
        %3330 = vmatpush1.msra.mxu0 0.0
        %3331 = vmatprep.subr.mxu0 0.0
        %3332 = vmatpush1.msra.mxu0 0.0
        %3333 = vmatprep.subr.mxu0 0.0
        %3334 = vmatpush1.msra.mxu0 0.0
        %3335 = vmatprep.subr.mxu0 0.0
        %3336 = vmatpush1.msra.mxu0 0.0
        %3337 = vmatprep.subr.mxu0 0.0
        %3338 = vmatpush1.msra.mxu0 0.0
        %3339 = vmatprep.subr.mxu0 0.0
        %3340 = vmatpush1.msra.mxu0 0.0
        %3341 = vmatprep.subr.mxu0 0.0
        %3342 = vmatpush1.msra.mxu0 0.0
        %3343 = vmatprep.subr.mxu0 0.0
        %3344 = vmatpush1.msra.mxu0 0.0
        %3345 = vmatprep.subr.mxu0 0.0
        %3346 = vmatpush1.msra.mxu0 0.0
        %3347 = vmatprep.mubr.f32.mxu0 0.0
        %3348 = vmatmul.mubr.f32.gmra.mrb[0].mxu0 %v3278
        %v3349 = vpop.f32.mrb[0].mxu0
        %v3350 = vadd.f32 0.0, %v3349
        %v3351 = vpop.f32.mrb[0].mxu0
        %3352 = vmatprep.mubr.f32.mxu0 0.0
        %3353 = vmatmul.mubr.f32.gmra.mrb[0].mxu0 %v3281
        %v3354 = vpop.f32.mrb[0].mxu0
        %v3355 = vadd.f32 0.0, %v3354
        %v3356 = vpop.f32.mrb[0].mxu0
        %3357 = vdwg.mxu0
        %v3358 = vadd.f32 %v3164, %v3350
        %v3359 = vadd.f32 %v3165, %v3355
        %s3360 = scalar_lea.vmem [#allocation10], 2048
        %v3361 = vld [vmem:[%s3360] sm:$0xff]
        %v3362 = vld [vmem:[%s3360 + $0x8] sm:$0xff]
        %v3363 = vld [vmem:[%s3360 + $0x10] sm:$0xff]
        %v3364 = vld [vmem:[%s3360 + $0x18] sm:$0xff]
        %v3365 = vld [vmem:[%s3360 + $0x20] sm:$0xff]
        %v3366 = vld [vmem:[%s3360 + $0x28] sm:$0xff]
        %v3367 = vld [vmem:[%s3360 + $0x30] sm:$0xff]
        %v3368 = vld [vmem:[%s3360 + $0x38] sm:$0xff]
        %v3369 = vld [vmem:[%s3360 + $0x40] sm:$0xff]
        %v3370 = vld [vmem:[%s3360 + $0x48] sm:$0xff]
        %v3371 = vld [vmem:[%s3360 + $0x50] sm:$0xff]
        %v3372 = vld [vmem:[%s3360 + $0x58] sm:$0xff]
        %v3373 = vld [vmem:[%s3360 + $0x60] sm:$0xff]
        %v3374 = vld [vmem:[%s3360 + $0x68] sm:$0xff]
        %v3375 = vld [vmem:[%s3360 + $0x70] sm:$0xff]
        %v3376 = vld [vmem:[%s3360 + $0x78] sm:$0xff]
        %v3377 = vld [vmem:[%s3360 + $0x80] sm:$0xff]
        %v3378 = vld [vmem:[%s3360 + $0x88] sm:$0xff]
        %v3379 = vld [vmem:[%s3360 + $0x90] sm:$0xff]
        %v3380 = vld [vmem:[%s3360 + $0x98] sm:$0xff]
        %v3381 = vld [vmem:[%s3360 + $0xa0] sm:$0xff]
        %v3382 = vld [vmem:[%s3360 + $0xa8] sm:$0xff]
        %v3383 = vld [vmem:[%s3360 + $0xb0] sm:$0xff]
        %v3384 = vld [vmem:[%s3360 + $0xb8] sm:$0xff]
        %v3385 = vld [vmem:[%s3360 + $0xc0] sm:$0xff]
        %v3386 = vld [vmem:[%s3360 + $0xc8] sm:$0xff]
        %v3387 = vld [vmem:[%s3360 + $0xd0] sm:$0xff]
        %v3388 = vld [vmem:[%s3360 + $0xd8] sm:$0xff]
        %v3389 = vld [vmem:[%s3360 + $0xe0] sm:$0xff]
        %v3390 = vld [vmem:[%s3360 + $0xe8] sm:$0xff]
        %v3391 = vld [vmem:[%s3360 + $0xf0] sm:$0xff]
        %v3392 = vld [vmem:[%s3360 + $0xf8] sm:$0xff]
        %3393 = vmatprep.subr.mxu0 0.0
        %3394 = vmatpush1.msra.mxu0 %v3361
        %3395 = vmatprep.subr.mxu0 0.0
        %3396 = vmatpush1.msra.mxu0 %v3362
        %3397 = vmatprep.subr.mxu0 0.0
        %3398 = vmatpush1.msra.mxu0 %v3363
        %3399 = vmatprep.subr.mxu0 0.0
        %3400 = vmatpush1.msra.mxu0 %v3364
        %3401 = vmatprep.subr.mxu0 0.0
        %3402 = vmatpush1.msra.mxu0 %v3365
        %3403 = vmatprep.subr.mxu0 0.0
        %3404 = vmatpush1.msra.mxu0 %v3366
        %3405 = vmatprep.subr.mxu0 0.0
        %3406 = vmatpush1.msra.mxu0 %v3367
        %3407 = vmatprep.subr.mxu0 0.0
        %3408 = vmatpush1.msra.mxu0 %v3368
        %3409 = vmatprep.subr.mxu0 0.0
        %3410 = vmatpush1.msra.mxu0 %v3369
        %3411 = vmatprep.subr.mxu0 0.0
        %3412 = vmatpush1.msra.mxu0 %v3370
        %3413 = vmatprep.subr.mxu0 0.0
        %3414 = vmatpush1.msra.mxu0 %v3371
        %3415 = vmatprep.subr.mxu0 0.0
        %3416 = vmatpush1.msra.mxu0 %v3372
        %3417 = vmatprep.subr.mxu0 0.0
        %3418 = vmatpush1.msra.mxu0 %v3373
        %3419 = vmatprep.subr.mxu0 0.0
        %3420 = vmatpush1.msra.mxu0 %v3374
        %3421 = vmatprep.subr.mxu0 0.0
        %3422 = vmatpush1.msra.mxu0 %v3375
        %3423 = vmatprep.subr.mxu0 0.0
        %3424 = vmatpush1.msra.mxu0 %v3376
        %3425 = vmatprep.subr.mxu0 0.0
        %3426 = vmatpush1.msra.mxu0 %v3377
        %3427 = vmatprep.subr.mxu0 0.0
        %3428 = vmatpush1.msra.mxu0 %v3378
        %3429 = vmatprep.subr.mxu0 0.0
        %3430 = vmatpush1.msra.mxu0 %v3379
        %3431 = vmatprep.subr.mxu0 0.0
        %3432 = vmatpush1.msra.mxu0 %v3380
        %3433 = vmatprep.subr.mxu0 0.0
        %3434 = vmatpush1.msra.mxu0 %v3381
        %3435 = vmatprep.subr.mxu0 0.0
        %3436 = vmatpush1.msra.mxu0 %v3382
        %3437 = vmatprep.subr.mxu0 0.0
        %3438 = vmatpush1.msra.mxu0 %v3383
        %3439 = vmatprep.subr.mxu0 0.0
        %3440 = vmatpush1.msra.mxu0 %v3384
        %3441 = vmatprep.subr.mxu0 0.0
        %3442 = vmatpush1.msra.mxu0 %v3385
        %3443 = vmatprep.subr.mxu0 0.0
        %3444 = vmatpush1.msra.mxu0 %v3386
        %3445 = vmatprep.subr.mxu0 0.0
        %3446 = vmatpush1.msra.mxu0 %v3387
        %3447 = vmatprep.subr.mxu0 0.0
        %3448 = vmatpush1.msra.mxu0 %v3388
        %3449 = vmatprep.subr.mxu0 0.0
        %3450 = vmatpush1.msra.mxu0 %v3389
        %3451 = vmatprep.subr.mxu0 0.0
        %3452 = vmatpush1.msra.mxu0 %v3390
        %3453 = vmatprep.subr.mxu0 0.0
        %3454 = vmatpush1.msra.mxu0 %v3391
        %3455 = vmatprep.subr.mxu0 0.0
        %3456 = vmatpush1.msra.mxu0 %v3392
        %3457 = vmatprep.mubr.f32.mxu0 %v1810
        %3458 = vmatmul.mubr.f32.gmra.mrb[0].mxu0 %v1809
        %v3459 = vpop.f32.mrb[0].mxu0
        %v3460 = vadd.f32 0.0, %v3459
        %v3461 = vpop.f32.mrb[0].mxu0
        %3462 = vmatprep.mubr.f32.mxu0 %v1812
        %3463 = vmatmul.mubr.f32.gmra.mrb[0].mxu0 %v1811
        %v3464 = vpop.f32.mrb[0].mxu0
        %v3465 = vadd.f32 0.0, %v3464
        %v3466 = vpop.f32.mrb[0].mxu0
        %3467 = vdwg.mxu0
        %s3468 = scalar_lea.vmem [#allocation5], 128
        %v3469 = vld [vmem:[%s3468] sm:$0xff]
        %v3470 = vld [vmem:[%s3468 + $0x8] sm:$0xff]
        %v3472 = vsel %vm2033, %v3469, 0
        %v3475 = vsel %vm2033, %v3470, 0
        %3477 = vmatprep.subr.mxu0 0.0
        %3478 = vmatpush1.msra.mxu0 %v3460
        %3479 = vmatprep.subr.mxu0 0.0
        %3480 = vmatpush1.msra.mxu0 %v3465
        %3481 = vmatprep.subr.mxu0 0.0
        %3482 = vmatpush1.msra.mxu0 0.0
        %3483 = vmatprep.subr.mxu0 0.0
        %3484 = vmatpush1.msra.mxu0 0.0
        %3485 = vmatprep.subr.mxu0 0.0
        %3486 = vmatpush1.msra.mxu0 0.0
        %3487 = vmatprep.subr.mxu0 0.0
        %3488 = vmatpush1.msra.mxu0 0.0
        %3489 = vmatprep.subr.mxu0 0.0
        %3490 = vmatpush1.msra.mxu0 0.0
        %3491 = vmatprep.subr.mxu0 0.0
        %3492 = vmatpush1.msra.mxu0 0.0
        %3493 = vmatprep.subr.mxu0 0.0
        %3494 = vmatpush1.msra.mxu0 0.0
        %3495 = vmatprep.subr.mxu0 0.0
        %3496 = vmatpush1.msra.mxu0 0.0
        %3497 = vmatprep.subr.mxu0 0.0
        %3498 = vmatpush1.msra.mxu0 0.0
        %3499 = vmatprep.subr.mxu0 0.0
        %3500 = vmatpush1.msra.mxu0 0.0
        %3501 = vmatprep.subr.mxu0 0.0
        %3502 = vmatpush1.msra.mxu0 0.0
        %3503 = vmatprep.subr.mxu0 0.0
        %3504 = vmatpush1.msra.mxu0 0.0
        %3505 = vmatprep.subr.mxu0 0.0
        %3506 = vmatpush1.msra.mxu0 0.0
        %3507 = vmatprep.subr.mxu0 0.0
        %3508 = vmatpush1.msra.mxu0 0.0
        %3509 = vmatprep.subr.mxu0 0.0
        %3510 = vmatpush1.msra.mxu0 0.0
        %3511 = vmatprep.subr.mxu0 0.0
        %3512 = vmatpush1.msra.mxu0 0.0
        %3513 = vmatprep.subr.mxu0 0.0
        %3514 = vmatpush1.msra.mxu0 0.0
        %3515 = vmatprep.subr.mxu0 0.0
        %3516 = vmatpush1.msra.mxu0 0.0
        %3517 = vmatprep.subr.mxu0 0.0
        %3518 = vmatpush1.msra.mxu0 0.0
        %3519 = vmatprep.subr.mxu0 0.0
        %3520 = vmatpush1.msra.mxu0 0.0
        %3521 = vmatprep.subr.mxu0 0.0
        %3522 = vmatpush1.msra.mxu0 0.0
        %3523 = vmatprep.subr.mxu0 0.0
        %3524 = vmatpush1.msra.mxu0 0.0
        %3525 = vmatprep.subr.mxu0 0.0
        %3526 = vmatpush1.msra.mxu0 0.0
        %3527 = vmatprep.subr.mxu0 0.0
        %3528 = vmatpush1.msra.mxu0 0.0
        %3529 = vmatprep.subr.mxu0 0.0
        %3530 = vmatpush1.msra.mxu0 0.0
        %3531 = vmatprep.subr.mxu0 0.0
        %3532 = vmatpush1.msra.mxu0 0.0
        %3533 = vmatprep.subr.mxu0 0.0
        %3534 = vmatpush1.msra.mxu0 0.0
        %3535 = vmatprep.subr.mxu0 0.0
        %3536 = vmatpush1.msra.mxu0 0.0
        %3537 = vmatprep.subr.mxu0 0.0
        %3538 = vmatpush1.msra.mxu0 0.0
        %3539 = vmatprep.subr.mxu0 0.0
        %3540 = vmatpush1.msra.mxu0 0.0
        %3541 = vmatprep.mubr.f32.mxu0 0.0
        %3542 = vmatmul.mubr.f32.gmra.mrb[0].mxu0 %v3472
        %v3543 = vpop.f32.mrb[0].mxu0
        %v3544 = vadd.f32 0.0, %v3543
        %v3545 = vpop.f32.mrb[0].mxu0
        %3546 = vmatprep.mubr.f32.mxu0 0.0
        %3547 = vmatmul.mubr.f32.gmra.mrb[0].mxu0 %v3475
        %v3548 = vpop.f32.mrb[0].mxu0
        %v3549 = vadd.f32 0.0, %v3548
        %v3550 = vpop.f32.mrb[0].mxu0
        %3551 = vdwg.mxu0
        %v3552 = vadd.f32 %v3358, %v3544
        %v3553 = vadd.f32 %v3359, %v3549
        %s3554 = scalar_lea.vmem %s8, 32
        %v3555 = vld [vmem:[%s3554] sm:$0xff]
        %v3556 = vld [vmem:[%s3554 + $0x8] sm:$0xff]
        %3557 = vadd.xlane.f32.xlu0 %v3552
        %v3558 = vpop.xlane.xlu0 %3557
        %3559 = vadd.xlane.f32.xlu0 %v3553
        %v3560 = vpop.xlane.xlu0 %3559
        %v3561 = vmul.f32 %v3558, 0.020408163
        %v3562 = vmul.f32 %v3560, 0.020408163
        %v3563 = vmul.f32 %v3552, %v3552
        %v3564 = vmul.f32 %v3553, %v3553
        %3565 = vadd.xlane.f32.xlu0 %v3563
        %v3566 = vpop.xlane.xlu0 %3565
        %3567 = vadd.xlane.f32.xlu0 %v3564
        %v3568 = vpop.xlane.xlu0 %3567
        %v3569 = vmul.f32 %v3566, 0.020408163
        %v3570 = vmul.f32 %v3568, 0.020408163
        %v3571 = vmul.f32 %v3561, %v3561
        %v3572 = vmul.f32 %v3562, %v3562
        %v3573 = vsub.f32 %v3569, %v3571
        %v3574 = vsub.f32 %v3570, %v3572
        %v3575 = vmax.f32 %v3573, 0.0
        %v3576 = vmax.f32 %v3574, 0.0
        %v3577 = vsub.f32 %v3552, %v3561
        %v3578 = vsub.f32 %v3553, %v3562
        %v3579 = vadd.f32 %v3575, 1e-05
        %v3580 = vadd.f32 %v3576, 1e-05
        %v3581 = vrsqrt.pop %v3579
        %v3582 = vrsqrt.pop %v3580
        %v3583 = vmul.f32 %v3577, %v3581
        %v3584 = vmul.f32 %v3578, %v3582
        %3586 = vset.pattern.permute.xlu0 0
        %3587 = vperm.xlu0 %3586, %v3555
        %v3588 = vpop.permute.xlu0 %3587
        %3591 = vset.pattern.permute.xlu0 0
        %3592 = vperm.xlu0 %3591, %v3556
        %v3593 = vpop.permute.xlu0 %3592
        %v3595 = vmul.f32 %v3583, %v3588
        %v3596 = vmul.f32 %v3584, %v3593
        %3597 = vset.pattern.permute.xlu0 1
        %3598 = vperm.xlu0 %3597, %v3555
        %v3599 = vpop.permute.xlu0 %3598
        %3601 = vset.pattern.permute.xlu0 1
        %3602 = vperm.xlu0 %3601, %v3556
        %v3603 = vpop.permute.xlu0 %3602
        %v3605 = vadd.f32 %v3595, %v3599
        %v3606 = vadd.f32 %v3596, %v3603
        %vm3607 = vcmp.ge.f32.partialorder %v3605, 0.0
        %vm3608 = vcmp.ge.f32.partialorder %v3606, 0.0
        %3609 = vset.pattern.permute.xlu0 2
        %3610 = vperm.xlu0 %3609, %v3555
        %v3611 = vpop.permute.xlu0 %3610
        %3613 = vset.pattern.permute.xlu0 2
        %3614 = vperm.xlu0 %3613, %v3556
        %v3615 = vpop.permute.xlu0 %3614
        %v3617 = vmul.f32 %v3611, %v3605
        %v3618 = vmul.f32 %v3615, %v3606
        %v3619 = vsel %vm3607, %v3605, %v3617
        %v3620 = vsel %vm3608, %v3606, %v3618
        %v3621 = vld [vmem:[#allocation11] sm:$0xff]
        %v3622 = vld [vmem:[#allocation11 + $0x8] sm:$0xff]
        %v3623 = vld [vmem:[#allocation11 + $0x10] sm:$0xff]
        %v3624 = vld [vmem:[#allocation11 + $0x18] sm:$0xff]
        %v3625 = vld [vmem:[#allocation11 + $0x20] sm:$0xff]
        %v3626 = vld [vmem:[#allocation11 + $0x28] sm:$0xff]
        %v3627 = vld [vmem:[#allocation11 + $0x30] sm:$0xff]
        %v3628 = vld [vmem:[#allocation11 + $0x38] sm:$0xff]
        %v3629 = vld [vmem:[#allocation11 + $0x40] sm:$0xff]
        %v3630 = vld [vmem:[#allocation11 + $0x48] sm:$0xff]
        %v3631 = vld [vmem:[#allocation11 + $0x50] sm:$0xff]
        %v3632 = vld [vmem:[#allocation11 + $0x58] sm:$0xff]
        %v3633 = vld [vmem:[#allocation11 + $0x60] sm:$0xff]
        %v3634 = vld [vmem:[#allocation11 + $0x68] sm:$0xff]
        %v3635 = vld [vmem:[#allocation11 + $0x70] sm:$0xff]
        %v3636 = vld [vmem:[#allocation11 + $0x78] sm:$0xff]
        %3637 = vmatprep.subr.mxu0 0.0
        %3638 = vmatpush1.msra.mxu0 %v3621
        %3639 = vmatprep.subr.mxu0 0.0
        %3640 = vmatpush1.msra.mxu0 %v3622
        %3641 = vmatprep.subr.mxu0 0.0
        %3642 = vmatpush1.msra.mxu0 %v3623
        %3643 = vmatprep.subr.mxu0 0.0
        %3644 = vmatpush1.msra.mxu0 %v3624
        %3645 = vmatprep.subr.mxu0 0.0
        %3646 = vmatpush1.msra.mxu0 %v3625
        %3647 = vmatprep.subr.mxu0 0.0
        %3648 = vmatpush1.msra.mxu0 %v3626
        %3649 = vmatprep.subr.mxu0 0.0
        %3650 = vmatpush1.msra.mxu0 %v3627
        %3651 = vmatprep.subr.mxu0 0.0
        %3652 = vmatpush1.msra.mxu0 %v3628
        %3653 = vmatprep.subr.mxu0 0.0
        %3654 = vmatpush1.msra.mxu0 %v3629
        %3655 = vmatprep.subr.mxu0 0.0
        %3656 = vmatpush1.msra.mxu0 %v3630
        %3657 = vmatprep.subr.mxu0 0.0
        %3658 = vmatpush1.msra.mxu0 %v3631
        %3659 = vmatprep.subr.mxu0 0.0
        %3660 = vmatpush1.msra.mxu0 %v3632
        %3661 = vmatprep.subr.mxu0 0.0
        %3662 = vmatpush1.msra.mxu0 %v3633
        %3663 = vmatprep.subr.mxu0 0.0
        %3664 = vmatpush1.msra.mxu0 %v3634
        %3665 = vmatprep.subr.mxu0 0.0
        %3666 = vmatpush1.msra.mxu0 %v3635
        %3667 = vmatprep.subr.mxu0 0.0
        %3668 = vmatpush1.msra.mxu0 %v3636
        %3669 = vmatprep.subr.mxu0 0.0
        %3670 = vmatpush1.msra.mxu0 0.0
        %3671 = vmatprep.subr.mxu0 0.0
        %3672 = vmatpush1.msra.mxu0 0.0
        %3673 = vmatprep.subr.mxu0 0.0
        %3674 = vmatpush1.msra.mxu0 0.0
        %3675 = vmatprep.subr.mxu0 0.0
        %3676 = vmatpush1.msra.mxu0 0.0
        %3677 = vmatprep.subr.mxu0 0.0
        %3678 = vmatpush1.msra.mxu0 0.0
        %3679 = vmatprep.subr.mxu0 0.0
        %3680 = vmatpush1.msra.mxu0 0.0
        %3681 = vmatprep.subr.mxu0 0.0
        %3682 = vmatpush1.msra.mxu0 0.0
        %3683 = vmatprep.subr.mxu0 0.0
        %3684 = vmatpush1.msra.mxu0 0.0
        %3685 = vmatprep.subr.mxu0 0.0
        %3686 = vmatpush1.msra.mxu0 0.0
        %3687 = vmatprep.subr.mxu0 0.0
        %3688 = vmatpush1.msra.mxu0 0.0
        %3689 = vmatprep.subr.mxu0 0.0
        %3690 = vmatpush1.msra.mxu0 0.0
        %3691 = vmatprep.subr.mxu0 0.0
        %3692 = vmatpush1.msra.mxu0 0.0
        %3693 = vmatprep.subr.mxu0 0.0
        %3694 = vmatpush1.msra.mxu0 0.0
        %3695 = vmatprep.subr.mxu0 0.0
        %3696 = vmatpush1.msra.mxu0 0.0
        %3697 = vmatprep.subr.mxu0 0.0
        %3698 = vmatpush1.msra.mxu0 0.0
        %3699 = vmatprep.subr.mxu0 0.0
        %3700 = vmatpush1.msra.mxu0 0.0
        %3701 = vmatprep.mubr.f32.mxu0 0.0
        %3702 = vmatmul.mubr.f32.gmra.mrb[0].mxu0 %v3619
        %v3703 = vpop.f32.mrb[0].mxu0
        %v3704 = vadd.f32 0.0, %v3703
        %v3705 = vpop.f32.mrb[0].mxu0
        %3706 = vmatprep.mubr.f32.mxu0 0.0
        %3707 = vmatmul.mubr.f32.gmra.mrb[0].mxu0 %v3620
        %v3708 = vpop.f32.mrb[0].mxu0
        %v3709 = vadd.f32 0.0, %v3708
        %v3710 = vpop.f32.mrb[0].mxu0
        %3711 = vdwg.mxu0
        %v3712 = vld [vmem:[#allocation7] sm:$0xff]
        %s3713 = scalar_lea.vmem [#allocation11], 128
        %v3714 = vld [vmem:[%s3713] sm:$0xff]
        %v3715 = vld [vmem:[%s3713 + $0x8] sm:$0xff]
        %v3716 = vld [vmem:[%s3713 + $0x10] sm:$0xff]
        %v3717 = vld [vmem:[%s3713 + $0x18] sm:$0xff]
        %v3718 = vld [vmem:[%s3713 + $0x20] sm:$0xff]
        %v3719 = vld [vmem:[%s3713 + $0x28] sm:$0xff]
        %v3720 = vld [vmem:[%s3713 + $0x30] sm:$0xff]
        %v3721 = vld [vmem:[%s3713 + $0x38] sm:$0xff]
        %v3722 = vld [vmem:[%s3713 + $0x40] sm:$0xff]
        %v3723 = vld [vmem:[%s3713 + $0x48] sm:$0xff]
        %v3724 = vld [vmem:[%s3713 + $0x50] sm:$0xff]
        %v3725 = vld [vmem:[%s3713 + $0x58] sm:$0xff]
        %v3726 = vld [vmem:[%s3713 + $0x60] sm:$0xff]
        %v3727 = vld [vmem:[%s3713 + $0x68] sm:$0xff]
        %v3728 = vld [vmem:[%s3713 + $0x70] sm:$0xff]
        %v3729 = vld [vmem:[%s3713 + $0x78] sm:$0xff]
        %3730 = vmatprep.subr.mxu0 0.0
        %3731 = vmatpush1.msra.mxu0 %v3714
        %3732 = vmatprep.subr.mxu0 0.0
        %3733 = vmatpush1.msra.mxu0 %v3715
        %3734 = vmatprep.subr.mxu0 0.0
        %3735 = vmatpush1.msra.mxu0 %v3716
        %3736 = vmatprep.subr.mxu0 0.0
        %3737 = vmatpush1.msra.mxu0 %v3717
        %3738 = vmatprep.subr.mxu0 0.0
        %3739 = vmatpush1.msra.mxu0 %v3718
        %3740 = vmatprep.subr.mxu0 0.0
        %3741 = vmatpush1.msra.mxu0 %v3719
        %3742 = vmatprep.subr.mxu0 0.0
        %3743 = vmatpush1.msra.mxu0 %v3720
        %3744 = vmatprep.subr.mxu0 0.0
        %3745 = vmatpush1.msra.mxu0 %v3721
        %3746 = vmatprep.subr.mxu0 0.0
        %3747 = vmatpush1.msra.mxu0 %v3722
        %3748 = vmatprep.subr.mxu0 0.0
        %3749 = vmatpush1.msra.mxu0 %v3723
        %3750 = vmatprep.subr.mxu0 0.0
        %3751 = vmatpush1.msra.mxu0 %v3724
        %3752 = vmatprep.subr.mxu0 0.0
        %3753 = vmatpush1.msra.mxu0 %v3725
        %3754 = vmatprep.subr.mxu0 0.0
        %3755 = vmatpush1.msra.mxu0 %v3726
        %3756 = vmatprep.subr.mxu0 0.0
        %3757 = vmatpush1.msra.mxu0 %v3727
        %3758 = vmatprep.subr.mxu0 0.0
        %3759 = vmatpush1.msra.mxu0 %v3728
        %3760 = vmatprep.subr.mxu0 0.0
        %3761 = vmatpush1.msra.mxu0 %v3729
        %3762 = vmatprep.subr.mxu0 0.0
        %3763 = vmatpush1.msra.mxu0 0.0
        %3764 = vmatprep.subr.mxu0 0.0
        %3765 = vmatpush1.msra.mxu0 0.0
        %3766 = vmatprep.subr.mxu0 0.0
        %3767 = vmatpush1.msra.mxu0 0.0
        %3768 = vmatprep.subr.mxu0 0.0
        %3769 = vmatpush1.msra.mxu0 0.0
        %3770 = vmatprep.subr.mxu0 0.0
        %3771 = vmatpush1.msra.mxu0 0.0
        %3772 = vmatprep.subr.mxu0 0.0
        %3773 = vmatpush1.msra.mxu0 0.0
        %3774 = vmatprep.subr.mxu0 0.0
        %3775 = vmatpush1.msra.mxu0 0.0
        %3776 = vmatprep.subr.mxu0 0.0
        %3777 = vmatpush1.msra.mxu0 0.0
        %3778 = vmatprep.subr.mxu0 0.0
        %3779 = vmatpush1.msra.mxu0 0.0
        %3780 = vmatprep.subr.mxu0 0.0
        %3781 = vmatpush1.msra.mxu0 0.0
        %3782 = vmatprep.subr.mxu0 0.0
        %3783 = vmatpush1.msra.mxu0 0.0
        %3784 = vmatprep.subr.mxu0 0.0
        %3785 = vmatpush1.msra.mxu0 0.0
        %3786 = vmatprep.subr.mxu0 0.0
        %3787 = vmatpush1.msra.mxu0 0.0
        %3788 = vmatprep.subr.mxu0 0.0
        %3789 = vmatpush1.msra.mxu0 0.0
        %3790 = vmatprep.subr.mxu0 0.0
        %3791 = vmatpush1.msra.mxu0 0.0
        %3792 = vmatprep.subr.mxu0 0.0
        %3793 = vmatpush1.msra.mxu0 0.0
        %3794 = vmatprep.mubr.f32.mxu0 0.0
        %3795 = vmatmul.mubr.f32.gmra.mrb[0].mxu0 %v3619
        %v3796 = vpop.f32.mrb[0].mxu0
        %v3797 = vadd.f32 0.0, %v3796
        %v3798 = vpop.f32.mrb[0].mxu0
        %3799 = vmatprep.mubr.f32.mxu0 0.0
        %3800 = vmatmul.mubr.f32.gmra.mrb[0].mxu0 %v3620
        %v3801 = vpop.f32.mrb[0].mxu0
        %v3802 = vadd.f32 0.0, %v3801
        %v3803 = vpop.f32.mrb[0].mxu0
        %3804 = vdwg.mxu0
        %s3805 = scalar_lea.vmem [#allocation7], 8
        %v3806 = vld [vmem:[%s3805] sm:$0xff]
        %v3808 = vsel %vm2033, %v3806, 0
        %3810 = vmatprep.subr.mxu0 0.0
        %3811 = vmatpush1.msra.mxu0 %v3797
        %3812 = vmatprep.subr.mxu0 0.0
        %3813 = vmatpush1.msra.mxu0 %v3802
        %3814 = vmatprep.subr.mxu0 0.0
        %3815 = vmatpush1.msra.mxu0 0.0
        %3816 = vmatprep.subr.mxu0 0.0
        %3817 = vmatpush1.msra.mxu0 0.0
        %3818 = vmatprep.subr.mxu0 0.0
        %3819 = vmatpush1.msra.mxu0 0.0
        %3820 = vmatprep.subr.mxu0 0.0
        %3821 = vmatpush1.msra.mxu0 0.0
        %3822 = vmatprep.subr.mxu0 0.0
        %3823 = vmatpush1.msra.mxu0 0.0
        %3824 = vmatprep.subr.mxu0 0.0
        %3825 = vmatpush1.msra.mxu0 0.0
        %3826 = vmatprep.subr.mxu0 0.0
        %3827 = vmatpush1.msra.mxu0 0.0
        %3828 = vmatprep.subr.mxu0 0.0
        %3829 = vmatpush1.msra.mxu0 0.0
        %3830 = vmatprep.subr.mxu0 0.0
        %3831 = vmatpush1.msra.mxu0 0.0
        %3832 = vmatprep.subr.mxu0 0.0
        %3833 = vmatpush1.msra.mxu0 0.0
        %3834 = vmatprep.subr.mxu0 0.0
        %3835 = vmatpush1.msra.mxu0 0.0
        %3836 = vmatprep.subr.mxu0 0.0
        %3837 = vmatpush1.msra.mxu0 0.0
        %3838 = vmatprep.subr.mxu0 0.0
        %3839 = vmatpush1.msra.mxu0 0.0
        %3840 = vmatprep.subr.mxu0 0.0
        %3841 = vmatpush1.msra.mxu0 0.0
        %3842 = vmatprep.subr.mxu0 0.0
        %3843 = vmatpush1.msra.mxu0 0.0
        %3844 = vmatprep.subr.mxu0 0.0
        %3845 = vmatpush1.msra.mxu0 0.0
        %3846 = vmatprep.subr.mxu0 0.0
        %3847 = vmatpush1.msra.mxu0 0.0
        %3848 = vmatprep.subr.mxu0 0.0
        %3849 = vmatpush1.msra.mxu0 0.0
        %3850 = vmatprep.subr.mxu0 0.0
        %3851 = vmatpush1.msra.mxu0 0.0
        %3852 = vmatprep.subr.mxu0 0.0
        %3853 = vmatpush1.msra.mxu0 0.0
        %3854 = vmatprep.subr.mxu0 0.0
        %3855 = vmatpush1.msra.mxu0 0.0
        %3856 = vmatprep.subr.mxu0 0.0
        %3857 = vmatpush1.msra.mxu0 0.0
        %3858 = vmatprep.subr.mxu0 0.0
        %3859 = vmatpush1.msra.mxu0 0.0
        %3860 = vmatprep.subr.mxu0 0.0
        %3861 = vmatpush1.msra.mxu0 0.0
        %3862 = vmatprep.subr.mxu0 0.0
        %3863 = vmatpush1.msra.mxu0 0.0
        %3864 = vmatprep.subr.mxu0 0.0
        %3865 = vmatpush1.msra.mxu0 0.0
        %3866 = vmatprep.subr.mxu0 0.0
        %3867 = vmatpush1.msra.mxu0 0.0
        %3868 = vmatprep.subr.mxu0 0.0
        %3869 = vmatpush1.msra.mxu0 0.0
        %3870 = vmatprep.subr.mxu0 0.0
        %3871 = vmatpush1.msra.mxu0 0.0
        %3872 = vmatprep.subr.mxu0 0.0
        %3873 = vmatpush1.msra.mxu0 0.0
        %3874 = vmatprep.mubr.f32.mxu0 0.0
        %3875 = vmatmul.mubr.f32.gmra.mrb[0].mxu0 %v3808
        %v3876 = vpop.f32.mrb[0].mxu0
        %v3877 = vadd.f32 0.0, %v3876
        %v3878 = vpop.f32.mrb[0].mxu0
        %3879 = vdwg.mxu0
        %v3881 = vsel %vm2033, %v3712, 0
        %3883 = vmatprep.subr.mxu0 0.0
        %3884 = vmatpush1.msra.mxu0 %v3704
        %3885 = vmatprep.subr.mxu0 0.0
        %3886 = vmatpush1.msra.mxu0 %v3709
        %3887 = vmatprep.subr.mxu0 0.0
        %3888 = vmatpush1.msra.mxu0 0.0
        %3889 = vmatprep.subr.mxu0 0.0
        %3890 = vmatpush1.msra.mxu0 0.0
        %3891 = vmatprep.subr.mxu0 0.0
        %3892 = vmatpush1.msra.mxu0 0.0
        %3893 = vmatprep.subr.mxu0 0.0
        %3894 = vmatpush1.msra.mxu0 0.0
        %3895 = vmatprep.subr.mxu0 0.0
        %3896 = vmatpush1.msra.mxu0 0.0
        %3897 = vmatprep.subr.mxu0 0.0
        %3898 = vmatpush1.msra.mxu0 0.0
        %3899 = vmatprep.subr.mxu0 0.0
        %3900 = vmatpush1.msra.mxu0 0.0
        %3901 = vmatprep.subr.mxu0 0.0
        %3902 = vmatpush1.msra.mxu0 0.0
        %3903 = vmatprep.subr.mxu0 0.0
        %3904 = vmatpush1.msra.mxu0 0.0
        %3905 = vmatprep.subr.mxu0 0.0
        %3906 = vmatpush1.msra.mxu0 0.0
        %3907 = vmatprep.subr.mxu0 0.0
        %3908 = vmatpush1.msra.mxu0 0.0
        %3909 = vmatprep.subr.mxu0 0.0
        %3910 = vmatpush1.msra.mxu0 0.0
        %3911 = vmatprep.subr.mxu0 0.0
        %3912 = vmatpush1.msra.mxu0 0.0
        %3913 = vmatprep.subr.mxu0 0.0
        %3914 = vmatpush1.msra.mxu0 0.0
        %3915 = vmatprep.subr.mxu0 0.0
        %3916 = vmatpush1.msra.mxu0 0.0
        %3917 = vmatprep.subr.mxu0 0.0
        %3918 = vmatpush1.msra.mxu0 0.0
        %3919 = vmatprep.subr.mxu0 0.0
        %3920 = vmatpush1.msra.mxu0 0.0
        %3921 = vmatprep.subr.mxu0 0.0
        %3922 = vmatpush1.msra.mxu0 0.0
        %3923 = vmatprep.subr.mxu0 0.0
        %3924 = vmatpush1.msra.mxu0 0.0
        %3925 = vmatprep.subr.mxu0 0.0
        %3926 = vmatpush1.msra.mxu0 0.0
        %3927 = vmatprep.subr.mxu0 0.0
        %3928 = vmatpush1.msra.mxu0 0.0
        %3929 = vmatprep.subr.mxu0 0.0
        %3930 = vmatpush1.msra.mxu0 0.0
        %3931 = vmatprep.subr.mxu0 0.0
        %3932 = vmatpush1.msra.mxu0 0.0
        %3933 = vmatprep.subr.mxu0 0.0
        %3934 = vmatpush1.msra.mxu0 0.0
        %3935 = vmatprep.subr.mxu0 0.0
        %3936 = vmatpush1.msra.mxu0 0.0
        %3937 = vmatprep.subr.mxu0 0.0
        %3938 = vmatpush1.msra.mxu0 0.0
        %3939 = vmatprep.subr.mxu0 0.0
        %3940 = vmatpush1.msra.mxu0 0.0
        %3941 = vmatprep.subr.mxu0 0.0
        %3942 = vmatpush1.msra.mxu0 0.0
        %3943 = vmatprep.subr.mxu0 0.0
        %3944 = vmatpush1.msra.mxu0 0.0
        %3945 = vmatprep.subr.mxu0 0.0
        %3946 = vmatpush1.msra.mxu0 0.0
        %3947 = vmatprep.mubr.f32.mxu0 0.0
        %3948 = vmatmul.mubr.f32.gmra.mrb[0].mxu0 %v3881
        %v3949 = vpop.f32.mrb[0].mxu0
        %v3950 = vadd.f32 %v3877, %v3949
        %v3951 = vpop.f32.mrb[0].mxu0
        %3952 = vdwg.mxu0
        %s3953 = scalar_lea.vmem [#allocation11], 256
        %v3954 = vld [vmem:[%s3953] sm:$0xff]
        %v3955 = vld [vmem:[%s3953 + $0x8] sm:$0xff]
        %v3956 = vld [vmem:[%s3953 + $0x10] sm:$0xff]
        %v3957 = vld [vmem:[%s3953 + $0x18] sm:$0xff]
        %v3958 = vld [vmem:[%s3953 + $0x20] sm:$0xff]
        %v3959 = vld [vmem:[%s3953 + $0x28] sm:$0xff]
        %v3960 = vld [vmem:[%s3953 + $0x30] sm:$0xff]
        %v3961 = vld [vmem:[%s3953 + $0x38] sm:$0xff]
        %v3962 = vld [vmem:[%s3953 + $0x40] sm:$0xff]
        %v3963 = vld [vmem:[%s3953 + $0x48] sm:$0xff]
        %v3964 = vld [vmem:[%s3953 + $0x50] sm:$0xff]
        %v3965 = vld [vmem:[%s3953 + $0x58] sm:$0xff]
        %v3966 = vld [vmem:[%s3953 + $0x60] sm:$0xff]
        %v3967 = vld [vmem:[%s3953 + $0x68] sm:$0xff]
        %v3968 = vld [vmem:[%s3953 + $0x70] sm:$0xff]
        %v3969 = vld [vmem:[%s3953 + $0x78] sm:$0xff]
        %3970 = vmatprep.subr.mxu0 0.0
        %3971 = vmatpush1.msra.mxu0 %v3954
        %3972 = vmatprep.subr.mxu0 0.0
        %3973 = vmatpush1.msra.mxu0 %v3955
        %3974 = vmatprep.subr.mxu0 0.0
        %3975 = vmatpush1.msra.mxu0 %v3956
        %3976 = vmatprep.subr.mxu0 0.0
        %3977 = vmatpush1.msra.mxu0 %v3957
        %3978 = vmatprep.subr.mxu0 0.0
        %3979 = vmatpush1.msra.mxu0 %v3958
        %3980 = vmatprep.subr.mxu0 0.0
        %3981 = vmatpush1.msra.mxu0 %v3959
        %3982 = vmatprep.subr.mxu0 0.0
        %3983 = vmatpush1.msra.mxu0 %v3960
        %3984 = vmatprep.subr.mxu0 0.0
        %3985 = vmatpush1.msra.mxu0 %v3961
        %3986 = vmatprep.subr.mxu0 0.0
        %3987 = vmatpush1.msra.mxu0 %v3962
        %3988 = vmatprep.subr.mxu0 0.0
        %3989 = vmatpush1.msra.mxu0 %v3963
        %3990 = vmatprep.subr.mxu0 0.0
        %3991 = vmatpush1.msra.mxu0 %v3964
        %3992 = vmatprep.subr.mxu0 0.0
        %3993 = vmatpush1.msra.mxu0 %v3965
        %3994 = vmatprep.subr.mxu0 0.0
        %3995 = vmatpush1.msra.mxu0 %v3966
        %3996 = vmatprep.subr.mxu0 0.0
        %3997 = vmatpush1.msra.mxu0 %v3967
        %3998 = vmatprep.subr.mxu0 0.0
        %3999 = vmatpush1.msra.mxu0 %v3968
        %4000 = vmatprep.subr.mxu0 0.0
        %4001 = vmatpush1.msra.mxu0 %v3969
        %4002 = vmatprep.subr.mxu0 0.0
        %4003 = vmatpush1.msra.mxu0 0.0
        %4004 = vmatprep.subr.mxu0 0.0
        %4005 = vmatpush1.msra.mxu0 0.0
        %4006 = vmatprep.subr.mxu0 0.0
        %4007 = vmatpush1.msra.mxu0 0.0
        %4008 = vmatprep.subr.mxu0 0.0
        %4009 = vmatpush1.msra.mxu0 0.0
        %4010 = vmatprep.subr.mxu0 0.0
        %4011 = vmatpush1.msra.mxu0 0.0
        %4012 = vmatprep.subr.mxu0 0.0
        %4013 = vmatpush1.msra.mxu0 0.0
        %4014 = vmatprep.subr.mxu0 0.0
        %4015 = vmatpush1.msra.mxu0 0.0
        %4016 = vmatprep.subr.mxu0 0.0
        %4017 = vmatpush1.msra.mxu0 0.0
        %4018 = vmatprep.subr.mxu0 0.0
        %4019 = vmatpush1.msra.mxu0 0.0
        %4020 = vmatprep.subr.mxu0 0.0
        %4021 = vmatpush1.msra.mxu0 0.0
        %4022 = vmatprep.subr.mxu0 0.0
        %4023 = vmatpush1.msra.mxu0 0.0
        %4024 = vmatprep.subr.mxu0 0.0
        %4025 = vmatpush1.msra.mxu0 0.0
        %4026 = vmatprep.subr.mxu0 0.0
        %4027 = vmatpush1.msra.mxu0 0.0
        %4028 = vmatprep.subr.mxu0 0.0
        %4029 = vmatpush1.msra.mxu0 0.0
        %4030 = vmatprep.subr.mxu0 0.0
        %4031 = vmatpush1.msra.mxu0 0.0
        %4032 = vmatprep.subr.mxu0 0.0
        %4033 = vmatpush1.msra.mxu0 0.0
        %4034 = vmatprep.mubr.f32.mxu0 0.0
        %4035 = vmatmul.mubr.f32.gmra.mrb[0].mxu0 %v3619
        %v4036 = vpop.f32.mrb[0].mxu0
        %v4037 = vadd.f32 0.0, %v4036
        %v4038 = vpop.f32.mrb[0].mxu0
        %4039 = vmatprep.mubr.f32.mxu0 0.0
        %4040 = vmatmul.mubr.f32.gmra.mrb[0].mxu0 %v3620
        %v4041 = vpop.f32.mrb[0].mxu0
        %v4042 = vadd.f32 0.0, %v4041
        %v4043 = vpop.f32.mrb[0].mxu0
        %4044 = vdwg.mxu0
        %s4045 = scalar_lea.vmem [#allocation7], 16
        %v4046 = vld [vmem:[%s4045] sm:$0xff]
        %v4048 = vsel %vm2033, %v4046, 0
        %4050 = vmatprep.subr.mxu0 0.0
        %4051 = vmatpush1.msra.mxu0 %v4037
        %4052 = vmatprep.subr.mxu0 0.0
        %4053 = vmatpush1.msra.mxu0 %v4042
        %4054 = vmatprep.subr.mxu0 0.0
        %4055 = vmatpush1.msra.mxu0 0.0
        %4056 = vmatprep.subr.mxu0 0.0
        %4057 = vmatpush1.msra.mxu0 0.0
        %4058 = vmatprep.subr.mxu0 0.0
        %4059 = vmatpush1.msra.mxu0 0.0
        %4060 = vmatprep.subr.mxu0 0.0
        %4061 = vmatpush1.msra.mxu0 0.0
        %4062 = vmatprep.subr.mxu0 0.0
        %4063 = vmatpush1.msra.mxu0 0.0
        %4064 = vmatprep.subr.mxu0 0.0
        %4065 = vmatpush1.msra.mxu0 0.0
        %4066 = vmatprep.subr.mxu0 0.0
        %4067 = vmatpush1.msra.mxu0 0.0
        %4068 = vmatprep.subr.mxu0 0.0
        %4069 = vmatpush1.msra.mxu0 0.0
        %4070 = vmatprep.subr.mxu0 0.0
        %4071 = vmatpush1.msra.mxu0 0.0
        %4072 = vmatprep.subr.mxu0 0.0
        %4073 = vmatpush1.msra.mxu0 0.0
        %4074 = vmatprep.subr.mxu0 0.0
        %4075 = vmatpush1.msra.mxu0 0.0
        %4076 = vmatprep.subr.mxu0 0.0
        %4077 = vmatpush1.msra.mxu0 0.0
        %4078 = vmatprep.subr.mxu0 0.0
        %4079 = vmatpush1.msra.mxu0 0.0
        %4080 = vmatprep.subr.mxu0 0.0
        %4081 = vmatpush1.msra.mxu0 0.0
        %4082 = vmatprep.subr.mxu0 0.0
        %4083 = vmatpush1.msra.mxu0 0.0
        %4084 = vmatprep.subr.mxu0 0.0
        %4085 = vmatpush1.msra.mxu0 0.0
        %4086 = vmatprep.subr.mxu0 0.0
        %4087 = vmatpush1.msra.mxu0 0.0
        %4088 = vmatprep.subr.mxu0 0.0
        %4089 = vmatpush1.msra.mxu0 0.0
        %4090 = vmatprep.subr.mxu0 0.0
        %4091 = vmatpush1.msra.mxu0 0.0
        %4092 = vmatprep.subr.mxu0 0.0
        %4093 = vmatpush1.msra.mxu0 0.0
        %4094 = vmatprep.subr.mxu0 0.0
        %4095 = vmatpush1.msra.mxu0 0.0
        %4096 = vmatprep.subr.mxu0 0.0
        %4097 = vmatpush1.msra.mxu0 0.0
        %4098 = vmatprep.subr.mxu0 0.0
        %4099 = vmatpush1.msra.mxu0 0.0
        %4100 = vmatprep.subr.mxu0 0.0
        %4101 = vmatpush1.msra.mxu0 0.0
        %4102 = vmatprep.subr.mxu0 0.0
        %4103 = vmatpush1.msra.mxu0 0.0
        %4104 = vmatprep.subr.mxu0 0.0
        %4105 = vmatpush1.msra.mxu0 0.0
        %4106 = vmatprep.subr.mxu0 0.0
        %4107 = vmatpush1.msra.mxu0 0.0
        %4108 = vmatprep.subr.mxu0 0.0
        %4109 = vmatpush1.msra.mxu0 0.0
        %4110 = vmatprep.subr.mxu0 0.0
        %4111 = vmatpush1.msra.mxu0 0.0
        %4112 = vmatprep.subr.mxu0 0.0
        %4113 = vmatpush1.msra.mxu0 0.0
        %4114 = vmatprep.mubr.f32.mxu0 0.0
        %4115 = vmatmul.mubr.f32.gmra.mrb[0].mxu0 %v4048
        %v4116 = vpop.f32.mrb[0].mxu0
        %v4117 = vadd.f32 0.0, %v4116
        %v4118 = vpop.f32.mrb[0].mxu0
        %4119 = vdwg.mxu0
        %v4120 = vadd.f32 %v3950, %v4117
        %s4121 = scalar_lea.vmem [#allocation11], 384
        %v4122 = vld [vmem:[%s4121] sm:$0xff]
        %v4123 = vld [vmem:[%s4121 + $0x8] sm:$0xff]
        %v4124 = vld [vmem:[%s4121 + $0x10] sm:$0xff]
        %v4125 = vld [vmem:[%s4121 + $0x18] sm:$0xff]
        %v4126 = vld [vmem:[%s4121 + $0x20] sm:$0xff]
        %v4127 = vld [vmem:[%s4121 + $0x28] sm:$0xff]
        %v4128 = vld [vmem:[%s4121 + $0x30] sm:$0xff]
        %v4129 = vld [vmem:[%s4121 + $0x38] sm:$0xff]
        %v4130 = vld [vmem:[%s4121 + $0x40] sm:$0xff]
        %v4131 = vld [vmem:[%s4121 + $0x48] sm:$0xff]
        %v4132 = vld [vmem:[%s4121 + $0x50] sm:$0xff]
        %v4133 = vld [vmem:[%s4121 + $0x58] sm:$0xff]
        %v4134 = vld [vmem:[%s4121 + $0x60] sm:$0xff]
        %v4135 = vld [vmem:[%s4121 + $0x68] sm:$0xff]
        %v4136 = vld [vmem:[%s4121 + $0x70] sm:$0xff]
        %v4137 = vld [vmem:[%s4121 + $0x78] sm:$0xff]
        %4138 = vmatprep.subr.mxu0 0.0
        %4139 = vmatpush1.msra.mxu0 %v4122
        %4140 = vmatprep.subr.mxu0 0.0
        %4141 = vmatpush1.msra.mxu0 %v4123
        %4142 = vmatprep.subr.mxu0 0.0
        %4143 = vmatpush1.msra.mxu0 %v4124
        %4144 = vmatprep.subr.mxu0 0.0
        %4145 = vmatpush1.msra.mxu0 %v4125
        %4146 = vmatprep.subr.mxu0 0.0
        %4147 = vmatpush1.msra.mxu0 %v4126
        %4148 = vmatprep.subr.mxu0 0.0
        %4149 = vmatpush1.msra.mxu0 %v4127
        %4150 = vmatprep.subr.mxu0 0.0
        %4151 = vmatpush1.msra.mxu0 %v4128
        %4152 = vmatprep.subr.mxu0 0.0
        %4153 = vmatpush1.msra.mxu0 %v4129
        %4154 = vmatprep.subr.mxu0 0.0
        %4155 = vmatpush1.msra.mxu0 %v4130
        %4156 = vmatprep.subr.mxu0 0.0
        %4157 = vmatpush1.msra.mxu0 %v4131
        %4158 = vmatprep.subr.mxu0 0.0
        %4159 = vmatpush1.msra.mxu0 %v4132
        %4160 = vmatprep.subr.mxu0 0.0
        %4161 = vmatpush1.msra.mxu0 %v4133
        %4162 = vmatprep.subr.mxu0 0.0
        %4163 = vmatpush1.msra.mxu0 %v4134
        %4164 = vmatprep.subr.mxu0 0.0
        %4165 = vmatpush1.msra.mxu0 %v4135
        %4166 = vmatprep.subr.mxu0 0.0
        %4167 = vmatpush1.msra.mxu0 %v4136
        %4168 = vmatprep.subr.mxu0 0.0
        %4169 = vmatpush1.msra.mxu0 %v4137
        %4170 = vmatprep.subr.mxu0 0.0
        %4171 = vmatpush1.msra.mxu0 0.0
        %4172 = vmatprep.subr.mxu0 0.0
        %4173 = vmatpush1.msra.mxu0 0.0
        %4174 = vmatprep.subr.mxu0 0.0
        %4175 = vmatpush1.msra.mxu0 0.0
        %4176 = vmatprep.subr.mxu0 0.0
        %4177 = vmatpush1.msra.mxu0 0.0
        %4178 = vmatprep.subr.mxu0 0.0
        %4179 = vmatpush1.msra.mxu0 0.0
        %4180 = vmatprep.subr.mxu0 0.0
        %4181 = vmatpush1.msra.mxu0 0.0
        %4182 = vmatprep.subr.mxu0 0.0
        %4183 = vmatpush1.msra.mxu0 0.0
        %4184 = vmatprep.subr.mxu0 0.0
        %4185 = vmatpush1.msra.mxu0 0.0
        %4186 = vmatprep.subr.mxu0 0.0
        %4187 = vmatpush1.msra.mxu0 0.0
        %4188 = vmatprep.subr.mxu0 0.0
        %4189 = vmatpush1.msra.mxu0 0.0
        %4190 = vmatprep.subr.mxu0 0.0
        %4191 = vmatpush1.msra.mxu0 0.0
        %4192 = vmatprep.subr.mxu0 0.0
        %4193 = vmatpush1.msra.mxu0 0.0
        %4194 = vmatprep.subr.mxu0 0.0
        %4195 = vmatpush1.msra.mxu0 0.0
        %4196 = vmatprep.subr.mxu0 0.0
        %4197 = vmatpush1.msra.mxu0 0.0
        %4198 = vmatprep.subr.mxu0 0.0
        %4199 = vmatpush1.msra.mxu0 0.0
        %4200 = vmatprep.subr.mxu0 0.0
        %4201 = vmatpush1.msra.mxu0 0.0
        %4202 = vmatprep.mubr.f32.mxu0 0.0
        %4203 = vmatmul.mubr.f32.gmra.mrb[0].mxu0 %v3619
        %v4204 = vpop.f32.mrb[0].mxu0
        %v4205 = vadd.f32 0.0, %v4204
        %v4206 = vpop.f32.mrb[0].mxu0
        %4207 = vmatprep.mubr.f32.mxu0 0.0
        %4208 = vmatmul.mubr.f32.gmra.mrb[0].mxu0 %v3620
        %v4209 = vpop.f32.mrb[0].mxu0
        %v4210 = vadd.f32 0.0, %v4209
        %v4211 = vpop.f32.mrb[0].mxu0
        %4212 = vdwg.mxu0
        %s4213 = scalar_lea.vmem [#allocation7], 24
        %v4214 = vld [vmem:[%s4213] sm:$0xff]
        %v4216 = vsel %vm2033, %v4214, 0
        %4218 = vmatprep.subr.mxu0 0.0
        %4219 = vmatpush1.msra.mxu0 %v4205
        %4220 = vmatprep.subr.mxu0 0.0
        %4221 = vmatpush1.msra.mxu0 %v4210
        %4222 = vmatprep.subr.mxu0 0.0
        %4223 = vmatpush1.msra.mxu0 0.0
        %4224 = vmatprep.subr.mxu0 0.0
        %4225 = vmatpush1.msra.mxu0 0.0
        %4226 = vmatprep.subr.mxu0 0.0
        %4227 = vmatpush1.msra.mxu0 0.0
        %4228 = vmatprep.subr.mxu0 0.0
        %4229 = vmatpush1.msra.mxu0 0.0
        %4230 = vmatprep.subr.mxu0 0.0
        %4231 = vmatpush1.msra.mxu0 0.0
        %4232 = vmatprep.subr.mxu0 0.0
        %4233 = vmatpush1.msra.mxu0 0.0
        %4234 = vmatprep.subr.mxu0 0.0
        %4235 = vmatpush1.msra.mxu0 0.0
        %4236 = vmatprep.subr.mxu0 0.0
        %4237 = vmatpush1.msra.mxu0 0.0
        %4238 = vmatprep.subr.mxu0 0.0
        %4239 = vmatpush1.msra.mxu0 0.0
        %4240 = vmatprep.subr.mxu0 0.0
        %4241 = vmatpush1.msra.mxu0 0.0
        %4242 = vmatprep.subr.mxu0 0.0
        %4243 = vmatpush1.msra.mxu0 0.0
        %4244 = vmatprep.subr.mxu0 0.0
        %4245 = vmatpush1.msra.mxu0 0.0
        %4246 = vmatprep.subr.mxu0 0.0
        %4247 = vmatpush1.msra.mxu0 0.0
        %4248 = vmatprep.subr.mxu0 0.0
        %4249 = vmatpush1.msra.mxu0 0.0
        %4250 = vmatprep.subr.mxu0 0.0
        %4251 = vmatpush1.msra.mxu0 0.0
        %4252 = vmatprep.subr.mxu0 0.0
        %4253 = vmatpush1.msra.mxu0 0.0
        %4254 = vmatprep.subr.mxu0 0.0
        %4255 = vmatpush1.msra.mxu0 0.0
        %4256 = vmatprep.subr.mxu0 0.0
        %4257 = vmatpush1.msra.mxu0 0.0
        %4258 = vmatprep.subr.mxu0 0.0
        %4259 = vmatpush1.msra.mxu0 0.0
        %4260 = vmatprep.subr.mxu0 0.0
        %4261 = vmatpush1.msra.mxu0 0.0
        %4262 = vmatprep.subr.mxu0 0.0
        %4263 = vmatpush1.msra.mxu0 0.0
        %4264 = vmatprep.subr.mxu0 0.0
        %4265 = vmatpush1.msra.mxu0 0.0
        %4266 = vmatprep.subr.mxu0 0.0
        %4267 = vmatpush1.msra.mxu0 0.0
        %4268 = vmatprep.subr.mxu0 0.0
        %4269 = vmatpush1.msra.mxu0 0.0
        %4270 = vmatprep.subr.mxu0 0.0
        %4271 = vmatpush1.msra.mxu0 0.0
        %4272 = vmatprep.subr.mxu0 0.0
        %4273 = vmatpush1.msra.mxu0 0.0
        %4274 = vmatprep.subr.mxu0 0.0
        %4275 = vmatpush1.msra.mxu0 0.0
        %4276 = vmatprep.subr.mxu0 0.0
        %4277 = vmatpush1.msra.mxu0 0.0
        %4278 = vmatprep.subr.mxu0 0.0
        %4279 = vmatpush1.msra.mxu0 0.0
        %4280 = vmatprep.subr.mxu0 0.0
        %4281 = vmatpush1.msra.mxu0 0.0
        %4282 = vmatprep.mubr.f32.mxu0 0.0
        %4283 = vmatmul.mubr.f32.gmra.mrb[0].mxu0 %v4216
        %v4284 = vpop.f32.mrb[0].mxu0
        %v4285 = vadd.f32 0.0, %v4284
        %v4286 = vpop.f32.mrb[0].mxu0
        %4287 = vdwg.mxu0
        %v4288 = vadd.f32 %v4120, %v4285
        %s4289 = scalar_lea.vmem [#allocation11], 512
        %v4290 = vld [vmem:[%s4289] sm:$0xff]
        %v4291 = vld [vmem:[%s4289 + $0x8] sm:$0xff]
        %v4292 = vld [vmem:[%s4289 + $0x10] sm:$0xff]
        %v4293 = vld [vmem:[%s4289 + $0x18] sm:$0xff]
        %v4294 = vld [vmem:[%s4289 + $0x20] sm:$0xff]
        %v4295 = vld [vmem:[%s4289 + $0x28] sm:$0xff]
        %v4296 = vld [vmem:[%s4289 + $0x30] sm:$0xff]
        %v4297 = vld [vmem:[%s4289 + $0x38] sm:$0xff]
        %v4298 = vld [vmem:[%s4289 + $0x40] sm:$0xff]
        %v4299 = vld [vmem:[%s4289 + $0x48] sm:$0xff]
        %v4300 = vld [vmem:[%s4289 + $0x50] sm:$0xff]
        %v4301 = vld [vmem:[%s4289 + $0x58] sm:$0xff]
        %v4302 = vld [vmem:[%s4289 + $0x60] sm:$0xff]
        %v4303 = vld [vmem:[%s4289 + $0x68] sm:$0xff]
        %v4304 = vld [vmem:[%s4289 + $0x70] sm:$0xff]
        %v4305 = vld [vmem:[%s4289 + $0x78] sm:$0xff]
        %4306 = vmatprep.subr.mxu0 0.0
        %4307 = vmatpush1.msra.mxu0 %v4290
        %4308 = vmatprep.subr.mxu0 0.0
        %4309 = vmatpush1.msra.mxu0 %v4291
        %4310 = vmatprep.subr.mxu0 0.0
        %4311 = vmatpush1.msra.mxu0 %v4292
        %4312 = vmatprep.subr.mxu0 0.0
        %4313 = vmatpush1.msra.mxu0 %v4293
        %4314 = vmatprep.subr.mxu0 0.0
        %4315 = vmatpush1.msra.mxu0 %v4294
        %4316 = vmatprep.subr.mxu0 0.0
        %4317 = vmatpush1.msra.mxu0 %v4295
        %4318 = vmatprep.subr.mxu0 0.0
        %4319 = vmatpush1.msra.mxu0 %v4296
        %4320 = vmatprep.subr.mxu0 0.0
        %4321 = vmatpush1.msra.mxu0 %v4297
        %4322 = vmatprep.subr.mxu0 0.0
        %4323 = vmatpush1.msra.mxu0 %v4298
        %4324 = vmatprep.subr.mxu0 0.0
        %4325 = vmatpush1.msra.mxu0 %v4299
        %4326 = vmatprep.subr.mxu0 0.0
        %4327 = vmatpush1.msra.mxu0 %v4300
        %4328 = vmatprep.subr.mxu0 0.0
        %4329 = vmatpush1.msra.mxu0 %v4301
        %4330 = vmatprep.subr.mxu0 0.0
        %4331 = vmatpush1.msra.mxu0 %v4302
        %4332 = vmatprep.subr.mxu0 0.0
        %4333 = vmatpush1.msra.mxu0 %v4303
        %4334 = vmatprep.subr.mxu0 0.0
        %4335 = vmatpush1.msra.mxu0 %v4304
        %4336 = vmatprep.subr.mxu0 0.0
        %4337 = vmatpush1.msra.mxu0 %v4305
        %4338 = vmatprep.subr.mxu0 0.0
        %4339 = vmatpush1.msra.mxu0 0.0
        %4340 = vmatprep.subr.mxu0 0.0
        %4341 = vmatpush1.msra.mxu0 0.0
        %4342 = vmatprep.subr.mxu0 0.0
        %4343 = vmatpush1.msra.mxu0 0.0
        %4344 = vmatprep.subr.mxu0 0.0
        %4345 = vmatpush1.msra.mxu0 0.0
        %4346 = vmatprep.subr.mxu0 0.0
        %4347 = vmatpush1.msra.mxu0 0.0
        %4348 = vmatprep.subr.mxu0 0.0
        %4349 = vmatpush1.msra.mxu0 0.0
        %4350 = vmatprep.subr.mxu0 0.0
        %4351 = vmatpush1.msra.mxu0 0.0
        %4352 = vmatprep.subr.mxu0 0.0
        %4353 = vmatpush1.msra.mxu0 0.0
        %4354 = vmatprep.subr.mxu0 0.0
        %4355 = vmatpush1.msra.mxu0 0.0
        %4356 = vmatprep.subr.mxu0 0.0
        %4357 = vmatpush1.msra.mxu0 0.0
        %4358 = vmatprep.subr.mxu0 0.0
        %4359 = vmatpush1.msra.mxu0 0.0
        %4360 = vmatprep.subr.mxu0 0.0
        %4361 = vmatpush1.msra.mxu0 0.0
        %4362 = vmatprep.subr.mxu0 0.0
        %4363 = vmatpush1.msra.mxu0 0.0
        %4364 = vmatprep.subr.mxu0 0.0
        %4365 = vmatpush1.msra.mxu0 0.0
        %4366 = vmatprep.subr.mxu0 0.0
        %4367 = vmatpush1.msra.mxu0 0.0
        %4368 = vmatprep.subr.mxu0 0.0
        %4369 = vmatpush1.msra.mxu0 0.0
        %4370 = vmatprep.mubr.f32.mxu0 0.0
        %4371 = vmatmul.mubr.f32.gmra.mrb[0].mxu0 %v3619
        %v4372 = vpop.f32.mrb[0].mxu0
        %v4373 = vadd.f32 0.0, %v4372
        %v4374 = vpop.f32.mrb[0].mxu0
        %4375 = vmatprep.mubr.f32.mxu0 0.0
        %4376 = vmatmul.mubr.f32.gmra.mrb[0].mxu0 %v3620
        %v4377 = vpop.f32.mrb[0].mxu0
        %v4378 = vadd.f32 0.0, %v4377
        %v4379 = vpop.f32.mrb[0].mxu0
        %4380 = vdwg.mxu0
        %s4381 = scalar_lea.vmem [#allocation7], 32
        %v4382 = vld [vmem:[%s4381] sm:$0xff]
        %v4384 = vsel %vm2033, %v4382, 0
        %4386 = vmatprep.subr.mxu0 0.0
        %4387 = vmatpush1.msra.mxu0 %v4373
        %4388 = vmatprep.subr.mxu0 0.0
        %4389 = vmatpush1.msra.mxu0 %v4378
        %4390 = vmatprep.subr.mxu0 0.0
        %4391 = vmatpush1.msra.mxu0 0.0
        %4392 = vmatprep.subr.mxu0 0.0
        %4393 = vmatpush1.msra.mxu0 0.0
        %4394 = vmatprep.subr.mxu0 0.0
        %4395 = vmatpush1.msra.mxu0 0.0
        %4396 = vmatprep.subr.mxu0 0.0
        %4397 = vmatpush1.msra.mxu0 0.0
        %4398 = vmatprep.subr.mxu0 0.0
        %4399 = vmatpush1.msra.mxu0 0.0
        %4400 = vmatprep.subr.mxu0 0.0
        %4401 = vmatpush1.msra.mxu0 0.0
        %4402 = vmatprep.subr.mxu0 0.0
        %4403 = vmatpush1.msra.mxu0 0.0
        %4404 = vmatprep.subr.mxu0 0.0
        %4405 = vmatpush1.msra.mxu0 0.0
        %4406 = vmatprep.subr.mxu0 0.0
        %4407 = vmatpush1.msra.mxu0 0.0
        %4408 = vmatprep.subr.mxu0 0.0
        %4409 = vmatpush1.msra.mxu0 0.0
        %4410 = vmatprep.subr.mxu0 0.0
        %4411 = vmatpush1.msra.mxu0 0.0
        %4412 = vmatprep.subr.mxu0 0.0
        %4413 = vmatpush1.msra.mxu0 0.0
        %4414 = vmatprep.subr.mxu0 0.0
        %4415 = vmatpush1.msra.mxu0 0.0
        %4416 = vmatprep.subr.mxu0 0.0
        %4417 = vmatpush1.msra.mxu0 0.0
        %4418 = vmatprep.subr.mxu0 0.0
        %4419 = vmatpush1.msra.mxu0 0.0
        %4420 = vmatprep.subr.mxu0 0.0
        %4421 = vmatpush1.msra.mxu0 0.0
        %4422 = vmatprep.subr.mxu0 0.0
        %4423 = vmatpush1.msra.mxu0 0.0
        %4424 = vmatprep.subr.mxu0 0.0
        %4425 = vmatpush1.msra.mxu0 0.0
        %4426 = vmatprep.subr.mxu0 0.0
        %4427 = vmatpush1.msra.mxu0 0.0
        %4428 = vmatprep.subr.mxu0 0.0
        %4429 = vmatpush1.msra.mxu0 0.0
        %4430 = vmatprep.subr.mxu0 0.0
        %4431 = vmatpush1.msra.mxu0 0.0
        %4432 = vmatprep.subr.mxu0 0.0
        %4433 = vmatpush1.msra.mxu0 0.0
        %4434 = vmatprep.subr.mxu0 0.0
        %4435 = vmatpush1.msra.mxu0 0.0
        %4436 = vmatprep.subr.mxu0 0.0
        %4437 = vmatpush1.msra.mxu0 0.0
        %4438 = vmatprep.subr.mxu0 0.0
        %4439 = vmatpush1.msra.mxu0 0.0
        %4440 = vmatprep.subr.mxu0 0.0
        %4441 = vmatpush1.msra.mxu0 0.0
        %4442 = vmatprep.subr.mxu0 0.0
        %4443 = vmatpush1.msra.mxu0 0.0
        %4444 = vmatprep.subr.mxu0 0.0
        %4445 = vmatpush1.msra.mxu0 0.0
        %4446 = vmatprep.subr.mxu0 0.0
        %4447 = vmatpush1.msra.mxu0 0.0
        %4448 = vmatprep.subr.mxu0 0.0
        %4449 = vmatpush1.msra.mxu0 0.0
        %4450 = vmatprep.mubr.f32.mxu0 0.0
        %4451 = vmatmul.mubr.f32.gmra.mrb[0].mxu0 %v4384
        %v4452 = vpop.f32.mrb[0].mxu0
        %v4453 = vadd.f32 0.0, %v4452
        %v4454 = vpop.f32.mrb[0].mxu0
        %4455 = vdwg.mxu0
        %v4456 = vadd.f32 %v4288, %v4453
        %s4457 = scalar_lea.vmem [#allocation11], 640
        %v4458 = vld [vmem:[%s4457] sm:$0xff]
        %v4459 = vld [vmem:[%s4457 + $0x8] sm:$0xff]
        %v4460 = vld [vmem:[%s4457 + $0x10] sm:$0xff]
        %v4461 = vld [vmem:[%s4457 + $0x18] sm:$0xff]
        %v4462 = vld [vmem:[%s4457 + $0x20] sm:$0xff]
        %v4463 = vld [vmem:[%s4457 + $0x28] sm:$0xff]
        %v4464 = vld [vmem:[%s4457 + $0x30] sm:$0xff]
        %v4465 = vld [vmem:[%s4457 + $0x38] sm:$0xff]
        %v4466 = vld [vmem:[%s4457 + $0x40] sm:$0xff]
        %v4467 = vld [vmem:[%s4457 + $0x48] sm:$0xff]
        %v4468 = vld [vmem:[%s4457 + $0x50] sm:$0xff]
        %v4469 = vld [vmem:[%s4457 + $0x58] sm:$0xff]
        %v4470 = vld [vmem:[%s4457 + $0x60] sm:$0xff]
        %v4471 = vld [vmem:[%s4457 + $0x68] sm:$0xff]
        %v4472 = vld [vmem:[%s4457 + $0x70] sm:$0xff]
        %v4473 = vld [vmem:[%s4457 + $0x78] sm:$0xff]
        %4474 = vmatprep.subr.mxu0 0.0
        %4475 = vmatpush1.msra.mxu0 %v4458
        %4476 = vmatprep.subr.mxu0 0.0
        %4477 = vmatpush1.msra.mxu0 %v4459
        %4478 = vmatprep.subr.mxu0 0.0
        %4479 = vmatpush1.msra.mxu0 %v4460
        %4480 = vmatprep.subr.mxu0 0.0
        %4481 = vmatpush1.msra.mxu0 %v4461
        %4482 = vmatprep.subr.mxu0 0.0
        %4483 = vmatpush1.msra.mxu0 %v4462
        %4484 = vmatprep.subr.mxu0 0.0
        %4485 = vmatpush1.msra.mxu0 %v4463
        %4486 = vmatprep.subr.mxu0 0.0
        %4487 = vmatpush1.msra.mxu0 %v4464
        %4488 = vmatprep.subr.mxu0 0.0
        %4489 = vmatpush1.msra.mxu0 %v4465
        %4490 = vmatprep.subr.mxu0 0.0
        %4491 = vmatpush1.msra.mxu0 %v4466
        %4492 = vmatprep.subr.mxu0 0.0
        %4493 = vmatpush1.msra.mxu0 %v4467
        %4494 = vmatprep.subr.mxu0 0.0
        %4495 = vmatpush1.msra.mxu0 %v4468
        %4496 = vmatprep.subr.mxu0 0.0
        %4497 = vmatpush1.msra.mxu0 %v4469
        %4498 = vmatprep.subr.mxu0 0.0
        %4499 = vmatpush1.msra.mxu0 %v4470
        %4500 = vmatprep.subr.mxu0 0.0
        %4501 = vmatpush1.msra.mxu0 %v4471
        %4502 = vmatprep.subr.mxu0 0.0
        %4503 = vmatpush1.msra.mxu0 %v4472
        %4504 = vmatprep.subr.mxu0 0.0
        %4505 = vmatpush1.msra.mxu0 %v4473
        %4506 = vmatprep.subr.mxu0 0.0
        %4507 = vmatpush1.msra.mxu0 0.0
        %4508 = vmatprep.subr.mxu0 0.0
        %4509 = vmatpush1.msra.mxu0 0.0
        %4510 = vmatprep.subr.mxu0 0.0
        %4511 = vmatpush1.msra.mxu0 0.0
        %4512 = vmatprep.subr.mxu0 0.0
        %4513 = vmatpush1.msra.mxu0 0.0
        %4514 = vmatprep.subr.mxu0 0.0
        %4515 = vmatpush1.msra.mxu0 0.0
        %4516 = vmatprep.subr.mxu0 0.0
        %4517 = vmatpush1.msra.mxu0 0.0
        %4518 = vmatprep.subr.mxu0 0.0
        %4519 = vmatpush1.msra.mxu0 0.0
        %4520 = vmatprep.subr.mxu0 0.0
        %4521 = vmatpush1.msra.mxu0 0.0
        %4522 = vmatprep.subr.mxu0 0.0
        %4523 = vmatpush1.msra.mxu0 0.0
        %4524 = vmatprep.subr.mxu0 0.0
        %4525 = vmatpush1.msra.mxu0 0.0
        %4526 = vmatprep.subr.mxu0 0.0
        %4527 = vmatpush1.msra.mxu0 0.0
        %4528 = vmatprep.subr.mxu0 0.0
        %4529 = vmatpush1.msra.mxu0 0.0
        %4530 = vmatprep.subr.mxu0 0.0
        %4531 = vmatpush1.msra.mxu0 0.0
        %4532 = vmatprep.subr.mxu0 0.0
        %4533 = vmatpush1.msra.mxu0 0.0
        %4534 = vmatprep.subr.mxu0 0.0
        %4535 = vmatpush1.msra.mxu0 0.0
        %4536 = vmatprep.subr.mxu0 0.0
        %4537 = vmatpush1.msra.mxu0 0.0
        %4538 = vmatprep.mubr.f32.mxu0 0.0
        %4539 = vmatmul.mubr.f32.gmra.mrb[0].mxu0 %v3619
        %v4540 = vpop.f32.mrb[0].mxu0
        %v4541 = vadd.f32 0.0, %v4540
        %v4542 = vpop.f32.mrb[0].mxu0
        %4543 = vmatprep.mubr.f32.mxu0 0.0
        %4544 = vmatmul.mubr.f32.gmra.mrb[0].mxu0 %v3620
        %v4545 = vpop.f32.mrb[0].mxu0
        %v4546 = vadd.f32 0.0, %v4545
        %v4547 = vpop.f32.mrb[0].mxu0
        %4548 = vdwg.mxu0
        %s4549 = scalar_lea.vmem [#allocation7], 40
        %v4550 = vld [vmem:[%s4549] sm:$0xff]
        %v4552 = vsel %vm2033, %v4550, 0
        %4554 = vmatprep.subr.mxu0 0.0
        %4555 = vmatpush1.msra.mxu0 %v4541
        %4556 = vmatprep.subr.mxu0 0.0
        %4557 = vmatpush1.msra.mxu0 %v4546
        %4558 = vmatprep.subr.mxu0 0.0
        %4559 = vmatpush1.msra.mxu0 0.0
        %4560 = vmatprep.subr.mxu0 0.0
        %4561 = vmatpush1.msra.mxu0 0.0
        %4562 = vmatprep.subr.mxu0 0.0
        %4563 = vmatpush1.msra.mxu0 0.0
        %4564 = vmatprep.subr.mxu0 0.0
        %4565 = vmatpush1.msra.mxu0 0.0
        %4566 = vmatprep.subr.mxu0 0.0
        %4567 = vmatpush1.msra.mxu0 0.0
        %4568 = vmatprep.subr.mxu0 0.0
        %4569 = vmatpush1.msra.mxu0 0.0
        %4570 = vmatprep.subr.mxu0 0.0
        %4571 = vmatpush1.msra.mxu0 0.0
        %4572 = vmatprep.subr.mxu0 0.0
        %4573 = vmatpush1.msra.mxu0 0.0
        %4574 = vmatprep.subr.mxu0 0.0
        %4575 = vmatpush1.msra.mxu0 0.0
        %4576 = vmatprep.subr.mxu0 0.0
        %4577 = vmatpush1.msra.mxu0 0.0
        %4578 = vmatprep.subr.mxu0 0.0
        %4579 = vmatpush1.msra.mxu0 0.0
        %4580 = vmatprep.subr.mxu0 0.0
        %4581 = vmatpush1.msra.mxu0 0.0
        %4582 = vmatprep.subr.mxu0 0.0
        %4583 = vmatpush1.msra.mxu0 0.0
        %4584 = vmatprep.subr.mxu0 0.0
        %4585 = vmatpush1.msra.mxu0 0.0
        %4586 = vmatprep.subr.mxu0 0.0
        %4587 = vmatpush1.msra.mxu0 0.0
        %4588 = vmatprep.subr.mxu0 0.0
        %4589 = vmatpush1.msra.mxu0 0.0
        %4590 = vmatprep.subr.mxu0 0.0
        %4591 = vmatpush1.msra.mxu0 0.0
        %4592 = vmatprep.subr.mxu0 0.0
        %4593 = vmatpush1.msra.mxu0 0.0
        %4594 = vmatprep.subr.mxu0 0.0
        %4595 = vmatpush1.msra.mxu0 0.0
        %4596 = vmatprep.subr.mxu0 0.0
        %4597 = vmatpush1.msra.mxu0 0.0
        %4598 = vmatprep.subr.mxu0 0.0
        %4599 = vmatpush1.msra.mxu0 0.0
        %4600 = vmatprep.subr.mxu0 0.0
        %4601 = vmatpush1.msra.mxu0 0.0
        %4602 = vmatprep.subr.mxu0 0.0
        %4603 = vmatpush1.msra.mxu0 0.0
        %4604 = vmatprep.subr.mxu0 0.0
        %4605 = vmatpush1.msra.mxu0 0.0
        %4606 = vmatprep.subr.mxu0 0.0
        %4607 = vmatpush1.msra.mxu0 0.0
        %4608 = vmatprep.subr.mxu0 0.0
        %4609 = vmatpush1.msra.mxu0 0.0
        %4610 = vmatprep.subr.mxu0 0.0
        %4611 = vmatpush1.msra.mxu0 0.0
        %4612 = vmatprep.subr.mxu0 0.0
        %4613 = vmatpush1.msra.mxu0 0.0
        %4614 = vmatprep.subr.mxu0 0.0
        %4615 = vmatpush1.msra.mxu0 0.0
        %4616 = vmatprep.subr.mxu0 0.0
        %4617 = vmatpush1.msra.mxu0 0.0
        %4618 = vmatprep.mubr.f32.mxu0 0.0
        %4619 = vmatmul.mubr.f32.gmra.mrb[0].mxu0 %v4552
        %v4620 = vpop.f32.mrb[0].mxu0
        %v4621 = vadd.f32 0.0, %v4620
        %v4622 = vpop.f32.mrb[0].mxu0
        %4623 = vdwg.mxu0
        %v4624 = vadd.f32 %v4456, %v4621
        %s4625 = scalar_lea.vmem [#allocation11], 768
        %v4626 = vld [vmem:[%s4625] sm:$0xff]
        %v4627 = vld [vmem:[%s4625 + $0x8] sm:$0xff]
        %v4628 = vld [vmem:[%s4625 + $0x10] sm:$0xff]
        %v4629 = vld [vmem:[%s4625 + $0x18] sm:$0xff]
        %v4630 = vld [vmem:[%s4625 + $0x20] sm:$0xff]
        %v4631 = vld [vmem:[%s4625 + $0x28] sm:$0xff]
        %v4632 = vld [vmem:[%s4625 + $0x30] sm:$0xff]
        %v4633 = vld [vmem:[%s4625 + $0x38] sm:$0xff]
        %v4634 = vld [vmem:[%s4625 + $0x40] sm:$0xff]
        %v4635 = vld [vmem:[%s4625 + $0x48] sm:$0xff]
        %v4636 = vld [vmem:[%s4625 + $0x50] sm:$0xff]
        %v4637 = vld [vmem:[%s4625 + $0x58] sm:$0xff]
        %v4638 = vld [vmem:[%s4625 + $0x60] sm:$0xff]
        %v4639 = vld [vmem:[%s4625 + $0x68] sm:$0xff]
        %v4640 = vld [vmem:[%s4625 + $0x70] sm:$0xff]
        %v4641 = vld [vmem:[%s4625 + $0x78] sm:$0xff]
        %4642 = vmatprep.subr.mxu0 0.0
        %4643 = vmatpush1.msra.mxu0 %v4626
        %4644 = vmatprep.subr.mxu0 0.0
        %4645 = vmatpush1.msra.mxu0 %v4627
        %4646 = vmatprep.subr.mxu0 0.0
        %4647 = vmatpush1.msra.mxu0 %v4628
        %4648 = vmatprep.subr.mxu0 0.0
        %4649 = vmatpush1.msra.mxu0 %v4629
        %4650 = vmatprep.subr.mxu0 0.0
        %4651 = vmatpush1.msra.mxu0 %v4630
        %4652 = vmatprep.subr.mxu0 0.0
        %4653 = vmatpush1.msra.mxu0 %v4631
        %4654 = vmatprep.subr.mxu0 0.0
        %4655 = vmatpush1.msra.mxu0 %v4632
        %4656 = vmatprep.subr.mxu0 0.0
        %4657 = vmatpush1.msra.mxu0 %v4633
        %4658 = vmatprep.subr.mxu0 0.0
        %4659 = vmatpush1.msra.mxu0 %v4634
        %4660 = vmatprep.subr.mxu0 0.0
        %4661 = vmatpush1.msra.mxu0 %v4635
        %4662 = vmatprep.subr.mxu0 0.0
        %4663 = vmatpush1.msra.mxu0 %v4636
        %4664 = vmatprep.subr.mxu0 0.0
        %4665 = vmatpush1.msra.mxu0 %v4637
        %4666 = vmatprep.subr.mxu0 0.0
        %4667 = vmatpush1.msra.mxu0 %v4638
        %4668 = vmatprep.subr.mxu0 0.0
        %4669 = vmatpush1.msra.mxu0 %v4639
        %4670 = vmatprep.subr.mxu0 0.0
        %4671 = vmatpush1.msra.mxu0 %v4640
        %4672 = vmatprep.subr.mxu0 0.0
        %4673 = vmatpush1.msra.mxu0 %v4641
        %4674 = vmatprep.subr.mxu0 0.0
        %4675 = vmatpush1.msra.mxu0 0.0
        %4676 = vmatprep.subr.mxu0 0.0
        %4677 = vmatpush1.msra.mxu0 0.0
        %4678 = vmatprep.subr.mxu0 0.0
        %4679 = vmatpush1.msra.mxu0 0.0
        %4680 = vmatprep.subr.mxu0 0.0
        %4681 = vmatpush1.msra.mxu0 0.0
        %4682 = vmatprep.subr.mxu0 0.0
        %4683 = vmatpush1.msra.mxu0 0.0
        %4684 = vmatprep.subr.mxu0 0.0
        %4685 = vmatpush1.msra.mxu0 0.0
        %4686 = vmatprep.subr.mxu0 0.0
        %4687 = vmatpush1.msra.mxu0 0.0
        %4688 = vmatprep.subr.mxu0 0.0
        %4689 = vmatpush1.msra.mxu0 0.0
        %4690 = vmatprep.subr.mxu0 0.0
        %4691 = vmatpush1.msra.mxu0 0.0
        %4692 = vmatprep.subr.mxu0 0.0
        %4693 = vmatpush1.msra.mxu0 0.0
        %4694 = vmatprep.subr.mxu0 0.0
        %4695 = vmatpush1.msra.mxu0 0.0
        %4696 = vmatprep.subr.mxu0 0.0
        %4697 = vmatpush1.msra.mxu0 0.0
        %4698 = vmatprep.subr.mxu0 0.0
        %4699 = vmatpush1.msra.mxu0 0.0
        %4700 = vmatprep.subr.mxu0 0.0
        %4701 = vmatpush1.msra.mxu0 0.0
        %4702 = vmatprep.subr.mxu0 0.0
        %4703 = vmatpush1.msra.mxu0 0.0
        %4704 = vmatprep.subr.mxu0 0.0
        %4705 = vmatpush1.msra.mxu0 0.0
        %4706 = vmatprep.mubr.f32.mxu0 0.0
        %4707 = vmatmul.mubr.f32.gmra.mrb[0].mxu0 %v3619
        %v4708 = vpop.f32.mrb[0].mxu0
        %v4709 = vadd.f32 0.0, %v4708
        %v4710 = vpop.f32.mrb[0].mxu0
        %4711 = vmatprep.mubr.f32.mxu0 0.0
        %4712 = vmatmul.mubr.f32.gmra.mrb[0].mxu0 %v3620
        %v4713 = vpop.f32.mrb[0].mxu0
        %v4714 = vadd.f32 0.0, %v4713
        %v4715 = vpop.f32.mrb[0].mxu0
        %4716 = vdwg.mxu0
        %s4717 = scalar_lea.vmem [#allocation7], 48
        %v4718 = vld [vmem:[%s4717] sm:$0xff]
        %v4720 = vsel %vm2033, %v4718, 0
        %4722 = vmatprep.subr.mxu0 0.0
        %4723 = vmatpush1.msra.mxu0 %v4709
        %4724 = vmatprep.subr.mxu0 0.0
        %4725 = vmatpush1.msra.mxu0 %v4714
        %4726 = vmatprep.subr.mxu0 0.0
        %4727 = vmatpush1.msra.mxu0 0.0
        %4728 = vmatprep.subr.mxu0 0.0
        %4729 = vmatpush1.msra.mxu0 0.0
        %4730 = vmatprep.subr.mxu0 0.0
        %4731 = vmatpush1.msra.mxu0 0.0
        %4732 = vmatprep.subr.mxu0 0.0
        %4733 = vmatpush1.msra.mxu0 0.0
        %4734 = vmatprep.subr.mxu0 0.0
        %4735 = vmatpush1.msra.mxu0 0.0
        %4736 = vmatprep.subr.mxu0 0.0
        %4737 = vmatpush1.msra.mxu0 0.0
        %4738 = vmatprep.subr.mxu0 0.0
        %4739 = vmatpush1.msra.mxu0 0.0
        %4740 = vmatprep.subr.mxu0 0.0
        %4741 = vmatpush1.msra.mxu0 0.0
        %4742 = vmatprep.subr.mxu0 0.0
        %4743 = vmatpush1.msra.mxu0 0.0
        %4744 = vmatprep.subr.mxu0 0.0
        %4745 = vmatpush1.msra.mxu0 0.0
        %4746 = vmatprep.subr.mxu0 0.0
        %4747 = vmatpush1.msra.mxu0 0.0
        %4748 = vmatprep.subr.mxu0 0.0
        %4749 = vmatpush1.msra.mxu0 0.0
        %4750 = vmatprep.subr.mxu0 0.0
        %4751 = vmatpush1.msra.mxu0 0.0
        %4752 = vmatprep.subr.mxu0 0.0
        %4753 = vmatpush1.msra.mxu0 0.0
        %4754 = vmatprep.subr.mxu0 0.0
        %4755 = vmatpush1.msra.mxu0 0.0
        %4756 = vmatprep.subr.mxu0 0.0
        %4757 = vmatpush1.msra.mxu0 0.0
        %4758 = vmatprep.subr.mxu0 0.0
        %4759 = vmatpush1.msra.mxu0 0.0
        %4760 = vmatprep.subr.mxu0 0.0
        %4761 = vmatpush1.msra.mxu0 0.0
        %4762 = vmatprep.subr.mxu0 0.0
        %4763 = vmatpush1.msra.mxu0 0.0
        %4764 = vmatprep.subr.mxu0 0.0
        %4765 = vmatpush1.msra.mxu0 0.0
        %4766 = vmatprep.subr.mxu0 0.0
        %4767 = vmatpush1.msra.mxu0 0.0
        %4768 = vmatprep.subr.mxu0 0.0
        %4769 = vmatpush1.msra.mxu0 0.0
        %4770 = vmatprep.subr.mxu0 0.0
        %4771 = vmatpush1.msra.mxu0 0.0
        %4772 = vmatprep.subr.mxu0 0.0
        %4773 = vmatpush1.msra.mxu0 0.0
        %4774 = vmatprep.subr.mxu0 0.0
        %4775 = vmatpush1.msra.mxu0 0.0
        %4776 = vmatprep.subr.mxu0 0.0
        %4777 = vmatpush1.msra.mxu0 0.0
        %4778 = vmatprep.subr.mxu0 0.0
        %4779 = vmatpush1.msra.mxu0 0.0
        %4780 = vmatprep.subr.mxu0 0.0
        %4781 = vmatpush1.msra.mxu0 0.0
        %4782 = vmatprep.subr.mxu0 0.0
        %4783 = vmatpush1.msra.mxu0 0.0
        %4784 = vmatprep.subr.mxu0 0.0
        %4785 = vmatpush1.msra.mxu0 0.0
        %4786 = vmatprep.mubr.f32.mxu0 0.0
        %4787 = vmatmul.mubr.f32.gmra.mrb[0].mxu0 %v4720
        %v4788 = vpop.f32.mrb[0].mxu0
        %v4789 = vadd.f32 0.0, %v4788
        %v4790 = vpop.f32.mrb[0].mxu0
        %4791 = vdwg.mxu0
        %v4792 = vadd.f32 %v4624, %v4789
        %s4793 = scalar_lea.vmem [#allocation11], 896
        %v4794 = vld [vmem:[%s4793] sm:$0xff]
        %v4795 = vld [vmem:[%s4793 + $0x8] sm:$0xff]
        %v4796 = vld [vmem:[%s4793 + $0x10] sm:$0xff]
        %v4797 = vld [vmem:[%s4793 + $0x18] sm:$0xff]
        %v4798 = vld [vmem:[%s4793 + $0x20] sm:$0xff]
        %v4799 = vld [vmem:[%s4793 + $0x28] sm:$0xff]
        %v4800 = vld [vmem:[%s4793 + $0x30] sm:$0xff]
        %v4801 = vld [vmem:[%s4793 + $0x38] sm:$0xff]
        %v4802 = vld [vmem:[%s4793 + $0x40] sm:$0xff]
        %v4803 = vld [vmem:[%s4793 + $0x48] sm:$0xff]
        %v4804 = vld [vmem:[%s4793 + $0x50] sm:$0xff]
        %v4805 = vld [vmem:[%s4793 + $0x58] sm:$0xff]
        %v4806 = vld [vmem:[%s4793 + $0x60] sm:$0xff]
        %v4807 = vld [vmem:[%s4793 + $0x68] sm:$0xff]
        %v4808 = vld [vmem:[%s4793 + $0x70] sm:$0xff]
        %v4809 = vld [vmem:[%s4793 + $0x78] sm:$0xff]
        %4810 = vmatprep.subr.mxu0 0.0
        %4811 = vmatpush1.msra.mxu0 %v4794
        %4812 = vmatprep.subr.mxu0 0.0
        %4813 = vmatpush1.msra.mxu0 %v4795
        %4814 = vmatprep.subr.mxu0 0.0
        %4815 = vmatpush1.msra.mxu0 %v4796
        %4816 = vmatprep.subr.mxu0 0.0
        %4817 = vmatpush1.msra.mxu0 %v4797
        %4818 = vmatprep.subr.mxu0 0.0
        %4819 = vmatpush1.msra.mxu0 %v4798
        %4820 = vmatprep.subr.mxu0 0.0
        %4821 = vmatpush1.msra.mxu0 %v4799
        %4822 = vmatprep.subr.mxu0 0.0
        %4823 = vmatpush1.msra.mxu0 %v4800
        %4824 = vmatprep.subr.mxu0 0.0
        %4825 = vmatpush1.msra.mxu0 %v4801
        %4826 = vmatprep.subr.mxu0 0.0
        %4827 = vmatpush1.msra.mxu0 %v4802
        %4828 = vmatprep.subr.mxu0 0.0
        %4829 = vmatpush1.msra.mxu0 %v4803
        %4830 = vmatprep.subr.mxu0 0.0
        %4831 = vmatpush1.msra.mxu0 %v4804
        %4832 = vmatprep.subr.mxu0 0.0
        %4833 = vmatpush1.msra.mxu0 %v4805
        %4834 = vmatprep.subr.mxu0 0.0
        %4835 = vmatpush1.msra.mxu0 %v4806
        %4836 = vmatprep.subr.mxu0 0.0
        %4837 = vmatpush1.msra.mxu0 %v4807
        %4838 = vmatprep.subr.mxu0 0.0
        %4839 = vmatpush1.msra.mxu0 %v4808
        %4840 = vmatprep.subr.mxu0 0.0
        %4841 = vmatpush1.msra.mxu0 %v4809
        %4842 = vmatprep.subr.mxu0 0.0
        %4843 = vmatpush1.msra.mxu0 0.0
        %4844 = vmatprep.subr.mxu0 0.0
        %4845 = vmatpush1.msra.mxu0 0.0
        %4846 = vmatprep.subr.mxu0 0.0
        %4847 = vmatpush1.msra.mxu0 0.0
        %4848 = vmatprep.subr.mxu0 0.0
        %4849 = vmatpush1.msra.mxu0 0.0
        %4850 = vmatprep.subr.mxu0 0.0
        %4851 = vmatpush1.msra.mxu0 0.0
        %4852 = vmatprep.subr.mxu0 0.0
        %4853 = vmatpush1.msra.mxu0 0.0
        %4854 = vmatprep.subr.mxu0 0.0
        %4855 = vmatpush1.msra.mxu0 0.0
        %4856 = vmatprep.subr.mxu0 0.0
        %4857 = vmatpush1.msra.mxu0 0.0
        %4858 = vmatprep.subr.mxu0 0.0
        %4859 = vmatpush1.msra.mxu0 0.0
        %4860 = vmatprep.subr.mxu0 0.0
        %4861 = vmatpush1.msra.mxu0 0.0
        %4862 = vmatprep.subr.mxu0 0.0
        %4863 = vmatpush1.msra.mxu0 0.0
        %4864 = vmatprep.subr.mxu0 0.0
        %4865 = vmatpush1.msra.mxu0 0.0
        %4866 = vmatprep.subr.mxu0 0.0
        %4867 = vmatpush1.msra.mxu0 0.0
        %4868 = vmatprep.subr.mxu0 0.0
        %4869 = vmatpush1.msra.mxu0 0.0
        %4870 = vmatprep.subr.mxu0 0.0
        %4871 = vmatpush1.msra.mxu0 0.0
        %4872 = vmatprep.subr.mxu0 0.0
        %4873 = vmatpush1.msra.mxu0 0.0
        %4874 = vmatprep.mubr.f32.mxu0 0.0
        %4875 = vmatmul.mubr.f32.gmra.mrb[0].mxu0 %v3619
        %v4876 = vpop.f32.mrb[0].mxu0
        %v4877 = vadd.f32 0.0, %v4876
        %v4878 = vpop.f32.mrb[0].mxu0
        %4879 = vmatprep.mubr.f32.mxu0 0.0
        %4880 = vmatmul.mubr.f32.gmra.mrb[0].mxu0 %v3620
        %v4881 = vpop.f32.mrb[0].mxu0
        %v4882 = vadd.f32 0.0, %v4881
        %v4883 = vpop.f32.mrb[0].mxu0
        %4884 = vdwg.mxu0
        %s4885 = scalar_lea.vmem [#allocation7], 56
        %v4886 = vld [vmem:[%s4885] sm:$0xff]
        %v4888 = vsel %vm2033, %v4886, 0
        %4890 = vmatprep.subr.mxu0 0.0
        %4891 = vmatpush1.msra.mxu0 %v4877
        %4892 = vmatprep.subr.mxu0 0.0
        %4893 = vmatpush1.msra.mxu0 %v4882
        %4894 = vmatprep.subr.mxu0 0.0
        %4895 = vmatpush1.msra.mxu0 0.0
        %4896 = vmatprep.subr.mxu0 0.0
        %4897 = vmatpush1.msra.mxu0 0.0
        %4898 = vmatprep.subr.mxu0 0.0
        %4899 = vmatpush1.msra.mxu0 0.0
        %4900 = vmatprep.subr.mxu0 0.0
        %4901 = vmatpush1.msra.mxu0 0.0
        %4902 = vmatprep.subr.mxu0 0.0
        %4903 = vmatpush1.msra.mxu0 0.0
        %4904 = vmatprep.subr.mxu0 0.0
        %4905 = vmatpush1.msra.mxu0 0.0
        %4906 = vmatprep.subr.mxu0 0.0
        %4907 = vmatpush1.msra.mxu0 0.0
        %4908 = vmatprep.subr.mxu0 0.0
        %4909 = vmatpush1.msra.mxu0 0.0
        %4910 = vmatprep.subr.mxu0 0.0
        %4911 = vmatpush1.msra.mxu0 0.0
        %4912 = vmatprep.subr.mxu0 0.0
        %4913 = vmatpush1.msra.mxu0 0.0
        %4914 = vmatprep.subr.mxu0 0.0
        %4915 = vmatpush1.msra.mxu0 0.0
        %4916 = vmatprep.subr.mxu0 0.0
        %4917 = vmatpush1.msra.mxu0 0.0
        %4918 = vmatprep.subr.mxu0 0.0
        %4919 = vmatpush1.msra.mxu0 0.0
        %4920 = vmatprep.subr.mxu0 0.0
        %4921 = vmatpush1.msra.mxu0 0.0
        %4922 = vmatprep.subr.mxu0 0.0
        %4923 = vmatpush1.msra.mxu0 0.0
        %4924 = vmatprep.subr.mxu0 0.0
        %4925 = vmatpush1.msra.mxu0 0.0
        %4926 = vmatprep.subr.mxu0 0.0
        %4927 = vmatpush1.msra.mxu0 0.0
        %4928 = vmatprep.subr.mxu0 0.0
        %4929 = vmatpush1.msra.mxu0 0.0
        %4930 = vmatprep.subr.mxu0 0.0
        %4931 = vmatpush1.msra.mxu0 0.0
        %4932 = vmatprep.subr.mxu0 0.0
        %4933 = vmatpush1.msra.mxu0 0.0
        %4934 = vmatprep.subr.mxu0 0.0
        %4935 = vmatpush1.msra.mxu0 0.0
        %4936 = vmatprep.subr.mxu0 0.0
        %4937 = vmatpush1.msra.mxu0 0.0
        %4938 = vmatprep.subr.mxu0 0.0
        %4939 = vmatpush1.msra.mxu0 0.0
        %4940 = vmatprep.subr.mxu0 0.0
        %4941 = vmatpush1.msra.mxu0 0.0
        %4942 = vmatprep.subr.mxu0 0.0
        %4943 = vmatpush1.msra.mxu0 0.0
        %4944 = vmatprep.subr.mxu0 0.0
        %4945 = vmatpush1.msra.mxu0 0.0
        %4946 = vmatprep.subr.mxu0 0.0
        %4947 = vmatpush1.msra.mxu0 0.0
        %4948 = vmatprep.subr.mxu0 0.0
        %4949 = vmatpush1.msra.mxu0 0.0
        %4950 = vmatprep.subr.mxu0 0.0
        %4951 = vmatpush1.msra.mxu0 0.0
        %4952 = vmatprep.subr.mxu0 0.0
        %4953 = vmatpush1.msra.mxu0 0.0
        %4954 = vmatprep.mubr.f32.mxu0 0.0
        %4955 = vmatmul.mubr.f32.gmra.mrb[0].mxu0 %v4888
        %v4956 = vpop.f32.mrb[0].mxu0
        %v4957 = vadd.f32 0.0, %v4956
        %v4958 = vpop.f32.mrb[0].mxu0
        %4959 = vdwg.mxu0
        %v4960 = vadd.f32 %v4792, %v4957
        %s4961 = scalar_lea.vmem [#allocation11], 1024
        %v4962 = vld [vmem:[%s4961] sm:$0xff]
        %v4963 = vld [vmem:[%s4961 + $0x8] sm:$0xff]
        %v4964 = vld [vmem:[%s4961 + $0x10] sm:$0xff]
        %v4965 = vld [vmem:[%s4961 + $0x18] sm:$0xff]
        %v4966 = vld [vmem:[%s4961 + $0x20] sm:$0xff]
        %v4967 = vld [vmem:[%s4961 + $0x28] sm:$0xff]
        %v4968 = vld [vmem:[%s4961 + $0x30] sm:$0xff]
        %v4969 = vld [vmem:[%s4961 + $0x38] sm:$0xff]
        %v4970 = vld [vmem:[%s4961 + $0x40] sm:$0xff]
        %v4971 = vld [vmem:[%s4961 + $0x48] sm:$0xff]
        %v4972 = vld [vmem:[%s4961 + $0x50] sm:$0xff]
        %v4973 = vld [vmem:[%s4961 + $0x58] sm:$0xff]
        %v4974 = vld [vmem:[%s4961 + $0x60] sm:$0xff]
        %v4975 = vld [vmem:[%s4961 + $0x68] sm:$0xff]
        %v4976 = vld [vmem:[%s4961 + $0x70] sm:$0xff]
        %v4977 = vld [vmem:[%s4961 + $0x78] sm:$0xff]
        %4978 = vmatprep.subr.mxu0 0.0
        %4979 = vmatpush1.msra.mxu0 %v4962
        %4980 = vmatprep.subr.mxu0 0.0
        %4981 = vmatpush1.msra.mxu0 %v4963
        %4982 = vmatprep.subr.mxu0 0.0
        %4983 = vmatpush1.msra.mxu0 %v4964
        %4984 = vmatprep.subr.mxu0 0.0
        %4985 = vmatpush1.msra.mxu0 %v4965
        %4986 = vmatprep.subr.mxu0 0.0
        %4987 = vmatpush1.msra.mxu0 %v4966
        %4988 = vmatprep.subr.mxu0 0.0
        %4989 = vmatpush1.msra.mxu0 %v4967
        %4990 = vmatprep.subr.mxu0 0.0
        %4991 = vmatpush1.msra.mxu0 %v4968
        %4992 = vmatprep.subr.mxu0 0.0
        %4993 = vmatpush1.msra.mxu0 %v4969
        %4994 = vmatprep.subr.mxu0 0.0
        %4995 = vmatpush1.msra.mxu0 %v4970
        %4996 = vmatprep.subr.mxu0 0.0
        %4997 = vmatpush1.msra.mxu0 %v4971
        %4998 = vmatprep.subr.mxu0 0.0
        %4999 = vmatpush1.msra.mxu0 %v4972
        %5000 = vmatprep.subr.mxu0 0.0
        %5001 = vmatpush1.msra.mxu0 %v4973
        %5002 = vmatprep.subr.mxu0 0.0
        %5003 = vmatpush1.msra.mxu0 %v4974
        %5004 = vmatprep.subr.mxu0 0.0
        %5005 = vmatpush1.msra.mxu0 %v4975
        %5006 = vmatprep.subr.mxu0 0.0
        %5007 = vmatpush1.msra.mxu0 %v4976
        %5008 = vmatprep.subr.mxu0 0.0
        %5009 = vmatpush1.msra.mxu0 %v4977
        %5010 = vmatprep.subr.mxu0 0.0
        %5011 = vmatpush1.msra.mxu0 0.0
        %5012 = vmatprep.subr.mxu0 0.0
        %5013 = vmatpush1.msra.mxu0 0.0
        %5014 = vmatprep.subr.mxu0 0.0
        %5015 = vmatpush1.msra.mxu0 0.0
        %5016 = vmatprep.subr.mxu0 0.0
        %5017 = vmatpush1.msra.mxu0 0.0
        %5018 = vmatprep.subr.mxu0 0.0
        %5019 = vmatpush1.msra.mxu0 0.0
        %5020 = vmatprep.subr.mxu0 0.0
        %5021 = vmatpush1.msra.mxu0 0.0
        %5022 = vmatprep.subr.mxu0 0.0
        %5023 = vmatpush1.msra.mxu0 0.0
        %5024 = vmatprep.subr.mxu0 0.0
        %5025 = vmatpush1.msra.mxu0 0.0
        %5026 = vmatprep.subr.mxu0 0.0
        %5027 = vmatpush1.msra.mxu0 0.0
        %5028 = vmatprep.subr.mxu0 0.0
        %5029 = vmatpush1.msra.mxu0 0.0
        %5030 = vmatprep.subr.mxu0 0.0
        %5031 = vmatpush1.msra.mxu0 0.0
        %5032 = vmatprep.subr.mxu0 0.0
        %5033 = vmatpush1.msra.mxu0 0.0
        %5034 = vmatprep.subr.mxu0 0.0
        %5035 = vmatpush1.msra.mxu0 0.0
        %5036 = vmatprep.subr.mxu0 0.0
        %5037 = vmatpush1.msra.mxu0 0.0
        %5038 = vmatprep.subr.mxu0 0.0
        %5039 = vmatpush1.msra.mxu0 0.0
        %5040 = vmatprep.subr.mxu0 0.0
        %5041 = vmatpush1.msra.mxu0 0.0
        %5042 = vmatprep.mubr.f32.mxu0 0.0
        %5043 = vmatmul.mubr.f32.gmra.mrb[0].mxu0 %v3619
        %v5044 = vpop.f32.mrb[0].mxu0
        %v5045 = vadd.f32 0.0, %v5044
        %v5046 = vpop.f32.mrb[0].mxu0
        %5047 = vmatprep.mubr.f32.mxu0 0.0
        %5048 = vmatmul.mubr.f32.gmra.mrb[0].mxu0 %v3620
        %v5049 = vpop.f32.mrb[0].mxu0
        %v5050 = vadd.f32 0.0, %v5049
        %v5051 = vpop.f32.mrb[0].mxu0
        %5052 = vdwg.mxu0
        %s5053 = scalar_lea.vmem [#allocation7], 64
        %v5054 = vld [vmem:[%s5053] sm:$0xff]
        %v5056 = vsel %vm2033, %v5054, 0
        %5058 = vmatprep.subr.mxu0 0.0
        %5059 = vmatpush1.msra.mxu0 %v5045
        %5060 = vmatprep.subr.mxu0 0.0
        %5061 = vmatpush1.msra.mxu0 %v5050
        %5062 = vmatprep.subr.mxu0 0.0
        %5063 = vmatpush1.msra.mxu0 0.0
        %5064 = vmatprep.subr.mxu0 0.0
        %5065 = vmatpush1.msra.mxu0 0.0
        %5066 = vmatprep.subr.mxu0 0.0
        %5067 = vmatpush1.msra.mxu0 0.0
        %5068 = vmatprep.subr.mxu0 0.0
        %5069 = vmatpush1.msra.mxu0 0.0
        %5070 = vmatprep.subr.mxu0 0.0
        %5071 = vmatpush1.msra.mxu0 0.0
        %5072 = vmatprep.subr.mxu0 0.0
        %5073 = vmatpush1.msra.mxu0 0.0
        %5074 = vmatprep.subr.mxu0 0.0
        %5075 = vmatpush1.msra.mxu0 0.0
        %5076 = vmatprep.subr.mxu0 0.0
        %5077 = vmatpush1.msra.mxu0 0.0
        %5078 = vmatprep.subr.mxu0 0.0
        %5079 = vmatpush1.msra.mxu0 0.0
        %5080 = vmatprep.subr.mxu0 0.0
        %5081 = vmatpush1.msra.mxu0 0.0
        %5082 = vmatprep.subr.mxu0 0.0
        %5083 = vmatpush1.msra.mxu0 0.0
        %5084 = vmatprep.subr.mxu0 0.0
        %5085 = vmatpush1.msra.mxu0 0.0
        %5086 = vmatprep.subr.mxu0 0.0
        %5087 = vmatpush1.msra.mxu0 0.0
        %5088 = vmatprep.subr.mxu0 0.0
        %5089 = vmatpush1.msra.mxu0 0.0
        %5090 = vmatprep.subr.mxu0 0.0
        %5091 = vmatpush1.msra.mxu0 0.0
        %5092 = vmatprep.subr.mxu0 0.0
        %5093 = vmatpush1.msra.mxu0 0.0
        %5094 = vmatprep.subr.mxu0 0.0
        %5095 = vmatpush1.msra.mxu0 0.0
        %5096 = vmatprep.subr.mxu0 0.0
        %5097 = vmatpush1.msra.mxu0 0.0
        %5098 = vmatprep.subr.mxu0 0.0
        %5099 = vmatpush1.msra.mxu0 0.0
        %5100 = vmatprep.subr.mxu0 0.0
        %5101 = vmatpush1.msra.mxu0 0.0
        %5102 = vmatprep.subr.mxu0 0.0
        %5103 = vmatpush1.msra.mxu0 0.0
        %5104 = vmatprep.subr.mxu0 0.0
        %5105 = vmatpush1.msra.mxu0 0.0
        %5106 = vmatprep.subr.mxu0 0.0
        %5107 = vmatpush1.msra.mxu0 0.0
        %5108 = vmatprep.subr.mxu0 0.0
        %5109 = vmatpush1.msra.mxu0 0.0
        %5110 = vmatprep.subr.mxu0 0.0
        %5111 = vmatpush1.msra.mxu0 0.0
        %5112 = vmatprep.subr.mxu0 0.0
        %5113 = vmatpush1.msra.mxu0 0.0
        %5114 = vmatprep.subr.mxu0 0.0
        %5115 = vmatpush1.msra.mxu0 0.0
        %5116 = vmatprep.subr.mxu0 0.0
        %5117 = vmatpush1.msra.mxu0 0.0
        %5118 = vmatprep.subr.mxu0 0.0
        %5119 = vmatpush1.msra.mxu0 0.0
        %5120 = vmatprep.subr.mxu0 0.0
        %5121 = vmatpush1.msra.mxu0 0.0
        %5122 = vmatprep.mubr.f32.mxu0 0.0
        %5123 = vmatmul.mubr.f32.gmra.mrb[0].mxu0 %v5056
        %v5124 = vpop.f32.mrb[0].mxu0
        %v5125 = vadd.f32 0.0, %v5124
        %v5126 = vpop.f32.mrb[0].mxu0
        %5127 = vdwg.mxu0
        %v5128 = vadd.f32 %v4960, %v5125
        %s5129 = scalar_lea.vmem %s8, 48
        %v5130 = vld [vmem:[%s5129] sm:$0xff]
        %5131 = vadd.xlane.f32.xlu0 %v5128
        %v5132 = vpop.xlane.xlu0 %5131
        %v5133 = vmul.f32 %v5132, 0.0625
        %v5134 = vmul.f32 %v5128, %v5128
        %5135 = vadd.xlane.f32.xlu0 %v5134
        %v5136 = vpop.xlane.xlu0 %5135
        %v5137 = vmul.f32 %v5136, 0.0625
        %v5138 = vmul.f32 %v5133, %v5133
        %v5139 = vsub.f32 %v5137, %v5138
        %v5140 = vmax.f32 %v5139, 0.0
        %v5141 = vsub.f32 %v5128, %v5133
        %v5142 = vadd.f32 %v5140, 1e-05
        %v5143 = vrsqrt.pop %v5142
        %v5144 = vmul.f32 %v5141, %v5143
        %5146 = vset.pattern.permute.xlu0 0
        %5147 = vperm.xlu0 %5146, %v5130
        %v5148 = vpop.permute.xlu0 %5147
        %v5150 = vmul.f32 %v5144, %v5148
        %5151 = vset.pattern.permute.xlu0 1
        %5152 = vperm.xlu0 %5151, %v5130
        %v5153 = vpop.permute.xlu0 %5152
        %v5155 = vadd.f32 %v5150, %v5153
        %vm5156 = vcmp.ge.f32.partialorder %v5155, 0.0
        %5157 = vset.pattern.permute.xlu0 2
        %5158 = vperm.xlu0 %5157, %v5130
        %v5159 = vpop.permute.xlu0 %5158
        %v5161 = vmul.f32 %v5159, %v5155
        %v5162 = vsel %vm5156, %v5155, %v5161
        %5163 = vst [vmem:[%s411] sm:$0xff] %v5162
        %s5164 = sand.u32 %s229, 1
        %s5165 = scalar_lea.sflag [#allocation4], %s5164
        %s5166 = sand.u32 %s229, 1
        %s5167 = smul.addr %s5166, 8
        %s5168 = scalar_lea.vmem [#allocation13], %s5167
        // Predicated region
        $region81: #{tpu_custom_call.1} parent=55 // pred_check
          %p5169 = pneg %p239
        $region82: #{tpu_custom_call.1} parent=55 // pred_check_branch
          %5171 = sbr.rel (%p5169) target = $region84
        $region83: #{tpu_custom_call.1} parent=55 // pred_region
          %s5173 = ssub.s32 128, 128
          %5174 = vsyncadd %s5165, %s5173
          %s5175 = smul.addr %s27, 128
          %s5176 = scalar_lea.hbm %s9, %s5175
          %s5178 = sshll.u32 %s5168, 4
          %s5179 = int_to_ptr.vmem [resolvable:$true] %s5178
          %5181 = dma.vmem_to_hbm [thread:$0]  %s5179, 128, %s5176, %s5165
        $region84: #{tpu_custom_call.1} parent=55 // pred_fallthru
          _
      $region56: #{tpu_custom_call.1} parent=5 // pred_fallthru
        _
      %p5182 = scmp.le.s32.totalorder 2, %s22
      // Predicated region
      $region85: #{tpu_custom_call.1} parent=5 // pred_check
        %p5183 = pneg %p5182
      $region86: #{tpu_custom_call.1} parent=5 // pred_check_branch
        %5185 = sbr.rel (%p5183) target = $region88
      $region87: #{tpu_custom_call.1} parent=5 // pred_region
        %s5186 = ssub.s32 %s22, 2
        // Predicated region
        $region89: #{tpu_custom_call.1} parent=87 // pred_check
          %p5187 = pneg %p245
        $region90: #{tpu_custom_call.1} parent=87 // pred_check_branch
          %5189 = sbr.rel (%p5187) target = $region92
        $region91: #{tpu_custom_call.1} parent=87 // pred_region
          %s5190 = sand.u32 %s230, 1
          %s5191 = scalar_lea.sflag [#allocation4], %s5190
          %s5192 = sand.u32 %s230, 1
          %s5193 = smul.addr %s5192, 8
          %s5194 = scalar_lea.vmem [#allocation13], %s5193
          %5195 = dma.done %s5191, 128
        $region92: #{tpu_custom_call.1} parent=87 // pred_fallthru
          _
      $region88: #{tpu_custom_call.1} parent=5 // pred_fallthru
        _
    $region6: #{tpu_custom_call.1} parent=1 // loop_footer
      %s26 = sadd.s32 1, %s22
    $region7: #{tpu_custom_call.1} parent=1 // loop_footer_branch
      %21 = sbr.rel target = $region3
    $region8: #{tpu_custom_call.1} parent=1 // loop_exit
      _
    %5196 = vsyncpa [#allocation3], 1
    %s5197 = scalar_lea.sflag [#allocation3], 1
    %5198 = vsyncpa %s5197, 1
    %5199 = vsyncpa [#allocation6], 1
    %5200 = vsyncpa [#allocation9], 1
    %5201 = vsyncpa [#allocation12], 1
    %5202 = vsyncpa [#allocation4], 1
    %s5203 = scalar_lea.sflag [#allocation4], 1
    %5204 = vsyncpa %s5203, 1

</llo_original>
